<compile_context>
chip_gen: v7x
topology: tpu7x:2x2x1
jax: 0.10.0
libtpu: 0.0.40
codegen_flags: <defaults>
</compile_context>

<pallas_src>
import functools

import numpy as np
import jax
import jax.numpy as jnp
from jax import lax
from jax.experimental import pallas as pl
from jax.experimental.pallas import tpu as pltpu

EPS = 1e-3  # LayerNorm eps in the PyTorch module


def _round_up(x, m):
    return (x + m - 1) // m * m


# ----------------------------------------------------------------------------
# Pallas kernel: one grid step == TB LSTM time steps (unrolled, h/c in registers)
# ----------------------------------------------------------------------------
def one_out_lstm_kernel(
    x_ref,                 # (TB, Bp, Dp)   time-block of inputs (lane-padded)
    w0_ref, b0_ref,        # (Dp + H, 4H), (1, 4H)   layer-0 stacked weight (LN0 folded)
    w1_ref, b1_ref,        # (2H, 4H),    (1, 4H)    layer-1 stacked weight
    wf_ref, bf_ref,        # (H, Doutp),  (1, Doutp) output head (LN1 folded)
    out_ref,               # (TB, Bp, Doutp)
    h0_ref, c0_ref, h1_ref, c1_ref,   # scratch (Bp, H) f32; persist across grid steps
    *, d_real,
):
    H = h0_ref.shape[-1]
    TB = x_ref.shape[0]

    # new_sequence(): zero hidden/cell state at the start of the sequence.
    @pl.when(pl.program_id(0) == 0)
    def _():
        h0_ref[...] = jnp.zeros_like(h0_ref)
        c0_ref[...] = jnp.zeros_like(c0_ref)
        h1_ref[...] = jnp.zeros_like(h1_ref)
        c1_ref[...] = jnp.zeros_like(c1_ref)

    # Hoist loop-invariant weight loads out of the time loop.
    w0 = w0_ref[...]
    b0 = b0_ref[...]
    w1 = w1_ref[...]
    b1 = b1_ref[...]
    wf = wf_ref[...]
    bf = bf_ref[...]

    inv_d = 1.0 / float(d_real)
    inv_h = 1.0 / float(H)

    def ln_core(v, inv_n):
        # v may be lane-padded with zeros beyond the true feature count n = 1/inv_n;
        # sums only see real values, so divide by the true count.  Affine (gamma/beta)
        # is folded into the downstream weights by the wrapper.
        mu = jnp.sum(v, axis=-1, keepdims=True) * inv_n
        ms = jnp.sum(v * v, axis=-1, keepdims=True) * inv_n
        var = ms - mu * mu
        return (v - mu) * lax.rsqrt(var + EPS)

    def fused_gates(inp, h, w, b):
        # w stacks [W_ih^T; W_hh^T] along K; b = bih + bhh (pre-added in wrapper).
        if inp.shape[-1] % 128 == 0:
            # Lane-aligned concat -> single MXU matmul.
            z = jnp.concatenate([inp, h], axis=-1)
            g = jnp.dot(z, w, preferred_element_type=jnp.float32)
        else:
            k = inp.shape[-1]
            g = (jnp.dot(inp, w[:k], preferred_element_type=jnp.float32)
                 + jnp.dot(h, w[k:], preferred_element_type=jnp.float32))
        return g + b

    def lstm_cell(inp, h, c, w, b):
        gates = fused_gates(inp, h, w, b)
        # PyTorch gate order: i, f, g, o
        i = jax.nn.sigmoid(gates[:, 0 * H:1 * H])
        f = jax.nn.sigmoid(gates[:, 1 * H:2 * H])
        g = jnp.tanh(gates[:, 2 * H:3 * H])
        o = jax.nn.sigmoid(gates[:, 3 * H:4 * H])
        c_new = f * c + i * g
        h_new = o * jnp.tanh(c_new)
        return h_new, c_new

    def step(t, carry):
        h0, c0, h1, c1 = carry
        x = x_ref[t]                                  # (Bp, Dp)
        xn = ln_core(x, inv_d)                        # LN0 (affine folded into w0/b0)

        h0, c0 = lstm_cell(xn, h0, c0, w0, b0)        # LSTM layer 0
        # TODO(synk): nn.LSTM inter-layer dropout(p=0.3) is a train-time op; eval
        # semantics (identity) are implemented here.
        h1, c1 = lstm_cell(h0, h1, c1, w1, b1)        # LSTM layer 1

        hn = ln_core(h1, inv_h)                       # LN1 (affine folded into wf/bf)
        out = jnp.dot(hn, wf, preferred_element_type=jnp.float32) + bf
        out_ref[t] = out.astype(out_ref.dtype)        # lane-dense slab store
        return (h0, c0, h1, c1)

    carry0 = (h0_ref[...], c0_ref[...], h1_ref[...], c1_ref[...])
    h0, c0, h1, c1 = lax.fori_loop(0, TB, step, carry0, unroll=True)
    h0_ref[...] = h0
    c0_ref[...] = c0
    h1_ref[...] = h1
    c1_ref[...] = c1


# ----------------------------------------------------------------------------
# Wrapper: param fusion / folding, padding, pallas_call
# ----------------------------------------------------------------------------
@functools.partial(jax.jit, static_argnames=("tb",))
def one_out_lstm_forward(x, params, tb=8):
    T, B, D = x.shape
    H = params["w_hh_l0"].shape[1]
    Dout = params["w_fwd"].shape[0]
    f32 = jnp.float32

    Bp = _round_up(max(B, 8), 8)        # sublane-dense batch
    Dp = _round_up(D, 128)              # lane-dense input features
    Doutp = _round_up(Dout, 128)        # lane-dense output features
    Tb = max(1, min(tb, T))             # time steps per grid iteration
    Tp = _round_up(T, Tb)

    # --- one-time parameter fusion / folding (outside the hot loop) ---
    g0 = params["ln0_g"].astype(f32)
    b0 = params["ln0_b"].astype(f32)
    wih0 = params["w_ih_l0"].astype(f32)     # (4H, D)
    whh0 = params["w_hh_l0"].astype(f32)     # (4H, H)
    wih1 = params["w_ih_l1"].astype(f32)     # (4H, H)
    whh1 = params["w_hh_l1"].astype(f32)     # (4H, H)
    bih0 = params["b_ih_l0"].astype(f32)
    bhh0 = params["b_hh_l0"].astype(f32)
    bih1 = params["b_ih_l1"].astype(f32)
    bhh1 = params["b_hh_l1"].astype(f32)
    g1 = params["ln1_g"].astype(f32)
    b1 = params["ln1_b"].astype(f32)
    wf = params["w_fwd"].astype(f32)         # (Dout, H)
    bf = params["b_fwd"].astype(f32)         # (Dout,)

    # Layer 0: fold LN0 gamma into W_ih, LN0 beta into the bias; stack [W_ih; W_hh];
    # pad the input-feature rows to Dp with zeros (inert vs. padded lanes).
    w0 = jnp.zeros((Dp + H, 4 * H), f32)
    w0 = w0.at[:D].set(wih0.T * g0[:, None])
    w0 = w0.at[Dp:].set(whh0.T)
    b0f = (b0 @ wih0.T + bih0 + bhh0)[None, :]            # (1, 4H)

    # Layer 1: stacked weight, pre-added bias.
    w1 = jnp.concatenate([wih1.T, whh1.T], axis=0)        # (2H, 4H)
    b1f = (bih1 + bhh1)[None, :]                          # (1, 4H)

    # Output head: fold LN1 gamma/beta, pad output lanes to Doutp.
    wf_p = jnp.zeros((H, Doutp), f32).at[:, :Dout].set(wf.T * g1[:, None])
    bf_p = jnp.zeros((1, Doutp), f32).at[0, :Dout].set(b1 @ wf.T + bf)

    # --- pad activations to sublane/lane-dense shapes ---
    xp = jnp.zeros((Tp, Bp, Dp), f32).at[:T, :B, :D].set(x.astype(f32))

    kernel = functools.partial(one_out_lstm_kernel, d_real=D)

    out = pl.pallas_call(
        kernel,
        out_shape=jax.ShapeDtypeStruct((Tp, Bp, Doutp), f32),
        grid=(Tp // Tb,),
        in_specs=[
            pl.BlockSpec((Tb, Bp, Dp), lambda i: (i, 0, 0)),
            pl.BlockSpec((Dp + H, 4 * H), lambda i: (0, 0)),
            pl.BlockSpec((1, 4 * H), lambda i: (0, 0)),
            pl.BlockSpec((2 * H, 4 * H), lambda i: (0, 0)),
            pl.BlockSpec((1, 4 * H), lambda i: (0, 0)),
            pl.BlockSpec((H, Doutp), lambda i: (0, 0)),
            pl.BlockSpec((1, Doutp), lambda i: (0, 0)),
        ],
        out_specs=pl.BlockSpec((Tb, Bp, Doutp), lambda i: (i, 0, 0)),
        scratch_shapes=[
            pltpu.VMEM((Bp, H), jnp.float32),  # h0
            pltpu.VMEM((Bp, H), jnp.float32),  # c0
            pltpu.VMEM((Bp, H), jnp.float32),  # h1
            pltpu.VMEM((Bp, H), jnp.float32),  # c1
        ],
        compiler_params=pltpu.CompilerParams(
            dimension_semantics=("arbitrary",),     # time recurrence is sequential
            vmem_limit_bytes=32 * 1024 * 1024,      # safe on v5e/v6e/v7x
        ),
    )(xp, w0, b0f, w1, b1f, wf_p, bf_p)

    return out[:T, :B, :Dout]


# ----------------------------------------------------------------------------
# Deterministic parameter construction (mirrors the PyTorch module's __init__)
# ----------------------------------------------------------------------------
def make_params(key, input_dim, hidden_dim):
    D, H = input_dim, hidden_dim
    ks = jax.random.split(key, 5)
    xavier = jax.nn.initializers.glorot_uniform()
    ortho = jax.nn.initializers.orthogonal()

    def lstm_bias():
        # The module sets the forget-gate slice to 1.0 in BOTH bias_ih and bias_hh
        # (effective forget bias +2.0), matching the PyTorch spec.
        return jnp.zeros((4 * H,), jnp.float32).at[H:2 * H].set(1.0)

    return {
        "ln0_g": jnp.ones((D,), jnp.float32),
        "ln0_b": jnp.zeros((D,), jnp.float32),
        "w_ih_l0": xavier(ks[0], (4 * H, D), jnp.float32),
        "w_hh_l0": ortho(ks[1], (4 * H, H), jnp.float32),
        "b_ih_l0": lstm_bias(),
        "b_hh_l0": lstm_bias(),
        "w_ih_l1": xavier(ks[2], (4 * H, H), jnp.float32),
        "w_hh_l1": ortho(ks[3], (4 * H, H), jnp.float32),
        "b_ih_l1": lstm_bias(),
        "b_hh_l1": lstm_bias(),
        "ln1_g": jnp.ones((H,), jnp.float32),
        "ln1_b": jnp.zeros((H,), jnp.float32),
        "w_fwd": xavier(ks[4], (D, H), jnp.float32),
        "b_fwd": jnp.zeros((D,), jnp.float32),
    }


# ----------------------------------------------------------------------------
# Pure-JAX reference (lax.scan, PyTorch-shaped params) for correctness check
# ----------------------------------------------------------------------------
def reference_forward(x, p):
    H = p["w_hh_l0"].shape[1]
    B = x.shape[1]

    def ln(v, g, b):
        mu = v.mean(-1, keepdims=True)
        var = ((v - mu) ** 2).mean(-1, keepdims=True)
        return (v - mu) / jnp.sqrt(var + EPS) * g + b

    def cell(inp, h, c, wih, whh, bih, bhh):
        gates = inp @ wih.T + h @ whh.T + bih + bhh
        i, f, g, o = jnp.split(gates, 4, axis=-1)
        c = jax.nn.sigmoid(f) * c + jax.nn.sigmoid(i) * jnp.tanh(g)
        h = jax.nn.sigmoid(o) * jnp.tanh(c)
        return h, c

    def step(carry, xt):
        h0, c0, h1, c1 = carry
        xn = ln(xt, p["ln0_g"], p["ln0_b"])
        h0, c0 = cell(xn, h0, c0, p["w_ih_l0"], p["w_hh_l0"], p["b_ih_l0"], p["b_hh_l0"])
        h1, c1 = cell(h0, h1, c1, p["w_ih_l1"], p["w_hh_l1"], p["b_ih_l1"], p["b_hh_l1"])
        hn = ln(h1, p["ln1_g"], p["ln1_b"])
        out = hn @ p["w_fwd"].T + p["b_fwd"]
        return (h0, c0, h1, c1), out

    init = tuple(jnp.zeros((B, H), jnp.float32) for _ in range(4))
    _, ys = jax.lax.scan(step, init, x)
    return ys


# ----------------------------------------------------------------------------
if __name__ == "__main__":
    # Small shapes consistent with the module (seq-first layout like nn.LSTM):
    # seq=12 (exercises time-blocking + time padding), batch=4 (padded to 8),
    # input/output dim=16 (padded to 128 lanes), hidden=32.
    SEQ, BATCH, INPUT_DIM, HIDDEN_DIM = 12, 4, 16, 32

    key = jax.random.PRNGKey(0)
    kx, kp = jax.random.split(key)
    x = jax.random.normal(kx, (SEQ, BATCH, INPUT_DIM), dtype=jnp.float32)
    params = make_params(kp, INPUT_DIM, HIDDEN_DIM)

    out = jax.block_until_ready(one_out_lstm_forward(x, params))
    ref = jax.block_until_ready(reference_forward(x, params))

    assert out.shape == (SEQ, BATCH, INPUT_DIM)
    np.testing.assert_allclose(np.asarray(out), np.asarray(ref), rtol=1e-3, atol=1e-3)

    print("KERNEL_OK")
</pallas_src>

<mosaic_0001>
module attributes {stable_mosaic.version = 11 : i64} {
  func.func @one_out_lstm_kernel(%arg0: i32, %arg1: memref<8x8x128xf32, #tpu.memory_space<vmem>>, %arg2: memref<160x128xf32, #tpu.memory_space<vmem>>, %arg3: memref<1x128xf32, #tpu.memory_space<vmem>>, %arg4: memref<64x128xf32, #tpu.memory_space<vmem>>, %arg5: memref<1x128xf32, #tpu.memory_space<vmem>>, %arg6: memref<32x128xf32, #tpu.memory_space<vmem>>, %arg7: memref<1x128xf32, #tpu.memory_space<vmem>>, %arg8: memref<8x8x128xf32, #tpu.memory_space<vmem>>, %arg9: memref<8x32xf32, #tpu.memory_space<vmem>>, %arg10: memref<8x32xf32, #tpu.memory_space<vmem>>, %arg11: memref<8x32xf32, #tpu.memory_space<vmem>>, %arg12: memref<8x32xf32, #tpu.memory_space<vmem>>) attributes {dimension_semantics = [#tpu.dimension_semantics<arbitrary>], iteration_bounds = array<i64: 2>, scalar_prefetch = 0 : i64, scratch_operands = 4 : i64, tpu.core_type = #tpu.core_type<tc>, window_params = [{transform_indices = @transform_0, window_bounds = array<i64: 8, 8, 128>}, {pipeline_mode = #tpu.pipeline_mode<synchronous>, transform_indices = @transform_1, window_bounds = array<i64: 160, 128>}, {pipeline_mode = #tpu.pipeline_mode<synchronous>, transform_indices = @transform_2, window_bounds = array<i64: 1, 128>}, {pipeline_mode = #tpu.pipeline_mode<synchronous>, transform_indices = @transform_3, window_bounds = array<i64: 64, 128>}, {pipeline_mode = #tpu.pipeline_mode<synchronous>, transform_indices = @transform_4, window_bounds = array<i64: 1, 128>}, {pipeline_mode = #tpu.pipeline_mode<synchronous>, transform_indices = @transform_5, window_bounds = array<i64: 32, 128>}, {pipeline_mode = #tpu.pipeline_mode<synchronous>, transform_indices = @transform_6, window_bounds = array<i64: 1, 128>}, {transform_indices = @transform_7, window_bounds = array<i64: 8, 8, 128>}]} {
    %c0_i32 = arith.constant 0 : i32
    %0 = arith.cmpi eq, %arg0, %c0_i32 : i32
    %1 = arith.extui %0 : i1 to i32
    %c0_i32_0 = arith.constant 0 : i32
    %2 = arith.cmpi ne, %1, %c0_i32_0 : i32
    scf.if %2 {
      %cst_220 = arith.constant 0.000000e+00 : f32
      %873 = vector.broadcast %cst_220 : f32 to vector<8x32xf32>
      %c0_221 = arith.constant 0 : index
      %c0_222 = arith.constant 0 : index
      %874 = vector.load %arg9[%c0_221, %c0_222] : memref<8x32xf32, #tpu.memory_space<vmem>>, vector<8x32xf32>
      tpu.vector_store %arg9[%c0_221, %c0_222], %873 {strides = array<i32>} : memref<8x32xf32, #tpu.memory_space<vmem>>, vector<8x32xf32>,
      %cst_223 = arith.constant 0.000000e+00 : f32
      %875 = vector.broadcast %cst_223 : f32 to vector<8x32xf32>
      %c0_224 = arith.constant 0 : index
      %c0_225 = arith.constant 0 : index
      %876 = vector.load %arg10[%c0_224, %c0_225] : memref<8x32xf32, #tpu.memory_space<vmem>>, vector<8x32xf32>
      tpu.vector_store %arg10[%c0_224, %c0_225], %875 {strides = array<i32>} : memref<8x32xf32, #tpu.memory_space<vmem>>, vector<8x32xf32>,
      %cst_226 = arith.constant 0.000000e+00 : f32
      %877 = vector.broadcast %cst_226 : f32 to vector<8x32xf32>
      %c0_227 = arith.constant 0 : index
      %c0_228 = arith.constant 0 : index
      %878 = vector.load %arg11[%c0_227, %c0_228] : memref<8x32xf32, #tpu.memory_space<vmem>>, vector<8x32xf32>
      tpu.vector_store %arg11[%c0_227, %c0_228], %877 {strides = array<i32>} : memref<8x32xf32, #tpu.memory_space<vmem>>, vector<8x32xf32>,
      %cst_229 = arith.constant 0.000000e+00 : f32
      %879 = vector.broadcast %cst_229 : f32 to vector<8x32xf32>
      %c0_230 = arith.constant 0 : index
      %c0_231 = arith.constant 0 : index
      %880 = vector.load %arg12[%c0_230, %c0_231] : memref<8x32xf32, #tpu.memory_space<vmem>>, vector<8x32xf32>
      tpu.vector_store %arg12[%c0_230, %c0_231], %879 {strides = array<i32>} : memref<8x32xf32, #tpu.memory_space<vmem>>, vector<8x32xf32>,
    } else {
    }
    %c0 = arith.constant 0 : index
    %c0_1 = arith.constant 0 : index
    %3 = vector.load %arg2[%c0, %c0_1] : memref<160x128xf32, #tpu.memory_space<vmem>>, vector<160x128xf32>
    %c0_2 = arith.constant 0 : index
    %c0_3 = arith.constant 0 : index
    %4 = vector.load %arg3[%c0_2, %c0_3] : memref<1x128xf32, #tpu.memory_space<vmem>>, vector<1x128xf32>
    %c0_4 = arith.constant 0 : index
    %c0_5 = arith.constant 0 : index
    %5 = vector.load %arg4[%c0_4, %c0_5] : memref<64x128xf32, #tpu.memory_space<vmem>>, vector<64x128xf32>
    %c0_6 = arith.constant 0 : index
    %c0_7 = arith.constant 0 : index
    %6 = vector.load %arg5[%c0_6, %c0_7] : memref<1x128xf32, #tpu.memory_space<vmem>>, vector<1x128xf32>
    %c0_8 = arith.constant 0 : index
    %c0_9 = arith.constant 0 : index
    %7 = vector.load %arg6[%c0_8, %c0_9] : memref<32x128xf32, #tpu.memory_space<vmem>>, vector<32x128xf32>
    %c0_10 = arith.constant 0 : index
    %c0_11 = arith.constant 0 : index
    %8 = vector.load %arg7[%c0_10, %c0_11] : memref<1x128xf32, #tpu.memory_space<vmem>>, vector<1x128xf32>
    %c0_12 = arith.constant 0 : index
    %c0_13 = arith.constant 0 : index
    %9 = vector.load %arg9[%c0_12, %c0_13] : memref<8x32xf32, #tpu.memory_space<vmem>>, vector<8x32xf32>
    %c0_14 = arith.constant 0 : index
    %c0_15 = arith.constant 0 : index
    %10 = vector.load %arg10[%c0_14, %c0_15] : memref<8x32xf32, #tpu.memory_space<vmem>>, vector<8x32xf32>
    %c0_16 = arith.constant 0 : index
    %c0_17 = arith.constant 0 : index
    %11 = vector.load %arg11[%c0_16, %c0_17] : memref<8x32xf32, #tpu.memory_space<vmem>>, vector<8x32xf32>
    %c0_18 = arith.constant 0 : index
    %c0_19 = arith.constant 0 : index
    %12 = vector.load %arg12[%c0_18, %c0_19] : memref<8x32xf32, #tpu.memory_space<vmem>>, vector<8x32xf32>
    %c0_i32_20 = arith.constant 0 : i32
    %13 = arith.index_cast %c0_i32_20 : i32 to index
    %c0_21 = arith.constant 0 : index
    %c0_22 = arith.constant 0 : index
    %14 = vector.load %arg1[%13, %c0_21, %c0_22] : memref<8x8x128xf32, #tpu.memory_space<vmem>>, vector<1x8x128xf32>
    %15 = vector.shape_cast %14 : vector<1x8x128xf32> to vector<8x128xf32>
    %cst = arith.constant dense<0.000000e+00> : vector<8xf32>
    %16 = vector.multi_reduction <add>, %15, %cst [1] : vector<8x128xf32> to vector<8xf32>
    %17 = vector.shape_cast %16 : vector<8xf32> to vector<8x1xf32>
    %cst_23 = arith.constant 6.250000e-02 : f32
    %18 = vector.broadcast %cst_23 : f32 to vector<8x1xf32>
    %19 = arith.mulf %17, %18 : vector<8x1xf32>
    %20 = arith.mulf %15, %15 : vector<8x128xf32>
    %cst_24 = arith.constant dense<0.000000e+00> : vector<8xf32>
    %21 = vector.multi_reduction <add>, %20, %cst_24 [1] : vector<8x128xf32> to vector<8xf32>
    %22 = vector.shape_cast %21 : vector<8xf32> to vector<8x1xf32>
    %cst_25 = arith.constant 6.250000e-02 : f32
    %23 = vector.broadcast %cst_25 : f32 to vector<8x1xf32>
    %24 = arith.mulf %22, %23 : vector<8x1xf32>
    %25 = arith.mulf %19, %19 : vector<8x1xf32>
    %26 = arith.subf %24, %25 : vector<8x1xf32>
    %27 = vector.broadcast %19 : vector<8x1xf32> to vector<8x128xf32>
    %28 = arith.subf %15, %27 : vector<8x128xf32>
    %cst_26 = arith.constant 1.000000e-03 : f32
    %29 = vector.broadcast %cst_26 : f32 to vector<8x1xf32>
    %30 = arith.addf %26, %29 : vector<8x1xf32>
    %31 = math.rsqrt %30 : vector<8x1xf32>
    %32 = vector.broadcast %31 : vector<8x1xf32> to vector<8x128xf32>
    %33 = arith.mulf %28, %32 : vector<8x128xf32>
    %34 = tpu.concatenate %33, %9 in 1 : vector<8x128xf32>, vector<8x32xf32> -> vector<8x160xf32>
    %cst_27 = arith.constant dense<0.000000e+00> : vector<8x128xf32>
    %35 = tpu.matmul %34, %3, %cst_27 {dimension_numbers = #tpu.dot_dimension_numbers<[1], [0], [0], [1], [0, 0, 1, 1], [], []>} : vector<8x160xf32>, vector<160x128xf32>, vector<8x128xf32> -> vector<8x128xf32>
    %36 = vector.broadcast %4 : vector<1x128xf32> to vector<8x128xf32>
    %37 = arith.addf %35, %36 : vector<8x128xf32>
    %38 = vector.extract_strided_slice %37 {offsets = [0, 0], sizes = [8, 32], strides = [1, 1]} : vector<8x128xf32> to vector<8x32xf32>
    %39 = arith.negf %38 : vector<8x32xf32>
    %40 = math.exp %39 : vector<8x32xf32>
    %cst_28 = arith.constant 1.000000e+00 : f32
    %41 = vector.broadcast %cst_28 : f32 to vector<8x32xf32>
    %42 = arith.addf %41, %40 : vector<8x32xf32>
    %43 = arith.divf %41, %42 : vector<8x32xf32>
    %44 = vector.extract_strided_slice %37 {offsets = [0, 32], sizes = [8, 32], strides = [1, 1]} : vector<8x128xf32> to vector<8x32xf32>
    %45 = arith.negf %44 : vector<8x32xf32>
    %46 = math.exp %45 : vector<8x32xf32>
    %cst_29 = arith.constant 1.000000e+00 : f32
    %47 = vector.broadcast %cst_29 : f32 to vector<8x32xf32>
    %48 = arith.addf %47, %46 : vector<8x32xf32>
    %49 = arith.divf %47, %48 : vector<8x32xf32>
    %50 = vector.extract_strided_slice %37 {offsets = [0, 64], sizes = [8, 32], strides = [1, 1]} : vector<8x128xf32> to vector<8x32xf32>
    %51 = math.tanh %50 : vector<8x32xf32>
    %52 = vector.extract_strided_slice %37 {offsets = [0, 96], sizes = [8, 32], strides = [1, 1]} : vector<8x128xf32> to vector<8x32xf32>
    %53 = arith.negf %52 : vector<8x32xf32>
    %54 = math.exp %53 : vector<8x32xf32>
    %cst_30 = arith.constant 1.000000e+00 : f32
    %55 = vector.broadcast %cst_30 : f32 to vector<8x32xf32>
    %56 = arith.addf %55, %54 : vector<8x32xf32>
    %57 = arith.divf %55, %56 : vector<8x32xf32>
    %58 = arith.mulf %49, %10 : vector<8x32xf32>
    %59 = arith.mulf %43, %51 : vector<8x32xf32>
    %60 = arith.addf %58, %59 : vector<8x32xf32>
    %61 = math.tanh %60 : vector<8x32xf32>
    %62 = arith.mulf %57, %61 : vector<8x32xf32>
    %63 = vector.extract_strided_slice %5 {offsets = [0, 0], sizes = [32, 128], strides = [1, 1]} : vector<64x128xf32> to vector<32x128xf32>
    %cst_31 = arith.constant dense<0.000000e+00> : vector<8x128xf32>
    %64 = tpu.matmul %62, %63, %cst_31 {dimension_numbers = #tpu.dot_dimension_numbers<[1], [0], [0], [1], [0, 0, 1, 1], [], []>} : vector<8x32xf32>, vector<32x128xf32>, vector<8x128xf32> -> vector<8x128xf32>
    %65 = vector.extract_strided_slice %5 {offsets = [32, 0], sizes = [32, 128], strides = [1, 1]} : vector<64x128xf32> to vector<32x128xf32>
    %cst_32 = arith.constant dense<0.000000e+00> : vector<8x128xf32>
    %66 = tpu.matmul %11, %65, %cst_32 {dimension_numbers = #tpu.dot_dimension_numbers<[1], [0], [0], [1], [0, 0, 1, 1], [], []>} : vector<8x32xf32>, vector<32x128xf32>, vector<8x128xf32> -> vector<8x128xf32>
    %67 = arith.addf %64, %66 : vector<8x128xf32>
    %68 = vector.broadcast %6 : vector<1x128xf32> to vector<8x128xf32>
    %69 = arith.addf %67, %68 : vector<8x128xf32>
    %70 = vector.extract_strided_slice %69 {offsets = [0, 0], sizes = [8, 32], strides = [1, 1]} : vector<8x128xf32> to vector<8x32xf32>
    %71 = arith.negf %70 : vector<8x32xf32>
    %72 = math.exp %71 : vector<8x32xf32>
    %cst_33 = arith.constant 1.000000e+00 : f32
    %73 = vector.broadcast %cst_33 : f32 to vector<8x32xf32>
    %74 = arith.addf %73, %72 : vector<8x32xf32>
    %75 = arith.divf %73, %74 : vector<8x32xf32>
    %76 = vector.extract_strided_slice %69 {offsets = [0, 32], sizes = [8, 32], strides = [1, 1]} : vector<8x128xf32> to vector<8x32xf32>
    %77 = arith.negf %76 : vector<8x32xf32>
    %78 = math.exp %77 : vector<8x32xf32>
    %cst_34 = arith.constant 1.000000e+00 : f32
    %79 = vector.broadcast %cst_34 : f32 to vector<8x32xf32>
    %80 = arith.addf %79, %78 : vector<8x32xf32>
    %81 = arith.divf %79, %80 : vector<8x32xf32>
    %82 = vector.extract_strided_slice %69 {offsets = [0, 64], sizes = [8, 32], strides = [1, 1]} : vector<8x128xf32> to vector<8x32xf32>
    %83 = math.tanh %82 : vector<8x32xf32>
    %84 = vector.extract_strided_slice %69 {offsets = [0, 96], sizes = [8, 32], strides = [1, 1]} : vector<8x128xf32> to vector<8x32xf32>
    %85 = arith.negf %84 : vector<8x32xf32>
    %86 = math.exp %85 : vector<8x32xf32>
    %cst_35 = arith.constant 1.000000e+00 : f32
    %87 = vector.broadcast %cst_35 : f32 to vector<8x32xf32>
    %88 = arith.addf %87, %86 : vector<8x32xf32>
    %89 = arith.divf %87, %88 : vector<8x32xf32>
    %90 = arith.mulf %81, %12 : vector<8x32xf32>
    %91 = arith.mulf %75, %83 : vector<8x32xf32>
    %92 = arith.addf %90, %91 : vector<8x32xf32>
    %93 = math.tanh %92 : vector<8x32xf32>
    %94 = arith.mulf %89, %93 : vector<8x32xf32>
    %cst_36 = arith.constant dense<0.000000e+00> : vector<8xf32>
    %95 = vector.multi_reduction <add>, %94, %cst_36 [1] : vector<8x32xf32> to vector<8xf32>
    %96 = vector.shape_cast %95 : vector<8xf32> to vector<8x1xf32>
    %cst_37 = arith.constant 3.125000e-02 : f32
    %97 = vector.broadcast %cst_37 : f32 to vector<8x1xf32>
    %98 = arith.mulf %96, %97 : vector<8x1xf32>
    %99 = arith.mulf %94, %94 : vector<8x32xf32>
    %cst_38 = arith.constant dense<0.000000e+00> : vector<8xf32>
    %100 = vector.multi_reduction <add>, %99, %cst_38 [1] : vector<8x32xf32> to vector<8xf32>
    %101 = vector.shape_cast %100 : vector<8xf32> to vector<8x1xf32>
    %cst_39 = arith.constant 3.125000e-02 : f32
    %102 = vector.broadcast %cst_39 : f32 to vector<8x1xf32>
    %103 = arith.mulf %101, %102 : vector<8x1xf32>
    %104 = arith.mulf %98, %98 : vector<8x1xf32>
    %105 = arith.subf %103, %104 : vector<8x1xf32>
    %106 = vector.broadcast %98 : vector<8x1xf32> to vector<8x32xf32>
    %107 = arith.subf %94, %106 : vector<8x32xf32>
    %cst_40 = arith.constant 1.000000e-03 : f32
    %108 = vector.broadcast %cst_40 : f32 to vector<8x1xf32>
    %109 = arith.addf %105, %108 : vector<8x1xf32>
    %110 = math.rsqrt %109 : vector<8x1xf32>
    %111 = vector.broadcast %110 : vector<8x1xf32> to vector<8x32xf32>
    %112 = arith.mulf %107, %111 : vector<8x32xf32>
    %cst_41 = arith.constant dense<0.000000e+00> : vector<8x128xf32>
    %113 = tpu.matmul %112, %7, %cst_41 {dimension_numbers = #tpu.dot_dimension_numbers<[1], [0], [0], [1], [0, 0, 1, 1], [], []>} : vector<8x32xf32>, vector<32x128xf32>, vector<8x128xf32> -> vector<8x128xf32>
    %114 = vector.broadcast %8 : vector<1x128xf32> to vector<8x128xf32>
    %115 = arith.addf %113, %114 : vector<8x128xf32>
    %116 = arith.index_cast %c0_i32_20 : i32 to index
    %c0_42 = arith.constant 0 : index
    %c0_43 = arith.constant 0 : index
    %117 = vector.load %arg8[%116, %c0_42, %c0_43] : memref<8x8x128xf32, #tpu.memory_space<vmem>>, vector<1x8x128xf32>
    %118 = vector.shape_cast %117 : vector<1x8x128xf32> to vector<8x128xf32>
    %119 = vector.shape_cast %115 : vector<8x128xf32> to vector<1x8x128xf32>
    tpu.vector_store %arg8[%116, %c0_42, %c0_43], %119 {strides = array<i32>} : memref<8x8x128xf32, #tpu.memory_space<vmem>>, vector<1x8x128xf32>,
    %c1_i32 = arith.constant 1 : i32
    %120 = arith.index_cast %c1_i32 : i32 to index
    %c0_44 = arith.constant 0 : index
    %c0_45 = arith.constant 0 : index
    %121 = vector.load %arg1[%120, %c0_44, %c0_45] : memref<8x8x128xf32, #tpu.memory_space<vmem>>, vector<1x8x128xf32>
    %122 = vector.shape_cast %121 : vector<1x8x128xf32> to vector<8x128xf32>
    %cst_46 = arith.constant dense<0.000000e+00> : vector<8xf32>
    %123 = vector.multi_reduction <add>, %122, %cst_46 [1] : vector<8x128xf32> to vector<8xf32>
    %124 = vector.shape_cast %123 : vector<8xf32> to vector<8x1xf32>
    %cst_47 = arith.constant 6.250000e-02 : f32
    %125 = vector.broadcast %cst_47 : f32 to vector<8x1xf32>
    %126 = arith.mulf %124, %125 : vector<8x1xf32>
    %127 = arith.mulf %122, %122 : vector<8x128xf32>
    %cst_48 = arith.constant dense<0.000000e+00> : vector<8xf32>
    %128 = vector.multi_reduction <add>, %127, %cst_48 [1] : vector<8x128xf32> to vector<8xf32>
    %129 = vector.shape_cast %128 : vector<8xf32> to vector<8x1xf32>
    %cst_49 = arith.constant 6.250000e-02 : f32
    %130 = vector.broadcast %cst_49 : f32 to vector<8x1xf32>
    %131 = arith.mulf %129, %130 : vector<8x1xf32>
    %132 = arith.mulf %126, %126 : vector<8x1xf32>
    %133 = arith.subf %131, %132 : vector<8x1xf32>
    %134 = vector.broadcast %126 : vector<8x1xf32> to vector<8x128xf32>
    %135 = arith.subf %122, %134 : vector<8x128xf32>
    %cst_50 = arith.constant 1.000000e-03 : f32
    %136 = vector.broadcast %cst_50 : f32 to vector<8x1xf32>
    %137 = arith.addf %133, %136 : vector<8x1xf32>
    %138 = math.rsqrt %137 : vector<8x1xf32>
    %139 = vector.broadcast %138 : vector<8x1xf32> to vector<8x128xf32>
    %140 = arith.mulf %135, %139 : vector<8x128xf32>
    %141 = tpu.concatenate %140, %62 in 1 : vector<8x128xf32>, vector<8x32xf32> -> vector<8x160xf32>
    %cst_51 = arith.constant dense<0.000000e+00> : vector<8x128xf32>
    %142 = tpu.matmul %141, %3, %cst_51 {dimension_numbers = #tpu.dot_dimension_numbers<[1], [0], [0], [1], [0, 0, 1, 1], [], []>} : vector<8x160xf32>, vector<160x128xf32>, vector<8x128xf32> -> vector<8x128xf32>
    %143 = vector.broadcast %4 : vector<1x128xf32> to vector<8x128xf32>
    %144 = arith.addf %142, %143 : vector<8x128xf32>
    %145 = vector.extract_strided_slice %144 {offsets = [0, 0], sizes = [8, 32], strides = [1, 1]} : vector<8x128xf32> to vector<8x32xf32>
    %146 = arith.negf %145 : vector<8x32xf32>
    %147 = math.exp %146 : vector<8x32xf32>
    %cst_52 = arith.constant 1.000000e+00 : f32
    %148 = vector.broadcast %cst_52 : f32 to vector<8x32xf32>
    %149 = arith.addf %148, %147 : vector<8x32xf32>
    %150 = arith.divf %148, %149 : vector<8x32xf32>
    %151 = vector.extract_strided_slice %144 {offsets = [0, 32], sizes = [8, 32], strides = [1, 1]} : vector<8x128xf32> to vector<8x32xf32>
    %152 = arith.negf %151 : vector<8x32xf32>
    %153 = math.exp %152 : vector<8x32xf32>
    %cst_53 = arith.constant 1.000000e+00 : f32
    %154 = vector.broadcast %cst_53 : f32 to vector<8x32xf32>
    %155 = arith.addf %154, %153 : vector<8x32xf32>
    %156 = arith.divf %154, %155 : vector<8x32xf32>
    %157 = vector.extract_strided_slice %144 {offsets = [0, 64], sizes = [8, 32], strides = [1, 1]} : vector<8x128xf32> to vector<8x32xf32>
    %158 = math.tanh %157 : vector<8x32xf32>
    %159 = vector.extract_strided_slice %144 {offsets = [0, 96], sizes = [8, 32], strides = [1, 1]} : vector<8x128xf32> to vector<8x32xf32>
    %160 = arith.negf %159 : vector<8x32xf32>
    %161 = math.exp %160 : vector<8x32xf32>
    %cst_54 = arith.constant 1.000000e+00 : f32
    %162 = vector.broadcast %cst_54 : f32 to vector<8x32xf32>
    %163 = arith.addf %162, %161 : vector<8x32xf32>
    %164 = arith.divf %162, %163 : vector<8x32xf32>
    %165 = arith.mulf %156, %60 : vector<8x32xf32>
    %166 = arith.mulf %150, %158 : vector<8x32xf32>
    %167 = arith.addf %165, %166 : vector<8x32xf32>
    %168 = math.tanh %167 : vector<8x32xf32>
    %169 = arith.mulf %164, %168 : vector<8x32xf32>
    %170 = vector.extract_strided_slice %5 {offsets = [0, 0], sizes = [32, 128], strides = [1, 1]} : vector<64x128xf32> to vector<32x128xf32>
    %cst_55 = arith.constant dense<0.000000e+00> : vector<8x128xf32>
    %171 = tpu.matmul %169, %170, %cst_55 {dimension_numbers = #tpu.dot_dimension_numbers<[1], [0], [0], [1], [0, 0, 1, 1], [], []>} : vector<8x32xf32>, vector<32x128xf32>, vector<8x128xf32> -> vector<8x128xf32>
    %172 = vector.extract_strided_slice %5 {offsets = [32, 0], sizes = [32, 128], strides = [1, 1]} : vector<64x128xf32> to vector<32x128xf32>
    %cst_56 = arith.constant dense<0.000000e+00> : vector<8x128xf32>
    %173 = tpu.matmul %94, %172, %cst_56 {dimension_numbers = #tpu.dot_dimension_numbers<[1], [0], [0], [1], [0, 0, 1, 1], [], []>} : vector<8x32xf32>, vector<32x128xf32>, vector<8x128xf32> -> vector<8x128xf32>
    %174 = arith.addf %171, %173 : vector<8x128xf32>
    %175 = vector.broadcast %6 : vector<1x128xf32> to vector<8x128xf32>
    %176 = arith.addf %174, %175 : vector<8x128xf32>
    %177 = vector.extract_strided_slice %176 {offsets = [0, 0], sizes = [8, 32], strides = [1, 1]} : vector<8x128xf32> to vector<8x32xf32>
    %178 = arith.negf %177 : vector<8x32xf32>
    %179 = math.exp %178 : vector<8x32xf32>
    %cst_57 = arith.constant 1.000000e+00 : f32
    %180 = vector.broadcast %cst_57 : f32 to vector<8x32xf32>
    %181 = arith.addf %180, %179 : vector<8x32xf32>
    %182 = arith.divf %180, %181 : vector<8x32xf32>
    %183 = vector.extract_strided_slice %176 {offsets = [0, 32], sizes = [8, 32], strides = [1, 1]} : vector<8x128xf32> to vector<8x32xf32>
    %184 = arith.negf %183 : vector<8x32xf32>
    %185 = math.exp %184 : vector<8x32xf32>
    %cst_58 = arith.constant 1.000000e+00 : f32
    %186 = vector.broadcast %cst_58 : f32 to vector<8x32xf32>
    %187 = arith.addf %186, %185 : vector<8x32xf32>
    %188 = arith.divf %186, %187 : vector<8x32xf32>
    %189 = vector.extract_strided_slice %176 {offsets = [0, 64], sizes = [8, 32], strides = [1, 1]} : vector<8x128xf32> to vector<8x32xf32>
    %190 = math.tanh %189 : vector<8x32xf32>
    %191 = vector.extract_strided_slice %176 {offsets = [0, 96], sizes = [8, 32], strides = [1, 1]} : vector<8x128xf32> to vector<8x32xf32>
    %192 = arith.negf %191 : vector<8x32xf32>
    %193 = math.exp %192 : vector<8x32xf32>
    %cst_59 = arith.constant 1.000000e+00 : f32
    %194 = vector.broadcast %cst_59 : f32 to vector<8x32xf32>
    %195 = arith.addf %194, %193 : vector<8x32xf32>
    %196 = arith.divf %194, %195 : vector<8x32xf32>
    %197 = arith.mulf %188, %92 : vector<8x32xf32>
    %198 = arith.mulf %182, %190 : vector<8x32xf32>
    %199 = arith.addf %197, %198 : vector<8x32xf32>
    %200 = math.tanh %199 : vector<8x32xf32>
    %201 = arith.mulf %196, %200 : vector<8x32xf32>
    %cst_60 = arith.constant dense<0.000000e+00> : vector<8xf32>
    %202 = vector.multi_reduction <add>, %201, %cst_60 [1] : vector<8x32xf32> to vector<8xf32>
    %203 = vector.shape_cast %202 : vector<8xf32> to vector<8x1xf32>
    %cst_61 = arith.constant 3.125000e-02 : f32
    %204 = vector.broadcast %cst_61 : f32 to vector<8x1xf32>
    %205 = arith.mulf %203, %204 : vector<8x1xf32>
    %206 = arith.mulf %201, %201 : vector<8x32xf32>
    %cst_62 = arith.constant dense<0.000000e+00> : vector<8xf32>
    %207 = vector.multi_reduction <add>, %206, %cst_62 [1] : vector<8x32xf32> to vector<8xf32>
    %208 = vector.shape_cast %207 : vector<8xf32> to vector<8x1xf32>
    %cst_63 = arith.constant 3.125000e-02 : f32
    %209 = vector.broadcast %cst_63 : f32 to vector<8x1xf32>
    %210 = arith.mulf %208, %209 : vector<8x1xf32>
    %211 = arith.mulf %205, %205 : vector<8x1xf32>
    %212 = arith.subf %210, %211 : vector<8x1xf32>
    %213 = vector.broadcast %205 : vector<8x1xf32> to vector<8x32xf32>
    %214 = arith.subf %201, %213 : vector<8x32xf32>
    %cst_64 = arith.constant 1.000000e-03 : f32
    %215 = vector.broadcast %cst_64 : f32 to vector<8x1xf32>
    %216 = arith.addf %212, %215 : vector<8x1xf32>
    %217 = math.rsqrt %216 : vector<8x1xf32>
    %218 = vector.broadcast %217 : vector<8x1xf32> to vector<8x32xf32>
    %219 = arith.mulf %214, %218 : vector<8x32xf32>
    %cst_65 = arith.constant dense<0.000000e+00> : vector<8x128xf32>
    %220 = tpu.matmul %219, %7, %cst_65 {dimension_numbers = #tpu.dot_dimension_numbers<[1], [0], [0], [1], [0, 0, 1, 1], [], []>} : vector<8x32xf32>, vector<32x128xf32>, vector<8x128xf32> -> vector<8x128xf32>
    %221 = vector.broadcast %8 : vector<1x128xf32> to vector<8x128xf32>
    %222 = arith.addf %220, %221 : vector<8x128xf32>
    %223 = arith.index_cast %c1_i32 : i32 to index
    %c0_66 = arith.constant 0 : index
    %c0_67 = arith.constant 0 : index
    %224 = vector.load %arg8[%223, %c0_66, %c0_67] : memref<8x8x128xf32, #tpu.memory_space<vmem>>, vector<1x8x128xf32>
    %225 = vector.shape_cast %224 : vector<1x8x128xf32> to vector<8x128xf32>
    %226 = vector.shape_cast %222 : vector<8x128xf32> to vector<1x8x128xf32>
    tpu.vector_store %arg8[%223, %c0_66, %c0_67], %226 {strides = array<i32>} : memref<8x8x128xf32, #tpu.memory_space<vmem>>, vector<1x8x128xf32>,
    %c2_i32 = arith.constant 2 : i32
    %227 = arith.index_cast %c2_i32 : i32 to index
    %c0_68 = arith.constant 0 : index
    %c0_69 = arith.constant 0 : index
    %228 = vector.load %arg1[%227, %c0_68, %c0_69] : memref<8x8x128xf32, #tpu.memory_space<vmem>>, vector<1x8x128xf32>
    %229 = vector.shape_cast %228 : vector<1x8x128xf32> to vector<8x128xf32>
    %cst_70 = arith.constant dense<0.000000e+00> : vector<8xf32>
    %230 = vector.multi_reduction <add>, %229, %cst_70 [1] : vector<8x128xf32> to vector<8xf32>
    %231 = vector.shape_cast %230 : vector<8xf32> to vector<8x1xf32>
    %cst_71 = arith.constant 6.250000e-02 : f32
    %232 = vector.broadcast %cst_71 : f32 to vector<8x1xf32>
    %233 = arith.mulf %231, %232 : vector<8x1xf32>
    %234 = arith.mulf %229, %229 : vector<8x128xf32>
    %cst_72 = arith.constant dense<0.000000e+00> : vector<8xf32>
    %235 = vector.multi_reduction <add>, %234, %cst_72 [1] : vector<8x128xf32> to vector<8xf32>
    %236 = vector.shape_cast %235 : vector<8xf32> to vector<8x1xf32>
    %cst_73 = arith.constant 6.250000e-02 : f32
    %237 = vector.broadcast %cst_73 : f32 to vector<8x1xf32>
    %238 = arith.mulf %236, %237 : vector<8x1xf32>
    %239 = arith.mulf %233, %233 : vector<8x1xf32>
    %240 = arith.subf %238, %239 : vector<8x1xf32>
    %241 = vector.broadcast %233 : vector<8x1xf32> to vector<8x128xf32>
    %242 = arith.subf %229, %241 : vector<8x128xf32>
    %cst_74 = arith.constant 1.000000e-03 : f32
    %243 = vector.broadcast %cst_74 : f32 to vector<8x1xf32>
    %244 = arith.addf %240, %243 : vector<8x1xf32>
    %245 = math.rsqrt %244 : vector<8x1xf32>
    %246 = vector.broadcast %245 : vector<8x1xf32> to vector<8x128xf32>
    %247 = arith.mulf %242, %246 : vector<8x128xf32>
    %248 = tpu.concatenate %247, %169 in 1 : vector<8x128xf32>, vector<8x32xf32> -> vector<8x160xf32>
    %cst_75 = arith.constant dense<0.000000e+00> : vector<8x128xf32>
    %249 = tpu.matmul %248, %3, %cst_75 {dimension_numbers = #tpu.dot_dimension_numbers<[1], [0], [0], [1], [0, 0, 1, 1], [], []>} : vector<8x160xf32>, vector<160x128xf32>, vector<8x128xf32> -> vector<8x128xf32>
    %250 = vector.broadcast %4 : vector<1x128xf32> to vector<8x128xf32>
    %251 = arith.addf %249, %250 : vector<8x128xf32>
    %252 = vector.extract_strided_slice %251 {offsets = [0, 0], sizes = [8, 32], strides = [1, 1]} : vector<8x128xf32> to vector<8x32xf32>
    %253 = arith.negf %252 : vector<8x32xf32>
    %254 = math.exp %253 : vector<8x32xf32>
    %cst_76 = arith.constant 1.000000e+00 : f32
    %255 = vector.broadcast %cst_76 : f32 to vector<8x32xf32>
    %256 = arith.addf %255, %254 : vector<8x32xf32>
    %257 = arith.divf %255, %256 : vector<8x32xf32>
    %258 = vector.extract_strided_slice %251 {offsets = [0, 32], sizes = [8, 32], strides = [1, 1]} : vector<8x128xf32> to vector<8x32xf32>
    %259 = arith.negf %258 : vector<8x32xf32>
    %260 = math.exp %259 : vector<8x32xf32>
    %cst_77 = arith.constant 1.000000e+00 : f32
    %261 = vector.broadcast %cst_77 : f32 to vector<8x32xf32>
    %262 = arith.addf %261, %260 : vector<8x32xf32>
    %263 = arith.divf %261, %262 : vector<8x32xf32>
    %264 = vector.extract_strided_slice %251 {offsets = [0, 64], sizes = [8, 32], strides = [1, 1]} : vector<8x128xf32> to vector<8x32xf32>
    %265 = math.tanh %264 : vector<8x32xf32>
    %266 = vector.extract_strided_slice %251 {offsets = [0, 96], sizes = [8, 32], strides = [1, 1]} : vector<8x128xf32> to vector<8x32xf32>
    %267 = arith.negf %266 : vector<8x32xf32>
    %268 = math.exp %267 : vector<8x32xf32>
    %cst_78 = arith.constant 1.000000e+00 : f32
    %269 = vector.broadcast %cst_78 : f32 to vector<8x32xf32>
    %270 = arith.addf %269, %268 : vector<8x32xf32>
    %271 = arith.divf %269, %270 : vector<8x32xf32>
    %272 = arith.mulf %263, %167 : vector<8x32xf32>
    %273 = arith.mulf %257, %265 : vector<8x32xf32>
    %274 = arith.addf %272, %273 : vector<8x32xf32>
    %275 = math.tanh %274 : vector<8x32xf32>
    %276 = arith.mulf %271, %275 : vector<8x32xf32>
    %277 = vector.extract_strided_slice %5 {offsets = [0, 0], sizes = [32, 128], strides = [1, 1]} : vector<64x128xf32> to vector<32x128xf32>
    %cst_79 = arith.constant dense<0.000000e+00> : vector<8x128xf32>
    %278 = tpu.matmul %276, %277, %cst_79 {dimension_numbers = #tpu.dot_dimension_numbers<[1], [0], [0], [1], [0, 0, 1, 1], [], []>} : vector<8x32xf32>, vector<32x128xf32>, vector<8x128xf32> -> vector<8x128xf32>
    %279 = vector.extract_strided_slice %5 {offsets = [32, 0], sizes = [32, 128], strides = [1, 1]} : vector<64x128xf32> to vector<32x128xf32>
    %cst_80 = arith.constant dense<0.000000e+00> : vector<8x128xf32>
    %280 = tpu.matmul %201, %279, %cst_80 {dimension_numbers = #tpu.dot_dimension_numbers<[1], [0], [0], [1], [0, 0, 1, 1], [], []>} : vector<8x32xf32>, vector<32x128xf32>, vector<8x128xf32> -> vector<8x128xf32>
    %281 = arith.addf %278, %280 : vector<8x128xf32>
    %282 = vector.broadcast %6 : vector<1x128xf32> to vector<8x128xf32>
    %283 = arith.addf %281, %282 : vector<8x128xf32>
    %284 = vector.extract_strided_slice %283 {offsets = [0, 0], sizes = [8, 32], strides = [1, 1]} : vector<8x128xf32> to vector<8x32xf32>
    %285 = arith.negf %284 : vector<8x32xf32>
    %286 = math.exp %285 : vector<8x32xf32>
    %cst_81 = arith.constant 1.000000e+00 : f32
    %287 = vector.broadcast %cst_81 : f32 to vector<8x32xf32>
    %288 = arith.addf %287, %286 : vector<8x32xf32>
    %289 = arith.divf %287, %288 : vector<8x32xf32>
    %290 = vector.extract_strided_slice %283 {offsets = [0, 32], sizes = [8, 32], strides = [1, 1]} : vector<8x128xf32> to vector<8x32xf32>
    %291 = arith.negf %290 : vector<8x32xf32>
    %292 = math.exp %291 : vector<8x32xf32>
    %cst_82 = arith.constant 1.000000e+00 : f32
    %293 = vector.broadcast %cst_82 : f32 to vector<8x32xf32>
    %294 = arith.addf %293, %292 : vector<8x32xf32>
    %295 = arith.divf %293, %294 : vector<8x32xf32>
    %296 = vector.extract_strided_slice %283 {offsets = [0, 64], sizes = [8, 32], strides = [1, 1]} : vector<8x128xf32> to vector<8x32xf32>
    %297 = math.tanh %296 : vector<8x32xf32>
    %298 = vector.extract_strided_slice %283 {offsets = [0, 96], sizes = [8, 32], strides = [1, 1]} : vector<8x128xf32> to vector<8x32xf32>
    %299 = arith.negf %298 : vector<8x32xf32>
    %300 = math.exp %299 : vector<8x32xf32>
    %cst_83 = arith.constant 1.000000e+00 : f32
    %301 = vector.broadcast %cst_83 : f32 to vector<8x32xf32>
    %302 = arith.addf %301, %300 : vector<8x32xf32>
    %303 = arith.divf %301, %302 : vector<8x32xf32>
    %304 = arith.mulf %295, %199 : vector<8x32xf32>
    %305 = arith.mulf %289, %297 : vector<8x32xf32>
    %306 = arith.addf %304, %305 : vector<8x32xf32>
    %307 = math.tanh %306 : vector<8x32xf32>
    %308 = arith.mulf %303, %307 : vector<8x32xf32>
    %cst_84 = arith.constant dense<0.000000e+00> : vector<8xf32>
    %309 = vector.multi_reduction <add>, %308, %cst_84 [1] : vector<8x32xf32> to vector<8xf32>
    %310 = vector.shape_cast %309 : vector<8xf32> to vector<8x1xf32>
    %cst_85 = arith.constant 3.125000e-02 : f32
    %311 = vector.broadcast %cst_85 : f32 to vector<8x1xf32>
    %312 = arith.mulf %310, %311 : vector<8x1xf32>
    %313 = arith.mulf %308, %308 : vector<8x32xf32>
    %cst_86 = arith.constant dense<0.000000e+00> : vector<8xf32>
    %314 = vector.multi_reduction <add>, %313, %cst_86 [1] : vector<8x32xf32> to vector<8xf32>
    %315 = vector.shape_cast %314 : vector<8xf32> to vector<8x1xf32>
    %cst_87 = arith.constant 3.125000e-02 : f32
    %316 = vector.broadcast %cst_87 : f32 to vector<8x1xf32>
    %317 = arith.mulf %315, %316 : vector<8x1xf32>
    %318 = arith.mulf %312, %312 : vector<8x1xf32>
    %319 = arith.subf %317, %318 : vector<8x1xf32>
    %320 = vector.broadcast %312 : vector<8x1xf32> to vector<8x32xf32>
    %321 = arith.subf %308, %320 : vector<8x32xf32>
    %cst_88 = arith.constant 1.000000e-03 : f32
    %322 = vector.broadcast %cst_88 : f32 to vector<8x1xf32>
    %323 = arith.addf %319, %322 : vector<8x1xf32>
    %324 = math.rsqrt %323 : vector<8x1xf32>
    %325 = vector.broadcast %324 : vector<8x1xf32> to vector<8x32xf32>
    %326 = arith.mulf %321, %325 : vector<8x32xf32>
    %cst_89 = arith.constant dense<0.000000e+00> : vector<8x128xf32>
    %327 = tpu.matmul %326, %7, %cst_89 {dimension_numbers = #tpu.dot_dimension_numbers<[1], [0], [0], [1], [0, 0, 1, 1], [], []>} : vector<8x32xf32>, vector<32x128xf32>, vector<8x128xf32> -> vector<8x128xf32>
    %328 = vector.broadcast %8 : vector<1x128xf32> to vector<8x128xf32>
    %329 = arith.addf %327, %328 : vector<8x128xf32>
    %330 = arith.index_cast %c2_i32 : i32 to index
    %c0_90 = arith.constant 0 : index
    %c0_91 = arith.constant 0 : index
    %331 = vector.load %arg8[%330, %c0_90, %c0_91] : memref<8x8x128xf32, #tpu.memory_space<vmem>>, vector<1x8x128xf32>
    %332 = vector.shape_cast %331 : vector<1x8x128xf32> to vector<8x128xf32>
    %333 = vector.shape_cast %329 : vector<8x128xf32> to vector<1x8x128xf32>
    tpu.vector_store %arg8[%330, %c0_90, %c0_91], %333 {strides = array<i32>} : memref<8x8x128xf32, #tpu.memory_space<vmem>>, vector<1x8x128xf32>,
    %c3_i32 = arith.constant 3 : i32
    %334 = arith.index_cast %c3_i32 : i32 to index
    %c0_92 = arith.constant 0 : index
    %c0_93 = arith.constant 0 : index
    %335 = vector.load %arg1[%334, %c0_92, %c0_93] : memref<8x8x128xf32, #tpu.memory_space<vmem>>, vector<1x8x128xf32>
    %336 = vector.shape_cast %335 : vector<1x8x128xf32> to vector<8x128xf32>
    %cst_94 = arith.constant dense<0.000000e+00> : vector<8xf32>
    %337 = vector.multi_reduction <add>, %336, %cst_94 [1] : vector<8x128xf32> to vector<8xf32>
    %338 = vector.shape_cast %337 : vector<8xf32> to vector<8x1xf32>
    %cst_95 = arith.constant 6.250000e-02 : f32
    %339 = vector.broadcast %cst_95 : f32 to vector<8x1xf32>
    %340 = arith.mulf %338, %339 : vector<8x1xf32>
    %341 = arith.mulf %336, %336 : vector<8x128xf32>
    %cst_96 = arith.constant dense<0.000000e+00> : vector<8xf32>
    %342 = vector.multi_reduction <add>, %341, %cst_96 [1] : vector<8x128xf32> to vector<8xf32>
    %343 = vector.shape_cast %342 : vector<8xf32> to vector<8x1xf32>
    %cst_97 = arith.constant 6.250000e-02 : f32
    %344 = vector.broadcast %cst_97 : f32 to vector<8x1xf32>
    %345 = arith.mulf %343, %344 : vector<8x1xf32>
    %346 = arith.mulf %340, %340 : vector<8x1xf32>
    %347 = arith.subf %345, %346 : vector<8x1xf32>
    %348 = vector.broadcast %340 : vector<8x1xf32> to vector<8x128xf32>
    %349 = arith.subf %336, %348 : vector<8x128xf32>
    %cst_98 = arith.constant 1.000000e-03 : f32
    %350 = vector.broadcast %cst_98 : f32 to vector<8x1xf32>
    %351 = arith.addf %347, %350 : vector<8x1xf32>
    %352 = math.rsqrt %351 : vector<8x1xf32>
    %353 = vector.broadcast %352 : vector<8x1xf32> to vector<8x128xf32>
    %354 = arith.mulf %349, %353 : vector<8x128xf32>
    %355 = tpu.concatenate %354, %276 in 1 : vector<8x128xf32>, vector<8x32xf32> -> vector<8x160xf32>
    %cst_99 = arith.constant dense<0.000000e+00> : vector<8x128xf32>
    %356 = tpu.matmul %355, %3, %cst_99 {dimension_numbers = #tpu.dot_dimension_numbers<[1], [0], [0], [1], [0, 0, 1, 1], [], []>} : vector<8x160xf32>, vector<160x128xf32>, vector<8x128xf32> -> vector<8x128xf32>
    %357 = vector.broadcast %4 : vector<1x128xf32> to vector<8x128xf32>
    %358 = arith.addf %356, %357 : vector<8x128xf32>
    %359 = vector.extract_strided_slice %358 {offsets = [0, 0], sizes = [8, 32], strides = [1, 1]} : vector<8x128xf32> to vector<8x32xf32>
    %360 = arith.negf %359 : vector<8x32xf32>
    %361 = math.exp %360 : vector<8x32xf32>
    %cst_100 = arith.constant 1.000000e+00 : f32
    %362 = vector.broadcast %cst_100 : f32 to vector<8x32xf32>
    %363 = arith.addf %362, %361 : vector<8x32xf32>
    %364 = arith.divf %362, %363 : vector<8x32xf32>
    %365 = vector.extract_strided_slice %358 {offsets = [0, 32], sizes = [8, 32], strides = [1, 1]} : vector<8x128xf32> to vector<8x32xf32>
    %366 = arith.negf %365 : vector<8x32xf32>
    %367 = math.exp %366 : vector<8x32xf32>
    %cst_101 = arith.constant 1.000000e+00 : f32
    %368 = vector.broadcast %cst_101 : f32 to vector<8x32xf32>
    %369 = arith.addf %368, %367 : vector<8x32xf32>
    %370 = arith.divf %368, %369 : vector<8x32xf32>
    %371 = vector.extract_strided_slice %358 {offsets = [0, 64], sizes = [8, 32], strides = [1, 1]} : vector<8x128xf32> to vector<8x32xf32>
    %372 = math.tanh %371 : vector<8x32xf32>
    %373 = vector.extract_strided_slice %358 {offsets = [0, 96], sizes = [8, 32], strides = [1, 1]} : vector<8x128xf32> to vector<8x32xf32>
    %374 = arith.negf %373 : vector<8x32xf32>
    %375 = math.exp %374 : vector<8x32xf32>
    %cst_102 = arith.constant 1.000000e+00 : f32
    %376 = vector.broadcast %cst_102 : f32 to vector<8x32xf32>
    %377 = arith.addf %376, %375 : vector<8x32xf32>
    %378 = arith.divf %376, %377 : vector<8x32xf32>
    %379 = arith.mulf %370, %274 : vector<8x32xf32>
    %380 = arith.mulf %364, %372 : vector<8x32xf32>
    %381 = arith.addf %379, %380 : vector<8x32xf32>
    %382 = math.tanh %381 : vector<8x32xf32>
    %383 = arith.mulf %378, %382 : vector<8x32xf32>
    %384 = vector.extract_strided_slice %5 {offsets = [0, 0], sizes = [32, 128], strides = [1, 1]} : vector<64x128xf32> to vector<32x128xf32>
    %cst_103 = arith.constant dense<0.000000e+00> : vector<8x128xf32>
    %385 = tpu.matmul %383, %384, %cst_103 {dimension_numbers = #tpu.dot_dimension_numbers<[1], [0], [0], [1], [0, 0, 1, 1], [], []>} : vector<8x32xf32>, vector<32x128xf32>, vector<8x128xf32> -> vector<8x128xf32>
    %386 = vector.extract_strided_slice %5 {offsets = [32, 0], sizes = [32, 128], strides = [1, 1]} : vector<64x128xf32> to vector<32x128xf32>
    %cst_104 = arith.constant dense<0.000000e+00> : vector<8x128xf32>
    %387 = tpu.matmul %308, %386, %cst_104 {dimension_numbers = #tpu.dot_dimension_numbers<[1], [0], [0], [1], [0, 0, 1, 1], [], []>} : vector<8x32xf32>, vector<32x128xf32>, vector<8x128xf32> -> vector<8x128xf32>
    %388 = arith.addf %385, %387 : vector<8x128xf32>
    %389 = vector.broadcast %6 : vector<1x128xf32> to vector<8x128xf32>
    %390 = arith.addf %388, %389 : vector<8x128xf32>
    %391 = vector.extract_strided_slice %390 {offsets = [0, 0], sizes = [8, 32], strides = [1, 1]} : vector<8x128xf32> to vector<8x32xf32>
    %392 = arith.negf %391 : vector<8x32xf32>
    %393 = math.exp %392 : vector<8x32xf32>
    %cst_105 = arith.constant 1.000000e+00 : f32
    %394 = vector.broadcast %cst_105 : f32 to vector<8x32xf32>
    %395 = arith.addf %394, %393 : vector<8x32xf32>
    %396 = arith.divf %394, %395 : vector<8x32xf32>
    %397 = vector.extract_strided_slice %390 {offsets = [0, 32], sizes = [8, 32], strides = [1, 1]} : vector<8x128xf32> to vector<8x32xf32>
    %398 = arith.negf %397 : vector<8x32xf32>
    %399 = math.exp %398 : vector<8x32xf32>
    %cst_106 = arith.constant 1.000000e+00 : f32
    %400 = vector.broadcast %cst_106 : f32 to vector<8x32xf32>
    %401 = arith.addf %400, %399 : vector<8x32xf32>
    %402 = arith.divf %400, %401 : vector<8x32xf32>
    %403 = vector.extract_strided_slice %390 {offsets = [0, 64], sizes = [8, 32], strides = [1, 1]} : vector<8x128xf32> to vector<8x32xf32>
    %404 = math.tanh %403 : vector<8x32xf32>
    %405 = vector.extract_strided_slice %390 {offsets = [0, 96], sizes = [8, 32], strides = [1, 1]} : vector<8x128xf32> to vector<8x32xf32>
    %406 = arith.negf %405 : vector<8x32xf32>
    %407 = math.exp %406 : vector<8x32xf32>
    %cst_107 = arith.constant 1.000000e+00 : f32
    %408 = vector.broadcast %cst_107 : f32 to vector<8x32xf32>
    %409 = arith.addf %408, %407 : vector<8x32xf32>
    %410 = arith.divf %408, %409 : vector<8x32xf32>
    %411 = arith.mulf %402, %306 : vector<8x32xf32>
    %412 = arith.mulf %396, %404 : vector<8x32xf32>
    %413 = arith.addf %411, %412 : vector<8x32xf32>
    %414 = math.tanh %413 : vector<8x32xf32>
    %415 = arith.mulf %410, %414 : vector<8x32xf32>
    %cst_108 = arith.constant dense<0.000000e+00> : vector<8xf32>
    %416 = vector.multi_reduction <add>, %415, %cst_108 [1] : vector<8x32xf32> to vector<8xf32>
    %417 = vector.shape_cast %416 : vector<8xf32> to vector<8x1xf32>
    %cst_109 = arith.constant 3.125000e-02 : f32
    %418 = vector.broadcast %cst_109 : f32 to vector<8x1xf32>
    %419 = arith.mulf %417, %418 : vector<8x1xf32>
    %420 = arith.mulf %415, %415 : vector<8x32xf32>
    %cst_110 = arith.constant dense<0.000000e+00> : vector<8xf32>
    %421 = vector.multi_reduction <add>, %420, %cst_110 [1] : vector<8x32xf32> to vector<8xf32>
    %422 = vector.shape_cast %421 : vector<8xf32> to vector<8x1xf32>
    %cst_111 = arith.constant 3.125000e-02 : f32
    %423 = vector.broadcast %cst_111 : f32 to vector<8x1xf32>
    %424 = arith.mulf %422, %423 : vector<8x1xf32>
    %425 = arith.mulf %419, %419 : vector<8x1xf32>
    %426 = arith.subf %424, %425 : vector<8x1xf32>
    %427 = vector.broadcast %419 : vector<8x1xf32> to vector<8x32xf32>
    %428 = arith.subf %415, %427 : vector<8x32xf32>
    %cst_112 = arith.constant 1.000000e-03 : f32
    %429 = vector.broadcast %cst_112 : f32 to vector<8x1xf32>
    %430 = arith.addf %426, %429 : vector<8x1xf32>
    %431 = math.rsqrt %430 : vector<8x1xf32>
    %432 = vector.broadcast %431 : vector<8x1xf32> to vector<8x32xf32>
    %433 = arith.mulf %428, %432 : vector<8x32xf32>
    %cst_113 = arith.constant dense<0.000000e+00> : vector<8x128xf32>
    %434 = tpu.matmul %433, %7, %cst_113 {dimension_numbers = #tpu.dot_dimension_numbers<[1], [0], [0], [1], [0, 0, 1, 1], [], []>} : vector<8x32xf32>, vector<32x128xf32>, vector<8x128xf32> -> vector<8x128xf32>
    %435 = vector.broadcast %8 : vector<1x128xf32> to vector<8x128xf32>
    %436 = arith.addf %434, %435 : vector<8x128xf32>
    %437 = arith.index_cast %c3_i32 : i32 to index
    %c0_114 = arith.constant 0 : index
    %c0_115 = arith.constant 0 : index
    %438 = vector.load %arg8[%437, %c0_114, %c0_115] : memref<8x8x128xf32, #tpu.memory_space<vmem>>, vector<1x8x128xf32>
    %439 = vector.shape_cast %438 : vector<1x8x128xf32> to vector<8x128xf32>
    %440 = vector.shape_cast %436 : vector<8x128xf32> to vector<1x8x128xf32>
    tpu.vector_store %arg8[%437, %c0_114, %c0_115], %440 {strides = array<i32>} : memref<8x8x128xf32, #tpu.memory_space<vmem>>, vector<1x8x128xf32>,
    %c4_i32 = arith.constant 4 : i32
    %441 = arith.index_cast %c4_i32 : i32 to index
    %c0_116 = arith.constant 0 : index
    %c0_117 = arith.constant 0 : index
    %442 = vector.load %arg1[%441, %c0_116, %c0_117] : memref<8x8x128xf32, #tpu.memory_space<vmem>>, vector<1x8x128xf32>
    %443 = vector.shape_cast %442 : vector<1x8x128xf32> to vector<8x128xf32>
    %cst_118 = arith.constant dense<0.000000e+00> : vector<8xf32>
    %444 = vector.multi_reduction <add>, %443, %cst_118 [1] : vector<8x128xf32> to vector<8xf32>
    %445 = vector.shape_cast %444 : vector<8xf32> to vector<8x1xf32>
    %cst_119 = arith.constant 6.250000e-02 : f32
    %446 = vector.broadcast %cst_119 : f32 to vector<8x1xf32>
    %447 = arith.mulf %445, %446 : vector<8x1xf32>
    %448 = arith.mulf %443, %443 : vector<8x128xf32>
    %cst_120 = arith.constant dense<0.000000e+00> : vector<8xf32>
    %449 = vector.multi_reduction <add>, %448, %cst_120 [1] : vector<8x128xf32> to vector<8xf32>
    %450 = vector.shape_cast %449 : vector<8xf32> to vector<8x1xf32>
    %cst_121 = arith.constant 6.250000e-02 : f32
    %451 = vector.broadcast %cst_121 : f32 to vector<8x1xf32>
    %452 = arith.mulf %450, %451 : vector<8x1xf32>
    %453 = arith.mulf %447, %447 : vector<8x1xf32>
    %454 = arith.subf %452, %453 : vector<8x1xf32>
    %455 = vector.broadcast %447 : vector<8x1xf32> to vector<8x128xf32>
    %456 = arith.subf %443, %455 : vector<8x128xf32>
    %cst_122 = arith.constant 1.000000e-03 : f32
    %457 = vector.broadcast %cst_122 : f32 to vector<8x1xf32>
    %458 = arith.addf %454, %457 : vector<8x1xf32>
    %459 = math.rsqrt %458 : vector<8x1xf32>
    %460 = vector.broadcast %459 : vector<8x1xf32> to vector<8x128xf32>
    %461 = arith.mulf %456, %460 : vector<8x128xf32>
    %462 = tpu.concatenate %461, %383 in 1 : vector<8x128xf32>, vector<8x32xf32> -> vector<8x160xf32>
    %cst_123 = arith.constant dense<0.000000e+00> : vector<8x128xf32>
    %463 = tpu.matmul %462, %3, %cst_123 {dimension_numbers = #tpu.dot_dimension_numbers<[1], [0], [0], [1], [0, 0, 1, 1], [], []>} : vector<8x160xf32>, vector<160x128xf32>, vector<8x128xf32> -> vector<8x128xf32>
    %464 = vector.broadcast %4 : vector<1x128xf32> to vector<8x128xf32>
    %465 = arith.addf %463, %464 : vector<8x128xf32>
    %466 = vector.extract_strided_slice %465 {offsets = [0, 0], sizes = [8, 32], strides = [1, 1]} : vector<8x128xf32> to vector<8x32xf32>
    %467 = arith.negf %466 : vector<8x32xf32>
    %468 = math.exp %467 : vector<8x32xf32>
    %cst_124 = arith.constant 1.000000e+00 : f32
    %469 = vector.broadcast %cst_124 : f32 to vector<8x32xf32>
    %470 = arith.addf %469, %468 : vector<8x32xf32>
    %471 = arith.divf %469, %470 : vector<8x32xf32>
    %472 = vector.extract_strided_slice %465 {offsets = [0, 32], sizes = [8, 32], strides = [1, 1]} : vector<8x128xf32> to vector<8x32xf32>
    %473 = arith.negf %472 : vector<8x32xf32>
    %474 = math.exp %473 : vector<8x32xf32>
    %cst_125 = arith.constant 1.000000e+00 : f32
    %475 = vector.broadcast %cst_125 : f32 to vector<8x32xf32>
    %476 = arith.addf %475, %474 : vector<8x32xf32>
    %477 = arith.divf %475, %476 : vector<8x32xf32>
    %478 = vector.extract_strided_slice %465 {offsets = [0, 64], sizes = [8, 32], strides = [1, 1]} : vector<8x128xf32> to vector<8x32xf32>
    %479 = math.tanh %478 : vector<8x32xf32>
    %480 = vector.extract_strided_slice %465 {offsets = [0, 96], sizes = [8, 32], strides = [1, 1]} : vector<8x128xf32> to vector<8x32xf32>
    %481 = arith.negf %480 : vector<8x32xf32>
    %482 = math.exp %481 : vector<8x32xf32>
    %cst_126 = arith.constant 1.000000e+00 : f32
    %483 = vector.broadcast %cst_126 : f32 to vector<8x32xf32>
    %484 = arith.addf %483, %482 : vector<8x32xf32>
    %485 = arith.divf %483, %484 : vector<8x32xf32>
    %486 = arith.mulf %477, %381 : vector<8x32xf32>
    %487 = arith.mulf %471, %479 : vector<8x32xf32>
    %488 = arith.addf %486, %487 : vector<8x32xf32>
    %489 = math.tanh %488 : vector<8x32xf32>
    %490 = arith.mulf %485, %489 : vector<8x32xf32>
    %491 = vector.extract_strided_slice %5 {offsets = [0, 0], sizes = [32, 128], strides = [1, 1]} : vector<64x128xf32> to vector<32x128xf32>
    %cst_127 = arith.constant dense<0.000000e+00> : vector<8x128xf32>
    %492 = tpu.matmul %490, %491, %cst_127 {dimension_numbers = #tpu.dot_dimension_numbers<[1], [0], [0], [1], [0, 0, 1, 1], [], []>} : vector<8x32xf32>, vector<32x128xf32>, vector<8x128xf32> -> vector<8x128xf32>
    %493 = vector.extract_strided_slice %5 {offsets = [32, 0], sizes = [32, 128], strides = [1, 1]} : vector<64x128xf32> to vector<32x128xf32>
    %cst_128 = arith.constant dense<0.000000e+00> : vector<8x128xf32>
    %494 = tpu.matmul %415, %493, %cst_128 {dimension_numbers = #tpu.dot_dimension_numbers<[1], [0], [0], [1], [0, 0, 1, 1], [], []>} : vector<8x32xf32>, vector<32x128xf32>, vector<8x128xf32> -> vector<8x128xf32>
    %495 = arith.addf %492, %494 : vector<8x128xf32>
    %496 = vector.broadcast %6 : vector<1x128xf32> to vector<8x128xf32>
    %497 = arith.addf %495, %496 : vector<8x128xf32>
    %498 = vector.extract_strided_slice %497 {offsets = [0, 0], sizes = [8, 32], strides = [1, 1]} : vector<8x128xf32> to vector<8x32xf32>
    %499 = arith.negf %498 : vector<8x32xf32>
    %500 = math.exp %499 : vector<8x32xf32>
    %cst_129 = arith.constant 1.000000e+00 : f32
    %501 = vector.broadcast %cst_129 : f32 to vector<8x32xf32>
    %502 = arith.addf %501, %500 : vector<8x32xf32>
    %503 = arith.divf %501, %502 : vector<8x32xf32>
    %504 = vector.extract_strided_slice %497 {offsets = [0, 32], sizes = [8, 32], strides = [1, 1]} : vector<8x128xf32> to vector<8x32xf32>
    %505 = arith.negf %504 : vector<8x32xf32>
    %506 = math.exp %505 : vector<8x32xf32>
    %cst_130 = arith.constant 1.000000e+00 : f32
    %507 = vector.broadcast %cst_130 : f32 to vector<8x32xf32>
    %508 = arith.addf %507, %506 : vector<8x32xf32>
    %509 = arith.divf %507, %508 : vector<8x32xf32>
    %510 = vector.extract_strided_slice %497 {offsets = [0, 64], sizes = [8, 32], strides = [1, 1]} : vector<8x128xf32> to vector<8x32xf32>
    %511 = math.tanh %510 : vector<8x32xf32>
    %512 = vector.extract_strided_slice %497 {offsets = [0, 96], sizes = [8, 32], strides = [1, 1]} : vector<8x128xf32> to vector<8x32xf32>
    %513 = arith.negf %512 : vector<8x32xf32>
    %514 = math.exp %513 : vector<8x32xf32>
    %cst_131 = arith.constant 1.000000e+00 : f32
    %515 = vector.broadcast %cst_131 : f32 to vector<8x32xf32>
    %516 = arith.addf %515, %514 : vector<8x32xf32>
    %517 = arith.divf %515, %516 : vector<8x32xf32>
    %518 = arith.mulf %509, %413 : vector<8x32xf32>
    %519 = arith.mulf %503, %511 : vector<8x32xf32>
    %520 = arith.addf %518, %519 : vector<8x32xf32>
    %521 = math.tanh %520 : vector<8x32xf32>
    %522 = arith.mulf %517, %521 : vector<8x32xf32>
    %cst_132 = arith.constant dense<0.000000e+00> : vector<8xf32>
    %523 = vector.multi_reduction <add>, %522, %cst_132 [1] : vector<8x32xf32> to vector<8xf32>
    %524 = vector.shape_cast %523 : vector<8xf32> to vector<8x1xf32>
    %cst_133 = arith.constant 3.125000e-02 : f32
    %525 = vector.broadcast %cst_133 : f32 to vector<8x1xf32>
    %526 = arith.mulf %524, %525 : vector<8x1xf32>
    %527 = arith.mulf %522, %522 : vector<8x32xf32>
    %cst_134 = arith.constant dense<0.000000e+00> : vector<8xf32>
    %528 = vector.multi_reduction <add>, %527, %cst_134 [1] : vector<8x32xf32> to vector<8xf32>
    %529 = vector.shape_cast %528 : vector<8xf32> to vector<8x1xf32>
    %cst_135 = arith.constant 3.125000e-02 : f32
    %530 = vector.broadcast %cst_135 : f32 to vector<8x1xf32>
    %531 = arith.mulf %529, %530 : vector<8x1xf32>
    %532 = arith.mulf %526, %526 : vector<8x1xf32>
    %533 = arith.subf %531, %532 : vector<8x1xf32>
    %534 = vector.broadcast %526 : vector<8x1xf32> to vector<8x32xf32>
    %535 = arith.subf %522, %534 : vector<8x32xf32>
    %cst_136 = arith.constant 1.000000e-03 : f32
    %536 = vector.broadcast %cst_136 : f32 to vector<8x1xf32>
    %537 = arith.addf %533, %536 : vector<8x1xf32>
    %538 = math.rsqrt %537 : vector<8x1xf32>
    %539 = vector.broadcast %538 : vector<8x1xf32> to vector<8x32xf32>
    %540 = arith.mulf %535, %539 : vector<8x32xf32>
    %cst_137 = arith.constant dense<0.000000e+00> : vector<8x128xf32>
    %541 = tpu.matmul %540, %7, %cst_137 {dimension_numbers = #tpu.dot_dimension_numbers<[1], [0], [0], [1], [0, 0, 1, 1], [], []>} : vector<8x32xf32>, vector<32x128xf32>, vector<8x128xf32> -> vector<8x128xf32>
    %542 = vector.broadcast %8 : vector<1x128xf32> to vector<8x128xf32>
    %543 = arith.addf %541, %542 : vector<8x128xf32>
    %544 = arith.index_cast %c4_i32 : i32 to index
    %c0_138 = arith.constant 0 : index
    %c0_139 = arith.constant 0 : index
    %545 = vector.load %arg8[%544, %c0_138, %c0_139] : memref<8x8x128xf32, #tpu.memory_space<vmem>>, vector<1x8x128xf32>
    %546 = vector.shape_cast %545 : vector<1x8x128xf32> to vector<8x128xf32>
    %547 = vector.shape_cast %543 : vector<8x128xf32> to vector<1x8x128xf32>
    tpu.vector_store %arg8[%544, %c0_138, %c0_139], %547 {strides = array<i32>} : memref<8x8x128xf32, #tpu.memory_space<vmem>>, vector<1x8x128xf32>,
    %c5_i32 = arith.constant 5 : i32
    %548 = arith.index_cast %c5_i32 : i32 to index
    %c0_140 = arith.constant 0 : index
    %c0_141 = arith.constant 0 : index
    %549 = vector.load %arg1[%548, %c0_140, %c0_141] : memref<8x8x128xf32, #tpu.memory_space<vmem>>, vector<1x8x128xf32>
    %550 = vector.shape_cast %549 : vector<1x8x128xf32> to vector<8x128xf32>
    %cst_142 = arith.constant dense<0.000000e+00> : vector<8xf32>
    %551 = vector.multi_reduction <add>, %550, %cst_142 [1] : vector<8x128xf32> to vector<8xf32>
    %552 = vector.shape_cast %551 : vector<8xf32> to vector<8x1xf32>
    %cst_143 = arith.constant 6.250000e-02 : f32
    %553 = vector.broadcast %cst_143 : f32 to vector<8x1xf32>
    %554 = arith.mulf %552, %553 : vector<8x1xf32>
    %555 = arith.mulf %550, %550 : vector<8x128xf32>
    %cst_144 = arith.constant dense<0.000000e+00> : vector<8xf32>
    %556 = vector.multi_reduction <add>, %555, %cst_144 [1] : vector<8x128xf32> to vector<8xf32>
    %557 = vector.shape_cast %556 : vector<8xf32> to vector<8x1xf32>
    %cst_145 = arith.constant 6.250000e-02 : f32
    %558 = vector.broadcast %cst_145 : f32 to vector<8x1xf32>
    %559 = arith.mulf %557, %558 : vector<8x1xf32>
    %560 = arith.mulf %554, %554 : vector<8x1xf32>
    %561 = arith.subf %559, %560 : vector<8x1xf32>
    %562 = vector.broadcast %554 : vector<8x1xf32> to vector<8x128xf32>
    %563 = arith.subf %550, %562 : vector<8x128xf32>
    %cst_146 = arith.constant 1.000000e-03 : f32
    %564 = vector.broadcast %cst_146 : f32 to vector<8x1xf32>
    %565 = arith.addf %561, %564 : vector<8x1xf32>
    %566 = math.rsqrt %565 : vector<8x1xf32>
    %567 = vector.broadcast %566 : vector<8x1xf32> to vector<8x128xf32>
    %568 = arith.mulf %563, %567 : vector<8x128xf32>
    %569 = tpu.concatenate %568, %490 in 1 : vector<8x128xf32>, vector<8x32xf32> -> vector<8x160xf32>
    %cst_147 = arith.constant dense<0.000000e+00> : vector<8x128xf32>
    %570 = tpu.matmul %569, %3, %cst_147 {dimension_numbers = #tpu.dot_dimension_numbers<[1], [0], [0], [1], [0, 0, 1, 1], [], []>} : vector<8x160xf32>, vector<160x128xf32>, vector<8x128xf32> -> vector<8x128xf32>
    %571 = vector.broadcast %4 : vector<1x128xf32> to vector<8x128xf32>
    %572 = arith.addf %570, %571 : vector<8x128xf32>
    %573 = vector.extract_strided_slice %572 {offsets = [0, 0], sizes = [8, 32], strides = [1, 1]} : vector<8x128xf32> to vector<8x32xf32>
    %574 = arith.negf %573 : vector<8x32xf32>
    %575 = math.exp %574 : vector<8x32xf32>
    %cst_148 = arith.constant 1.000000e+00 : f32
    %576 = vector.broadcast %cst_148 : f32 to vector<8x32xf32>
    %577 = arith.addf %576, %575 : vector<8x32xf32>
    %578 = arith.divf %576, %577 : vector<8x32xf32>
    %579 = vector.extract_strided_slice %572 {offsets = [0, 32], sizes = [8, 32], strides = [1, 1]} : vector<8x128xf32> to vector<8x32xf32>
    %580 = arith.negf %579 : vector<8x32xf32>
    %581 = math.exp %580 : vector<8x32xf32>
    %cst_149 = arith.constant 1.000000e+00 : f32
    %582 = vector.broadcast %cst_149 : f32 to vector<8x32xf32>
    %583 = arith.addf %582, %581 : vector<8x32xf32>
    %584 = arith.divf %582, %583 : vector<8x32xf32>
    %585 = vector.extract_strided_slice %572 {offsets = [0, 64], sizes = [8, 32], strides = [1, 1]} : vector<8x128xf32> to vector<8x32xf32>
    %586 = math.tanh %585 : vector<8x32xf32>
    %587 = vector.extract_strided_slice %572 {offsets = [0, 96], sizes = [8, 32], strides = [1, 1]} : vector<8x128xf32> to vector<8x32xf32>
    %588 = arith.negf %587 : vector<8x32xf32>
    %589 = math.exp %588 : vector<8x32xf32>
    %cst_150 = arith.constant 1.000000e+00 : f32
    %590 = vector.broadcast %cst_150 : f32 to vector<8x32xf32>
    %591 = arith.addf %590, %589 : vector<8x32xf32>
    %592 = arith.divf %590, %591 : vector<8x32xf32>
    %593 = arith.mulf %584, %488 : vector<8x32xf32>
    %594 = arith.mulf %578, %586 : vector<8x32xf32>
    %595 = arith.addf %593, %594 : vector<8x32xf32>
    %596 = math.tanh %595 : vector<8x32xf32>
    %597 = arith.mulf %592, %596 : vector<8x32xf32>
    %598 = vector.extract_strided_slice %5 {offsets = [0, 0], sizes = [32, 128], strides = [1, 1]} : vector<64x128xf32> to vector<32x128xf32>
    %cst_151 = arith.constant dense<0.000000e+00> : vector<8x128xf32>
    %599 = tpu.matmul %597, %598, %cst_151 {dimension_numbers = #tpu.dot_dimension_numbers<[1], [0], [0], [1], [0, 0, 1, 1], [], []>} : vector<8x32xf32>, vector<32x128xf32>, vector<8x128xf32> -> vector<8x128xf32>
    %600 = vector.extract_strided_slice %5 {offsets = [32, 0], sizes = [32, 128], strides = [1, 1]} : vector<64x128xf32> to vector<32x128xf32>
    %cst_152 = arith.constant dense<0.000000e+00> : vector<8x128xf32>
    %601 = tpu.matmul %522, %600, %cst_152 {dimension_numbers = #tpu.dot_dimension_numbers<[1], [0], [0], [1], [0, 0, 1, 1], [], []>} : vector<8x32xf32>, vector<32x128xf32>, vector<8x128xf32> -> vector<8x128xf32>
    %602 = arith.addf %599, %601 : vector<8x128xf32>
    %603 = vector.broadcast %6 : vector<1x128xf32> to vector<8x128xf32>
    %604 = arith.addf %602, %603 : vector<8x128xf32>
    %605 = vector.extract_strided_slice %604 {offsets = [0, 0], sizes = [8, 32], strides = [1, 1]} : vector<8x128xf32> to vector<8x32xf32>
    %606 = arith.negf %605 : vector<8x32xf32>
    %607 = math.exp %606 : vector<8x32xf32>
    %cst_153 = arith.constant 1.000000e+00 : f32
    %608 = vector.broadcast %cst_153 : f32 to vector<8x32xf32>
    %609 = arith.addf %608, %607 : vector<8x32xf32>
    %610 = arith.divf %608, %609 : vector<8x32xf32>
    %611 = vector.extract_strided_slice %604 {offsets = [0, 32], sizes = [8, 32], strides = [1, 1]} : vector<8x128xf32> to vector<8x32xf32>
    %612 = arith.negf %611 : vector<8x32xf32>
    %613 = math.exp %612 : vector<8x32xf32>
    %cst_154 = arith.constant 1.000000e+00 : f32
    %614 = vector.broadcast %cst_154 : f32 to vector<8x32xf32>
    %615 = arith.addf %614, %613 : vector<8x32xf32>
    %616 = arith.divf %614, %615 : vector<8x32xf32>
    %617 = vector.extract_strided_slice %604 {offsets = [0, 64], sizes = [8, 32], strides = [1, 1]} : vector<8x128xf32> to vector<8x32xf32>
    %618 = math.tanh %617 : vector<8x32xf32>
    %619 = vector.extract_strided_slice %604 {offsets = [0, 96], sizes = [8, 32], strides = [1, 1]} : vector<8x128xf32> to vector<8x32xf32>
    %620 = arith.negf %619 : vector<8x32xf32>
    %621 = math.exp %620 : vector<8x32xf32>
    %cst_155 = arith.constant 1.000000e+00 : f32
    %622 = vector.broadcast %cst_155 : f32 to vector<8x32xf32>
    %623 = arith.addf %622, %621 : vector<8x32xf32>
    %624 = arith.divf %622, %623 : vector<8x32xf32>
    %625 = arith.mulf %616, %520 : vector<8x32xf32>
    %626 = arith.mulf %610, %618 : vector<8x32xf32>
    %627 = arith.addf %625, %626 : vector<8x32xf32>
    %628 = math.tanh %627 : vector<8x32xf32>
    %629 = arith.mulf %624, %628 : vector<8x32xf32>
    %cst_156 = arith.constant dense<0.000000e+00> : vector<8xf32>
    %630 = vector.multi_reduction <add>, %629, %cst_156 [1] : vector<8x32xf32> to vector<8xf32>
    %631 = vector.shape_cast %630 : vector<8xf32> to vector<8x1xf32>
    %cst_157 = arith.constant 3.125000e-02 : f32
    %632 = vector.broadcast %cst_157 : f32 to vector<8x1xf32>
    %633 = arith.mulf %631, %632 : vector<8x1xf32>
    %634 = arith.mulf %629, %629 : vector<8x32xf32>
    %cst_158 = arith.constant dense<0.000000e+00> : vector<8xf32>
    %635 = vector.multi_reduction <add>, %634, %cst_158 [1] : vector<8x32xf32> to vector<8xf32>
    %636 = vector.shape_cast %635 : vector<8xf32> to vector<8x1xf32>
    %cst_159 = arith.constant 3.125000e-02 : f32
    %637 = vector.broadcast %cst_159 : f32 to vector<8x1xf32>
    %638 = arith.mulf %636, %637 : vector<8x1xf32>
    %639 = arith.mulf %633, %633 : vector<8x1xf32>
    %640 = arith.subf %638, %639 : vector<8x1xf32>
    %641 = vector.broadcast %633 : vector<8x1xf32> to vector<8x32xf32>
    %642 = arith.subf %629, %641 : vector<8x32xf32>
    %cst_160 = arith.constant 1.000000e-03 : f32
    %643 = vector.broadcast %cst_160 : f32 to vector<8x1xf32>
    %644 = arith.addf %640, %643 : vector<8x1xf32>
    %645 = math.rsqrt %644 : vector<8x1xf32>
    %646 = vector.broadcast %645 : vector<8x1xf32> to vector<8x32xf32>
    %647 = arith.mulf %642, %646 : vector<8x32xf32>
    %cst_161 = arith.constant dense<0.000000e+00> : vector<8x128xf32>
    %648 = tpu.matmul %647, %7, %cst_161 {dimension_numbers = #tpu.dot_dimension_numbers<[1], [0], [0], [1], [0, 0, 1, 1], [], []>} : vector<8x32xf32>, vector<32x128xf32>, vector<8x128xf32> -> vector<8x128xf32>
    %649 = vector.broadcast %8 : vector<1x128xf32> to vector<8x128xf32>
    %650 = arith.addf %648, %649 : vector<8x128xf32>
    %651 = arith.index_cast %c5_i32 : i32 to index
    %c0_162 = arith.constant 0 : index
    %c0_163 = arith.constant 0 : index
    %652 = vector.load %arg8[%651, %c0_162, %c0_163] : memref<8x8x128xf32, #tpu.memory_space<vmem>>, vector<1x8x128xf32>
    %653 = vector.shape_cast %652 : vector<1x8x128xf32> to vector<8x128xf32>
    %654 = vector.shape_cast %650 : vector<8x128xf32> to vector<1x8x128xf32>
    tpu.vector_store %arg8[%651, %c0_162, %c0_163], %654 {strides = array<i32>} : memref<8x8x128xf32, #tpu.memory_space<vmem>>, vector<1x8x128xf32>,
    %c6_i32 = arith.constant 6 : i32
    %655 = arith.index_cast %c6_i32 : i32 to index
    %c0_164 = arith.constant 0 : index
    %c0_165 = arith.constant 0 : index
    %656 = vector.load %arg1[%655, %c0_164, %c0_165] : memref<8x8x128xf32, #tpu.memory_space<vmem>>, vector<1x8x128xf32>
    %657 = vector.shape_cast %656 : vector<1x8x128xf32> to vector<8x128xf32>
    %cst_166 = arith.constant dense<0.000000e+00> : vector<8xf32>
    %658 = vector.multi_reduction <add>, %657, %cst_166 [1] : vector<8x128xf32> to vector<8xf32>
    %659 = vector.shape_cast %658 : vector<8xf32> to vector<8x1xf32>
    %cst_167 = arith.constant 6.250000e-02 : f32
    %660 = vector.broadcast %cst_167 : f32 to vector<8x1xf32>
    %661 = arith.mulf %659, %660 : vector<8x1xf32>
    %662 = arith.mulf %657, %657 : vector<8x128xf32>
    %cst_168 = arith.constant dense<0.000000e+00> : vector<8xf32>
    %663 = vector.multi_reduction <add>, %662, %cst_168 [1] : vector<8x128xf32> to vector<8xf32>
    %664 = vector.shape_cast %663 : vector<8xf32> to vector<8x1xf32>
    %cst_169 = arith.constant 6.250000e-02 : f32
    %665 = vector.broadcast %cst_169 : f32 to vector<8x1xf32>
    %666 = arith.mulf %664, %665 : vector<8x1xf32>
    %667 = arith.mulf %661, %661 : vector<8x1xf32>
    %668 = arith.subf %666, %667 : vector<8x1xf32>
    %669 = vector.broadcast %661 : vector<8x1xf32> to vector<8x128xf32>
    %670 = arith.subf %657, %669 : vector<8x128xf32>
    %cst_170 = arith.constant 1.000000e-03 : f32
    %671 = vector.broadcast %cst_170 : f32 to vector<8x1xf32>
    %672 = arith.addf %668, %671 : vector<8x1xf32>
    %673 = math.rsqrt %672 : vector<8x1xf32>
    %674 = vector.broadcast %673 : vector<8x1xf32> to vector<8x128xf32>
    %675 = arith.mulf %670, %674 : vector<8x128xf32>
    %676 = tpu.concatenate %675, %597 in 1 : vector<8x128xf32>, vector<8x32xf32> -> vector<8x160xf32>
    %cst_171 = arith.constant dense<0.000000e+00> : vector<8x128xf32>
    %677 = tpu.matmul %676, %3, %cst_171 {dimension_numbers = #tpu.dot_dimension_numbers<[1], [0], [0], [1], [0, 0, 1, 1], [], []>} : vector<8x160xf32>, vector<160x128xf32>, vector<8x128xf32> -> vector<8x128xf32>
    %678 = vector.broadcast %4 : vector<1x128xf32> to vector<8x128xf32>
    %679 = arith.addf %677, %678 : vector<8x128xf32>
    %680 = vector.extract_strided_slice %679 {offsets = [0, 0], sizes = [8, 32], strides = [1, 1]} : vector<8x128xf32> to vector<8x32xf32>
    %681 = arith.negf %680 : vector<8x32xf32>
    %682 = math.exp %681 : vector<8x32xf32>
    %cst_172 = arith.constant 1.000000e+00 : f32
    %683 = vector.broadcast %cst_172 : f32 to vector<8x32xf32>
    %684 = arith.addf %683, %682 : vector<8x32xf32>
    %685 = arith.divf %683, %684 : vector<8x32xf32>
    %686 = vector.extract_strided_slice %679 {offsets = [0, 32], sizes = [8, 32], strides = [1, 1]} : vector<8x128xf32> to vector<8x32xf32>
    %687 = arith.negf %686 : vector<8x32xf32>
    %688 = math.exp %687 : vector<8x32xf32>
    %cst_173 = arith.constant 1.000000e+00 : f32
    %689 = vector.broadcast %cst_173 : f32 to vector<8x32xf32>
    %690 = arith.addf %689, %688 : vector<8x32xf32>
    %691 = arith.divf %689, %690 : vector<8x32xf32>
    %692 = vector.extract_strided_slice %679 {offsets = [0, 64], sizes = [8, 32], strides = [1, 1]} : vector<8x128xf32> to vector<8x32xf32>
    %693 = math.tanh %692 : vector<8x32xf32>
    %694 = vector.extract_strided_slice %679 {offsets = [0, 96], sizes = [8, 32], strides = [1, 1]} : vector<8x128xf32> to vector<8x32xf32>
    %695 = arith.negf %694 : vector<8x32xf32>
    %696 = math.exp %695 : vector<8x32xf32>
    %cst_174 = arith.constant 1.000000e+00 : f32
    %697 = vector.broadcast %cst_174 : f32 to vector<8x32xf32>
    %698 = arith.addf %697, %696 : vector<8x32xf32>
    %699 = arith.divf %697, %698 : vector<8x32xf32>
    %700 = arith.mulf %691, %595 : vector<8x32xf32>
    %701 = arith.mulf %685, %693 : vector<8x32xf32>
    %702 = arith.addf %700, %701 : vector<8x32xf32>
    %703 = math.tanh %702 : vector<8x32xf32>
    %704 = arith.mulf %699, %703 : vector<8x32xf32>
    %705 = vector.extract_strided_slice %5 {offsets = [0, 0], sizes = [32, 128], strides = [1, 1]} : vector<64x128xf32> to vector<32x128xf32>
    %cst_175 = arith.constant dense<0.000000e+00> : vector<8x128xf32>
    %706 = tpu.matmul %704, %705, %cst_175 {dimension_numbers = #tpu.dot_dimension_numbers<[1], [0], [0], [1], [0, 0, 1, 1], [], []>} : vector<8x32xf32>, vector<32x128xf32>, vector<8x128xf32> -> vector<8x128xf32>
    %707 = vector.extract_strided_slice %5 {offsets = [32, 0], sizes = [32, 128], strides = [1, 1]} : vector<64x128xf32> to vector<32x128xf32>
    %cst_176 = arith.constant dense<0.000000e+00> : vector<8x128xf32>
    %708 = tpu.matmul %629, %707, %cst_176 {dimension_numbers = #tpu.dot_dimension_numbers<[1], [0], [0], [1], [0, 0, 1, 1], [], []>} : vector<8x32xf32>, vector<32x128xf32>, vector<8x128xf32> -> vector<8x128xf32>
    %709 = arith.addf %706, %708 : vector<8x128xf32>
    %710 = vector.broadcast %6 : vector<1x128xf32> to vector<8x128xf32>
    %711 = arith.addf %709, %710 : vector<8x128xf32>
    %712 = vector.extract_strided_slice %711 {offsets = [0, 0], sizes = [8, 32], strides = [1, 1]} : vector<8x128xf32> to vector<8x32xf32>
    %713 = arith.negf %712 : vector<8x32xf32>
    %714 = math.exp %713 : vector<8x32xf32>
    %cst_177 = arith.constant 1.000000e+00 : f32
    %715 = vector.broadcast %cst_177 : f32 to vector<8x32xf32>
    %716 = arith.addf %715, %714 : vector<8x32xf32>
    %717 = arith.divf %715, %716 : vector<8x32xf32>
    %718 = vector.extract_strided_slice %711 {offsets = [0, 32], sizes = [8, 32], strides = [1, 1]} : vector<8x128xf32> to vector<8x32xf32>
    %719 = arith.negf %718 : vector<8x32xf32>
    %720 = math.exp %719 : vector<8x32xf32>
    %cst_178 = arith.constant 1.000000e+00 : f32
    %721 = vector.broadcast %cst_178 : f32 to vector<8x32xf32>
    %722 = arith.addf %721, %720 : vector<8x32xf32>
    %723 = arith.divf %721, %722 : vector<8x32xf32>
    %724 = vector.extract_strided_slice %711 {offsets = [0, 64], sizes = [8, 32], strides = [1, 1]} : vector<8x128xf32> to vector<8x32xf32>
    %725 = math.tanh %724 : vector<8x32xf32>
    %726 = vector.extract_strided_slice %711 {offsets = [0, 96], sizes = [8, 32], strides = [1, 1]} : vector<8x128xf32> to vector<8x32xf32>
    %727 = arith.negf %726 : vector<8x32xf32>
    %728 = math.exp %727 : vector<8x32xf32>
    %cst_179 = arith.constant 1.000000e+00 : f32
    %729 = vector.broadcast %cst_179 : f32 to vector<8x32xf32>
    %730 = arith.addf %729, %728 : vector<8x32xf32>
    %731 = arith.divf %729, %730 : vector<8x32xf32>
    %732 = arith.mulf %723, %627 : vector<8x32xf32>
    %733 = arith.mulf %717, %725 : vector<8x32xf32>
    %734 = arith.addf %732, %733 : vector<8x32xf32>
    %735 = math.tanh %734 : vector<8x32xf32>
    %736 = arith.mulf %731, %735 : vector<8x32xf32>
    %cst_180 = arith.constant dense<0.000000e+00> : vector<8xf32>
    %737 = vector.multi_reduction <add>, %736, %cst_180 [1] : vector<8x32xf32> to vector<8xf32>
    %738 = vector.shape_cast %737 : vector<8xf32> to vector<8x1xf32>
    %cst_181 = arith.constant 3.125000e-02 : f32
    %739 = vector.broadcast %cst_181 : f32 to vector<8x1xf32>
    %740 = arith.mulf %738, %739 : vector<8x1xf32>
    %741 = arith.mulf %736, %736 : vector<8x32xf32>
    %cst_182 = arith.constant dense<0.000000e+00> : vector<8xf32>
    %742 = vector.multi_reduction <add>, %741, %cst_182 [1] : vector<8x32xf32> to vector<8xf32>
    %743 = vector.shape_cast %742 : vector<8xf32> to vector<8x1xf32>
    %cst_183 = arith.constant 3.125000e-02 : f32
    %744 = vector.broadcast %cst_183 : f32 to vector<8x1xf32>
    %745 = arith.mulf %743, %744 : vector<8x1xf32>
    %746 = arith.mulf %740, %740 : vector<8x1xf32>
    %747 = arith.subf %745, %746 : vector<8x1xf32>
    %748 = vector.broadcast %740 : vector<8x1xf32> to vector<8x32xf32>
    %749 = arith.subf %736, %748 : vector<8x32xf32>
    %cst_184 = arith.constant 1.000000e-03 : f32
    %750 = vector.broadcast %cst_184 : f32 to vector<8x1xf32>
    %751 = arith.addf %747, %750 : vector<8x1xf32>
    %752 = math.rsqrt %751 : vector<8x1xf32>
    %753 = vector.broadcast %752 : vector<8x1xf32> to vector<8x32xf32>
    %754 = arith.mulf %749, %753 : vector<8x32xf32>
    %cst_185 = arith.constant dense<0.000000e+00> : vector<8x128xf32>
    %755 = tpu.matmul %754, %7, %cst_185 {dimension_numbers = #tpu.dot_dimension_numbers<[1], [0], [0], [1], [0, 0, 1, 1], [], []>} : vector<8x32xf32>, vector<32x128xf32>, vector<8x128xf32> -> vector<8x128xf32>
    %756 = vector.broadcast %8 : vector<1x128xf32> to vector<8x128xf32>
    %757 = arith.addf %755, %756 : vector<8x128xf32>
    %758 = arith.index_cast %c6_i32 : i32 to index
    %c0_186 = arith.constant 0 : index
    %c0_187 = arith.constant 0 : index
    %759 = vector.load %arg8[%758, %c0_186, %c0_187] : memref<8x8x128xf32, #tpu.memory_space<vmem>>, vector<1x8x128xf32>
    %760 = vector.shape_cast %759 : vector<1x8x128xf32> to vector<8x128xf32>
    %761 = vector.shape_cast %757 : vector<8x128xf32> to vector<1x8x128xf32>
    tpu.vector_store %arg8[%758, %c0_186, %c0_187], %761 {strides = array<i32>} : memref<8x8x128xf32, #tpu.memory_space<vmem>>, vector<1x8x128xf32>,
    %c7_i32 = arith.constant 7 : i32
    %762 = arith.index_cast %c7_i32 : i32 to index
    %c0_188 = arith.constant 0 : index
    %c0_189 = arith.constant 0 : index
    %763 = vector.load %arg1[%762, %c0_188, %c0_189] : memref<8x8x128xf32, #tpu.memory_space<vmem>>, vector<1x8x128xf32>
    %764 = vector.shape_cast %763 : vector<1x8x128xf32> to vector<8x128xf32>
    %cst_190 = arith.constant dense<0.000000e+00> : vector<8xf32>
    %765 = vector.multi_reduction <add>, %764, %cst_190 [1] : vector<8x128xf32> to vector<8xf32>
    %766 = vector.shape_cast %765 : vector<8xf32> to vector<8x1xf32>
    %cst_191 = arith.constant 6.250000e-02 : f32
    %767 = vector.broadcast %cst_191 : f32 to vector<8x1xf32>
    %768 = arith.mulf %766, %767 : vector<8x1xf32>
    %769 = arith.mulf %764, %764 : vector<8x128xf32>
    %cst_192 = arith.constant dense<0.000000e+00> : vector<8xf32>
    %770 = vector.multi_reduction <add>, %769, %cst_192 [1] : vector<8x128xf32> to vector<8xf32>
    %771 = vector.shape_cast %770 : vector<8xf32> to vector<8x1xf32>
    %cst_193 = arith.constant 6.250000e-02 : f32
    %772 = vector.broadcast %cst_193 : f32 to vector<8x1xf32>
    %773 = arith.mulf %771, %772 : vector<8x1xf32>
    %774 = arith.mulf %768, %768 : vector<8x1xf32>
    %775 = arith.subf %773, %774 : vector<8x1xf32>
    %776 = vector.broadcast %768 : vector<8x1xf32> to vector<8x128xf32>
    %777 = arith.subf %764, %776 : vector<8x128xf32>
    %cst_194 = arith.constant 1.000000e-03 : f32
    %778 = vector.broadcast %cst_194 : f32 to vector<8x1xf32>
    %779 = arith.addf %775, %778 : vector<8x1xf32>
    %780 = math.rsqrt %779 : vector<8x1xf32>
    %781 = vector.broadcast %780 : vector<8x1xf32> to vector<8x128xf32>
    %782 = arith.mulf %777, %781 : vector<8x128xf32>
    %783 = tpu.concatenate %782, %704 in 1 : vector<8x128xf32>, vector<8x32xf32> -> vector<8x160xf32>
    %cst_195 = arith.constant dense<0.000000e+00> : vector<8x128xf32>
    %784 = tpu.matmul %783, %3, %cst_195 {dimension_numbers = #tpu.dot_dimension_numbers<[1], [0], [0], [1], [0, 0, 1, 1], [], []>} : vector<8x160xf32>, vector<160x128xf32>, vector<8x128xf32> -> vector<8x128xf32>
    %785 = vector.broadcast %4 : vector<1x128xf32> to vector<8x128xf32>
    %786 = arith.addf %784, %785 : vector<8x128xf32>
    %787 = vector.extract_strided_slice %786 {offsets = [0, 0], sizes = [8, 32], strides = [1, 1]} : vector<8x128xf32> to vector<8x32xf32>
    %788 = arith.negf %787 : vector<8x32xf32>
    %789 = math.exp %788 : vector<8x32xf32>
    %cst_196 = arith.constant 1.000000e+00 : f32
    %790 = vector.broadcast %cst_196 : f32 to vector<8x32xf32>
    %791 = arith.addf %790, %789 : vector<8x32xf32>
    %792 = arith.divf %790, %791 : vector<8x32xf32>
    %793 = vector.extract_strided_slice %786 {offsets = [0, 32], sizes = [8, 32], strides = [1, 1]} : vector<8x128xf32> to vector<8x32xf32>
    %794 = arith.negf %793 : vector<8x32xf32>
    %795 = math.exp %794 : vector<8x32xf32>
    %cst_197 = arith.constant 1.000000e+00 : f32
    %796 = vector.broadcast %cst_197 : f32 to vector<8x32xf32>
    %797 = arith.addf %796, %795 : vector<8x32xf32>
    %798 = arith.divf %796, %797 : vector<8x32xf32>
    %799 = vector.extract_strided_slice %786 {offsets = [0, 64], sizes = [8, 32], strides = [1, 1]} : vector<8x128xf32> to vector<8x32xf32>
    %800 = math.tanh %799 : vector<8x32xf32>
    %801 = vector.extract_strided_slice %786 {offsets = [0, 96], sizes = [8, 32], strides = [1, 1]} : vector<8x128xf32> to vector<8x32xf32>
    %802 = arith.negf %801 : vector<8x32xf32>
    %803 = math.exp %802 : vector<8x32xf32>
    %cst_198 = arith.constant 1.000000e+00 : f32
    %804 = vector.broadcast %cst_198 : f32 to vector<8x32xf32>
    %805 = arith.addf %804, %803 : vector<8x32xf32>
    %806 = arith.divf %804, %805 : vector<8x32xf32>
    %807 = arith.mulf %798, %702 : vector<8x32xf32>
    %808 = arith.mulf %792, %800 : vector<8x32xf32>
    %809 = arith.addf %807, %808 : vector<8x32xf32>
    %810 = math.tanh %809 : vector<8x32xf32>
    %811 = arith.mulf %806, %810 : vector<8x32xf32>
    %812 = vector.extract_strided_slice %5 {offsets = [0, 0], sizes = [32, 128], strides = [1, 1]} : vector<64x128xf32> to vector<32x128xf32>
    %cst_199 = arith.constant dense<0.000000e+00> : vector<8x128xf32>
    %813 = tpu.matmul %811, %812, %cst_199 {dimension_numbers = #tpu.dot_dimension_numbers<[1], [0], [0], [1], [0, 0, 1, 1], [], []>} : vector<8x32xf32>, vector<32x128xf32>, vector<8x128xf32> -> vector<8x128xf32>
    %814 = vector.extract_strided_slice %5 {offsets = [32, 0], sizes = [32, 128], strides = [1, 1]} : vector<64x128xf32> to vector<32x128xf32>
    %cst_200 = arith.constant dense<0.000000e+00> : vector<8x128xf32>
    %815 = tpu.matmul %736, %814, %cst_200 {dimension_numbers = #tpu.dot_dimension_numbers<[1], [0], [0], [1], [0, 0, 1, 1], [], []>} : vector<8x32xf32>, vector<32x128xf32>, vector<8x128xf32> -> vector<8x128xf32>
    %816 = arith.addf %813, %815 : vector<8x128xf32>
    %817 = vector.broadcast %6 : vector<1x128xf32> to vector<8x128xf32>
    %818 = arith.addf %816, %817 : vector<8x128xf32>
    %819 = vector.extract_strided_slice %818 {offsets = [0, 0], sizes = [8, 32], strides = [1, 1]} : vector<8x128xf32> to vector<8x32xf32>
    %820 = arith.negf %819 : vector<8x32xf32>
    %821 = math.exp %820 : vector<8x32xf32>
    %cst_201 = arith.constant 1.000000e+00 : f32
    %822 = vector.broadcast %cst_201 : f32 to vector<8x32xf32>
    %823 = arith.addf %822, %821 : vector<8x32xf32>
    %824 = arith.divf %822, %823 : vector<8x32xf32>
    %825 = vector.extract_strided_slice %818 {offsets = [0, 32], sizes = [8, 32], strides = [1, 1]} : vector<8x128xf32> to vector<8x32xf32>
    %826 = arith.negf %825 : vector<8x32xf32>
    %827 = math.exp %826 : vector<8x32xf32>
    %cst_202 = arith.constant 1.000000e+00 : f32
    %828 = vector.broadcast %cst_202 : f32 to vector<8x32xf32>
    %829 = arith.addf %828, %827 : vector<8x32xf32>
    %830 = arith.divf %828, %829 : vector<8x32xf32>
    %831 = vector.extract_strided_slice %818 {offsets = [0, 64], sizes = [8, 32], strides = [1, 1]} : vector<8x128xf32> to vector<8x32xf32>
    %832 = math.tanh %831 : vector<8x32xf32>
    %833 = vector.extract_strided_slice %818 {offsets = [0, 96], sizes = [8, 32], strides = [1, 1]} : vector<8x128xf32> to vector<8x32xf32>
    %834 = arith.negf %833 : vector<8x32xf32>
    %835 = math.exp %834 : vector<8x32xf32>
    %cst_203 = arith.constant 1.000000e+00 : f32
    %836 = vector.broadcast %cst_203 : f32 to vector<8x32xf32>
    %837 = arith.addf %836, %835 : vector<8x32xf32>
    %838 = arith.divf %836, %837 : vector<8x32xf32>
    %839 = arith.mulf %830, %734 : vector<8x32xf32>
    %840 = arith.mulf %824, %832 : vector<8x32xf32>
    %841 = arith.addf %839, %840 : vector<8x32xf32>
    %842 = math.tanh %841 : vector<8x32xf32>
    %843 = arith.mulf %838, %842 : vector<8x32xf32>
    %cst_204 = arith.constant dense<0.000000e+00> : vector<8xf32>
    %844 = vector.multi_reduction <add>, %843, %cst_204 [1] : vector<8x32xf32> to vector<8xf32>
    %845 = vector.shape_cast %844 : vector<8xf32> to vector<8x1xf32>
    %cst_205 = arith.constant 3.125000e-02 : f32
    %846 = vector.broadcast %cst_205 : f32 to vector<8x1xf32>
    %847 = arith.mulf %845, %846 : vector<8x1xf32>
    %848 = arith.mulf %843, %843 : vector<8x32xf32>
    %cst_206 = arith.constant dense<0.000000e+00> : vector<8xf32>
    %849 = vector.multi_reduction <add>, %848, %cst_206 [1] : vector<8x32xf32> to vector<8xf32>
    %850 = vector.shape_cast %849 : vector<8xf32> to vector<8x1xf32>
    %cst_207 = arith.constant 3.125000e-02 : f32
    %851 = vector.broadcast %cst_207 : f32 to vector<8x1xf32>
    %852 = arith.mulf %850, %851 : vector<8x1xf32>
    %853 = arith.mulf %847, %847 : vector<8x1xf32>
    %854 = arith.subf %852, %853 : vector<8x1xf32>
    %855 = vector.broadcast %847 : vector<8x1xf32> to vector<8x32xf32>
    %856 = arith.subf %843, %855 : vector<8x32xf32>
    %cst_208 = arith.constant 1.000000e-03 : f32
    %857 = vector.broadcast %cst_208 : f32 to vector<8x1xf32>
    %858 = arith.addf %854, %857 : vector<8x1xf32>
    %859 = math.rsqrt %858 : vector<8x1xf32>
    %860 = vector.broadcast %859 : vector<8x1xf32> to vector<8x32xf32>
    %861 = arith.mulf %856, %860 : vector<8x32xf32>
    %cst_209 = arith.constant dense<0.000000e+00> : vector<8x128xf32>
    %862 = tpu.matmul %861, %7, %cst_209 {dimension_numbers = #tpu.dot_dimension_numbers<[1], [0], [0], [1], [0, 0, 1, 1], [], []>} : vector<8x32xf32>, vector<32x128xf32>, vector<8x128xf32> -> vector<8x128xf32>
    %863 = vector.broadcast %8 : vector<1x128xf32> to vector<8x128xf32>
    %864 = arith.addf %862, %863 : vector<8x128xf32>
    %865 = arith.index_cast %c7_i32 : i32 to index
    %c0_210 = arith.constant 0 : index
    %c0_211 = arith.constant 0 : index
    %866 = vector.load %arg8[%865, %c0_210, %c0_211] : memref<8x8x128xf32, #tpu.memory_space<vmem>>, vector<1x8x128xf32>
    %867 = vector.shape_cast %866 : vector<1x8x128xf32> to vector<8x128xf32>
    %868 = vector.shape_cast %864 : vector<8x128xf32> to vector<1x8x128xf32>
    tpu.vector_store %arg8[%865, %c0_210, %c0_211], %868 {strides = array<i32>} : memref<8x8x128xf32, #tpu.memory_space<vmem>>, vector<1x8x128xf32>,
    %c8_i32 = arith.constant 8 : i32
    %c0_212 = arith.constant 0 : index
    %c0_213 = arith.constant 0 : index
    %869 = vector.load %arg9[%c0_212, %c0_213] : memref<8x32xf32, #tpu.memory_space<vmem>>, vector<8x32xf32>
    tpu.vector_store %arg9[%c0_212, %c0_213], %811 {strides = array<i32>} : memref<8x32xf32, #tpu.memory_space<vmem>>, vector<8x32xf32>,
    %c0_214 = arith.constant 0 : index
    %c0_215 = arith.constant 0 : index
    %870 = vector.load %arg10[%c0_214, %c0_215] : memref<8x32xf32, #tpu.memory_space<vmem>>, vector<8x32xf32>
    tpu.vector_store %arg10[%c0_214, %c0_215], %809 {strides = array<i32>} : memref<8x32xf32, #tpu.memory_space<vmem>>, vector<8x32xf32>,
    %c0_216 = arith.constant 0 : index
    %c0_217 = arith.constant 0 : index
    %871 = vector.load %arg11[%c0_216, %c0_217] : memref<8x32xf32, #tpu.memory_space<vmem>>, vector<8x32xf32>
    tpu.vector_store %arg11[%c0_216, %c0_217], %843 {strides = array<i32>} : memref<8x32xf32, #tpu.memory_space<vmem>>, vector<8x32xf32>,
    %c0_218 = arith.constant 0 : index
    %c0_219 = arith.constant 0 : index
    %872 = vector.load %arg12[%c0_218, %c0_219] : memref<8x32xf32, #tpu.memory_space<vmem>>, vector<8x32xf32>
    tpu.vector_store %arg12[%c0_218, %c0_219], %841 {strides = array<i32>} : memref<8x32xf32, #tpu.memory_space<vmem>>, vector<8x32xf32>,
    return
  }
  func.func @transform_0(%arg0: i32) -> (i32, i32, i32) {
    %c0_i32 = arith.constant 0 : i32
    %c0_i32_0 = arith.constant 0 : i32
    %c0_i32_1 = arith.constant 0 : i32
    return %arg0, %c0_i32, %c0_i32_0 : i32, i32, i32
  }
  func.func @transform_1(%arg0: i32) -> (i32, i32) {
    %c0_i32 = arith.constant 0 : i32
    %c0_i32_0 = arith.constant 0 : i32
    %c0_i32_1 = arith.constant 0 : i32
    return %c0_i32, %c0_i32_0 : i32, i32
  }
  func.func @transform_2(%arg0: i32) -> (i32, i32) {
    %c0_i32 = arith.constant 0 : i32
    %c0_i32_0 = arith.constant 0 : i32
    %c0_i32_1 = arith.constant 0 : i32
    return %c0_i32, %c0_i32_0 : i32, i32
  }
  func.func @transform_3(%arg0: i32) -> (i32, i32) {
    %c0_i32 = arith.constant 0 : i32
    %c0_i32_0 = arith.constant 0 : i32
    %c0_i32_1 = arith.constant 0 : i32
    return %c0_i32, %c0_i32_0 : i32, i32
  }
  func.func @transform_4(%arg0: i32) -> (i32, i32) {
    %c0_i32 = arith.constant 0 : i32
    %c0_i32_0 = arith.constant 0 : i32
    %c0_i32_1 = arith.constant 0 : i32
    return %c0_i32, %c0_i32_0 : i32, i32
  }
  func.func @transform_5(%arg0: i32) -> (i32, i32) {
    %c0_i32 = arith.constant 0 : i32
    %c0_i32_0 = arith.constant 0 : i32
    %c0_i32_1 = arith.constant 0 : i32
    return %c0_i32, %c0_i32_0 : i32, i32
  }
  func.func @transform_6(%arg0: i32) -> (i32, i32) {
    %c0_i32 = arith.constant 0 : i32
    %c0_i32_0 = arith.constant 0 : i32
    %c0_i32_1 = arith.constant 0 : i32
    return %c0_i32, %c0_i32_0 : i32, i32
  }
  func.func @transform_7(%arg0: i32) -> (i32, i32, i32) {
    %c0_i32 = arith.constant 0 : i32
    %c0_i32_0 = arith.constant 0 : i32
    %c0_i32_1 = arith.constant 0 : i32
    return %arg0, %c0_i32, %c0_i32_0 : i32, i32, i32
  }
}

</mosaic_0001>

<llo_original>
// kernel: one_out_lstm_forward.1
$region0: #{one_out_lstm_forward.1}
  #allocation0 [shape = 'u32[]', space=smem, size = 0x4, offset = 0x4, fixed_abs, tag = 'smem constant byte address 0x4 - core index']
  #allocation1 [shape = 'u32[144,128]{1,0:T(1,128)}', space=vmem, size = 0x12000, scoped, tag = 'internal scratch']
  #allocation2 [shape = 'f32[8,32]{1,0:T(8,128)}', space=vmem, size = 0x1000, scoped, tag = 'scratch operand']
  #allocation3 [shape = 'f32[8,32]{1,0:T(8,128)}', space=vmem, size = 0x1000, scoped, tag = 'scratch operand']
  #allocation4 [shape = 'f32[8,32]{1,0:T(8,128)}', space=vmem, size = 0x1000, scoped, tag = 'scratch operand']
  #allocation5 [shape = 'f32[8,32]{1,0:T(8,128)}', space=vmem, size = 0x1000, scoped, tag = 'scratch operand']
  %s0 = inlined_call_operand.vmem [shape: f32[16,8,128], index: 0, kind: input, shape index: {}]
  %s1 = inlined_call_operand.vmem [shape: f32[160,128], index: 1, kind: input, shape index: {}]
  %s2 = inlined_call_operand.vmem [shape: f32[1,128], index: 2, kind: input, shape index: {}]
  %s3 = inlined_call_operand.vmem [shape: f32[64,128], index: 3, kind: input, shape index: {}]
  %s4 = inlined_call_operand.vmem [shape: f32[1,128], index: 4, kind: input, shape index: {}]
  %s5 = inlined_call_operand.vmem [shape: f32[32,128], index: 5, kind: input, shape index: {}]
  %s6 = inlined_call_operand.vmem [shape: f32[1,128], index: 6, kind: input, shape index: {}]
  %s7 = inlined_call_operand.vmem [shape: f32[16,8,128], index: 7, kind: output, shape index: {}]
  %s8 = sld [smem:[#allocation0]]
  $region65: #{one_out_lstm_forward.1} parent=0
    _
  %s10 = ssub.s32 1, %s8
  %s11 = scalar_select 0, %s10, %s8
  loop: start=0, step=1, limit=4
  $region2: #{one_out_lstm_forward.1} parent=0 // loop_pre_header
    _
  $region3: #{one_out_lstm_forward.1} parent=0 // loop_header
    %s13 = sphi 0, %s17
    %p14 = scmp.ge.s32.totalorder %s13, 4
    %s23 = sphi 0, %s25
    %s26 = sphi 0, %s23
    %s27 = sphi 0, %s26
    %s43 = sphi 0, %s27
    %s47 = sphi 0, %s47
    %s49 = sphi 0, %s47
    %s50 = sphi 0, %s49
    %s64 = sphi 0, %s50
    %s68 = sphi 0, %s68
    %s70 = sphi 0, %s68
    %s71 = sphi 0, %s70
    %s85 = sphi 0, %s71
    %s89 = sphi 0, %s89
    %s91 = sphi 0, %s89
    %s92 = sphi 0, %s91
    %s106 = sphi 0, %s92
    %s110 = sphi 0, %s110
    %s112 = sphi 0, %s110
    %s113 = sphi 0, %s112
    %s127 = sphi 0, %s113
    %s131 = sphi 0, %s131
    %s133 = sphi 0, %s131
    %s134 = sphi 0, %s133
    %s148 = sphi 0, %s134
    %s152 = sphi 0, %s152
    %s154 = sphi 0, %s152
    %s155 = sphi 0, %s154
    %s169 = sphi 0, %s155
    %s175 = sphi 0, %s177
    %s178 = sphi 0, %s175
    %s179 = sphi 0, %s178
    %s195 = sphi 0, %s179
  $region4: #{one_out_lstm_forward.1} parent=0 // loop_header_branch
    %16 = sbr.rel (%p14) target = $region8
  $region5: #{one_out_lstm_forward.1} parent=0 // loop_body
    %s18 = ssub.s32 %s13, 1
    %s19 = ssub.s32 %s13, 2
    %s20 = sadd.s32 %s13, 1
    %s21 = ssub.s32 %s13, %s20
    %p22 = scmp.eq.s32.totalorder %s21, 0
    %s24 = sadd.s32 %s23, 1
    %s25 = scalar_select %p22, %s23, %s24
    %p28 = pneg %p22
    %p29 = scmp.eq.s32.totalorder %s13, 1
    %p30 = por %p28, %p29
    %p31 = scmp.ne.s32.totalorder %s23, %s26
    %p32 = scmp.eq.s32.totalorder %s13, 0
    %p33 = por %p31, %p32
    %p34 = scmp.ne.s32.totalorder %s23, %s26
    %p35 = scmp.eq.s32.totalorder %s18, 1
    %p36 = por %p34, %p35
    %p37 = scmp.ne.s32.totalorder %s26, %s27
    %p38 = scmp.eq.s32.totalorder %s18, 0
    %p39 = por %p37, %p38
    %p40 = scmp.ne.s32.totalorder %s26, %s27
    %p41 = scmp.eq.s32.totalorder %s19, 1
    %p42 = por %p40, %p41
    %p44 = scmp.ne.s32.totalorder %s27, %s43
    %p45 = scmp.eq.s32.totalorder %s19, 0
    %p46 = por %p44, %p45
    %s48 = sadd.s32 %s47, 1
    %p51 = scmp.eq.s32.totalorder %s13, 1
    %p52 = scmp.ne.s32.totalorder %s47, %s49
    %p53 = scmp.eq.s32.totalorder %s13, 0
    %p54 = por %p52, %p53
    %p55 = scmp.ne.s32.totalorder %s47, %s49
    %p56 = scmp.eq.s32.totalorder %s18, 1
    %p57 = por %p55, %p56
    %p58 = scmp.ne.s32.totalorder %s49, %s50
    %p59 = scmp.eq.s32.totalorder %s18, 0
    %p60 = por %p58, %p59
    %p61 = scmp.ne.s32.totalorder %s49, %s50
    %p62 = scmp.eq.s32.totalorder %s19, 1
    %p63 = por %p61, %p62
    %p65 = scmp.ne.s32.totalorder %s50, %s64
    %p66 = scmp.eq.s32.totalorder %s19, 0
    %p67 = por %p65, %p66
    %s69 = sadd.s32 %s68, 1
    %p72 = scmp.eq.s32.totalorder %s13, 1
    %p73 = scmp.ne.s32.totalorder %s68, %s70
    %p74 = scmp.eq.s32.totalorder %s13, 0
    %p75 = por %p73, %p74
    %p76 = scmp.ne.s32.totalorder %s68, %s70
    %p77 = scmp.eq.s32.totalorder %s18, 1
    %p78 = por %p76, %p77
    %p79 = scmp.ne.s32.totalorder %s70, %s71
    %p80 = scmp.eq.s32.totalorder %s18, 0
    %p81 = por %p79, %p80
    %p82 = scmp.ne.s32.totalorder %s70, %s71
    %p83 = scmp.eq.s32.totalorder %s19, 1
    %p84 = por %p82, %p83
    %p86 = scmp.ne.s32.totalorder %s71, %s85
    %p87 = scmp.eq.s32.totalorder %s19, 0
    %p88 = por %p86, %p87
    %s90 = sadd.s32 %s89, 1
    %p93 = scmp.eq.s32.totalorder %s13, 1
    %p94 = scmp.ne.s32.totalorder %s89, %s91
    %p95 = scmp.eq.s32.totalorder %s13, 0
    %p96 = por %p94, %p95
    %p97 = scmp.ne.s32.totalorder %s89, %s91
    %p98 = scmp.eq.s32.totalorder %s18, 1
    %p99 = por %p97, %p98
    %p100 = scmp.ne.s32.totalorder %s91, %s92
    %p101 = scmp.eq.s32.totalorder %s18, 0
    %p102 = por %p100, %p101
    %p103 = scmp.ne.s32.totalorder %s91, %s92
    %p104 = scmp.eq.s32.totalorder %s19, 1
    %p105 = por %p103, %p104
    %p107 = scmp.ne.s32.totalorder %s92, %s106
    %p108 = scmp.eq.s32.totalorder %s19, 0
    %p109 = por %p107, %p108
    %s111 = sadd.s32 %s110, 1
    %p114 = scmp.eq.s32.totalorder %s13, 1
    %p115 = scmp.ne.s32.totalorder %s110, %s112
    %p116 = scmp.eq.s32.totalorder %s13, 0
    %p117 = por %p115, %p116
    %p118 = scmp.ne.s32.totalorder %s110, %s112
    %p119 = scmp.eq.s32.totalorder %s18, 1
    %p120 = por %p118, %p119
    %p121 = scmp.ne.s32.totalorder %s112, %s113
    %p122 = scmp.eq.s32.totalorder %s18, 0
    %p123 = por %p121, %p122
    %p124 = scmp.ne.s32.totalorder %s112, %s113
    %p125 = scmp.eq.s32.totalorder %s19, 1
    %p126 = por %p124, %p125
    %p128 = scmp.ne.s32.totalorder %s113, %s127
    %p129 = scmp.eq.s32.totalorder %s19, 0
    %p130 = por %p128, %p129
    %s132 = sadd.s32 %s131, 1
    %p135 = scmp.eq.s32.totalorder %s13, 1
    %p136 = scmp.ne.s32.totalorder %s131, %s133
    %p137 = scmp.eq.s32.totalorder %s13, 0
    %p138 = por %p136, %p137
    %p139 = scmp.ne.s32.totalorder %s131, %s133
    %p140 = scmp.eq.s32.totalorder %s18, 1
    %p141 = por %p139, %p140
    %p142 = scmp.ne.s32.totalorder %s133, %s134
    %p143 = scmp.eq.s32.totalorder %s18, 0
    %p144 = por %p142, %p143
    %p145 = scmp.ne.s32.totalorder %s133, %s134
    %p146 = scmp.eq.s32.totalorder %s19, 1
    %p147 = por %p145, %p146
    %p149 = scmp.ne.s32.totalorder %s134, %s148
    %p150 = scmp.eq.s32.totalorder %s19, 0
    %p151 = por %p149, %p150
    %s153 = sadd.s32 %s152, 1
    %p156 = scmp.eq.s32.totalorder %s13, 1
    %p157 = scmp.ne.s32.totalorder %s152, %s154
    %p158 = scmp.eq.s32.totalorder %s13, 0
    %p159 = por %p157, %p158
    %p160 = scmp.ne.s32.totalorder %s152, %s154
    %p161 = scmp.eq.s32.totalorder %s18, 1
    %p162 = por %p160, %p161
    %p163 = scmp.ne.s32.totalorder %s154, %s155
    %p164 = scmp.eq.s32.totalorder %s18, 0
    %p165 = por %p163, %p164
    %p166 = scmp.ne.s32.totalorder %s154, %s155
    %p167 = scmp.eq.s32.totalorder %s19, 1
    %p168 = por %p166, %p167
    %p170 = scmp.ne.s32.totalorder %s155, %s169
    %p171 = scmp.eq.s32.totalorder %s19, 0
    %p172 = por %p170, %p171
    %s173 = ssub.s32 %s13, %s20
    %p174 = scmp.eq.s32.totalorder %s173, 0
    %s176 = sadd.s32 %s175, 1
    %s177 = scalar_select %p174, %s175, %s176
    %p180 = pneg %p174
    %p181 = scmp.eq.s32.totalorder %s13, 1
    %p182 = por %p180, %p181
    %p183 = scmp.ne.s32.totalorder %s175, %s178
    %p184 = scmp.eq.s32.totalorder %s13, 0
    %p185 = por %p183, %p184
    %p186 = scmp.ne.s32.totalorder %s175, %s178
    %p187 = scmp.eq.s32.totalorder %s18, 1
    %p188 = por %p186, %p187
    %p189 = scmp.ne.s32.totalorder %s178, %s179
    %p190 = scmp.eq.s32.totalorder %s18, 0
    %p191 = por %p189, %p190
    %p192 = scmp.ne.s32.totalorder %s178, %s179
    %p193 = scmp.eq.s32.totalorder %s19, 1
    %p194 = por %p192, %p193
    %p196 = scmp.ne.s32.totalorder %s179, %s195
    %p197 = scmp.eq.s32.totalorder %s19, 0
    %p198 = por %p196, %p197
    %p199 = scmp.le.s32.totalorder 1, %s13
    %p200 = scmp.lt.s32.totalorder %s13, 3
    %p201 = pnand %p199, %p200
    %p202 = pneg %p201
    // Predicated region
    $region9: #{one_out_lstm_forward.1} parent=5 // pred_check
      _
    $region10: #{one_out_lstm_forward.1} parent=5 // pred_check_branch
      %204 = sbr.rel (%p201) target = $region12
    $region11: #{one_out_lstm_forward.1} parent=5 // pred_region
      %s205 = ssub.s32 %s13, 1
      // Predicated region
      $region13: #{one_out_lstm_forward.1} parent=11 // pred_check
        %p206 = pneg %p60
      $region14: #{one_out_lstm_forward.1} parent=11 // pred_check_branch
        %208 = sbr.rel (%p206) target = $region16
      $region15: #{one_out_lstm_forward.1} parent=11 // pred_region
        _
      $region16: #{one_out_lstm_forward.1} parent=11 // pred_fallthru
        _
      // Predicated region
      $region17: #{one_out_lstm_forward.1} parent=11 // pred_check
        %p209 = pneg %p81
      $region18: #{one_out_lstm_forward.1} parent=11 // pred_check_branch
        %211 = sbr.rel (%p209) target = $region20
      $region19: #{one_out_lstm_forward.1} parent=11 // pred_region
        _
      $region20: #{one_out_lstm_forward.1} parent=11 // pred_fallthru
        _
      // Predicated region
      $region21: #{one_out_lstm_forward.1} parent=11 // pred_check
        %p212 = pneg %p102
      $region22: #{one_out_lstm_forward.1} parent=11 // pred_check_branch
        %214 = sbr.rel (%p212) target = $region24
      $region23: #{one_out_lstm_forward.1} parent=11 // pred_region
        _
      $region24: #{one_out_lstm_forward.1} parent=11 // pred_fallthru
        _
      // Predicated region
      $region25: #{one_out_lstm_forward.1} parent=11 // pred_check
        %p215 = pneg %p123
      $region26: #{one_out_lstm_forward.1} parent=11 // pred_check_branch
        %217 = sbr.rel (%p215) target = $region28
      $region27: #{one_out_lstm_forward.1} parent=11 // pred_region
        _
      $region28: #{one_out_lstm_forward.1} parent=11 // pred_fallthru
        _
      // Predicated region
      $region29: #{one_out_lstm_forward.1} parent=11 // pred_check
        %p218 = pneg %p144
      $region30: #{one_out_lstm_forward.1} parent=11 // pred_check_branch
        %220 = sbr.rel (%p218) target = $region32
      $region31: #{one_out_lstm_forward.1} parent=11 // pred_region
        _
      $region32: #{one_out_lstm_forward.1} parent=11 // pred_fallthru
        _
      // Predicated region
      $region33: #{one_out_lstm_forward.1} parent=11 // pred_check
        %p221 = pneg %p165
      $region34: #{one_out_lstm_forward.1} parent=11 // pred_check_branch
        %223 = sbr.rel (%p221) target = $region36
      $region35: #{one_out_lstm_forward.1} parent=11 // pred_region
        _
      $region36: #{one_out_lstm_forward.1} parent=11 // pred_fallthru
        _
    $region12: #{one_out_lstm_forward.1} parent=5 // pred_fallthru
      _
    %p224 = scmp.lt.s32.totalorder %s13, 2
    // Predicated region
    $region37: #{one_out_lstm_forward.1} parent=5 // pred_check
      %p225 = pneg %p224
    $region38: #{one_out_lstm_forward.1} parent=5 // pred_check_branch
      %227 = sbr.rel (%p225) target = $region40
    $region39: #{one_out_lstm_forward.1} parent=5 // pred_region
      // Predicated region
      $region41: #{one_out_lstm_forward.1} parent=39 // pred_check
        %p228 = pneg %p33
      $region42: #{one_out_lstm_forward.1} parent=39 // pred_check_branch
        %230 = sbr.rel (%p228) target = $region44
      $region43: #{one_out_lstm_forward.1} parent=39 // pred_region
        %s231 = smul.u32 8, %s13
        %p232 = scmp.lt.s32.totalorder %s231, 15
        %s233 = scalar_select %p232, %s231, 15
        %s234 = smul.addr %s233, 8
        %s235 = scalar_lea.vmem %s0, %s234
        %s236 = smul.u32 8, %s13
      $region44: #{one_out_lstm_forward.1} parent=39 // pred_fallthru
        _
    $region40: #{one_out_lstm_forward.1} parent=5 // pred_fallthru
      _
    %p237 = scmp.le.s32.totalorder 1, %s13
    %p238 = scmp.lt.s32.totalorder %s13, 3
    %p239 = pnand %p237, %p238
    %p240 = pneg %p239
    // Predicated region
    $region45: #{one_out_lstm_forward.1} parent=5 // pred_check
      _
    $region46: #{one_out_lstm_forward.1} parent=5 // pred_check_branch
      %242 = sbr.rel (%p239) target = $region48
    $region47: #{one_out_lstm_forward.1} parent=5 // pred_region
      %s243 = ssub.s32 %s13, 1
      %s244 = smul.u32 8, %s18
      %p245 = scmp.lt.s32.totalorder %s244, 15
      %s246 = scalar_select %p245, %s244, 15
      %s247 = smul.addr %s246, 8
      %s248 = scalar_lea.vmem %s0, %s247
      %p249 = pneg %p39
      %p250 = pneg %p36
      %p251 = pneg %p60
      %p252 = pneg %p57
      %p253 = pneg %p81
      %p254 = pneg %p78
      %p255 = pneg %p102
      %p256 = pneg %p99
      %p257 = pneg %p123
      %p258 = pneg %p120
      %p259 = pneg %p144
      %p260 = pneg %p141
      %p261 = pneg %p165
      %p262 = pneg %p162
      %p263 = pneg %p191
      %p264 = pneg %p188
      %s265 = smul.u32 8, %s18
      %p266 = scmp.lt.s32.totalorder %s265, 15
      %s267 = scalar_select %p266, %s265, 15
      %s268 = smul.addr %s267, 8
      %s269 = scalar_lea.vmem %s7, %s268
      %s270 = smul.u32 8, %s18
      %p271 = scmp.lt.s32.totalorder %s270, 15
      %s272 = scalar_select %p271, %s270, 15
      %s273 = smul.addr %s272, 8
      %s274 = scalar_lea.vmem %s0, %s273
      %s275 = smul.u32 8, %s18
      %s276 = smul.u32 8, %s18
      %p277 = scmp.lt.s32.totalorder %s276, 15
      %s278 = scalar_select %p277, %s276, 15
      %s279 = smul.addr %s278, 8
      %s280 = scalar_lea.vmem %s7, %s279
      %s281 = smul.u32 8, %s18
      %p282 = scmp.eq.s32.totalorder %s18, 0
      // Predicated region
      $region49: #{one_out_lstm_forward.1} parent=47 // pred_check
        %p283 = pneg %p282
      $region50: #{one_out_lstm_forward.1} parent=47 // pred_check_branch
        %285 = sbr.rel (%p283) target = $region52
      $region51: #{one_out_lstm_forward.1} parent=47 // pred_region
        %vm286 = vcmask 261120
        %287 = vst.msk [vmem:[#allocation2] sm:$0xff] %vm286, 0.0
        %288 = vst.msk [vmem:[#allocation3] sm:$0xff] %vm286, 0.0
        %289 = vst.msk [vmem:[#allocation4] sm:$0xff] %vm286, 0.0
        %290 = vst.msk [vmem:[#allocation5] sm:$0xff] %vm286, 0.0
      $region52: #{one_out_lstm_forward.1} parent=47 // pred_fallthru
        _
      %v291 = vld [vmem:[%s1] sm:$0xff]
      %v292 = vld [vmem:[%s1 + $0x8] sm:$0xff]
      %v293 = vld [vmem:[%s1 + $0x10] sm:$0xff]
      %v294 = vld [vmem:[%s1 + $0x18] sm:$0xff]
      %v295 = vld [vmem:[%s1 + $0x20] sm:$0xff]
      %v296 = vld [vmem:[%s1 + $0x28] sm:$0xff]
      %v297 = vld [vmem:[%s1 + $0x30] sm:$0xff]
      %v298 = vld [vmem:[%s1 + $0x38] sm:$0xff]
      %v299 = vld [vmem:[%s1 + $0x40] sm:$0xff]
      %v300 = vld [vmem:[%s1 + $0x48] sm:$0xff]
      %v301 = vld [vmem:[%s1 + $0x50] sm:$0xff]
      %v302 = vld [vmem:[%s1 + $0x58] sm:$0xff]
      %v303 = vld [vmem:[%s1 + $0x60] sm:$0xff]
      %v304 = vld [vmem:[%s1 + $0x68] sm:$0xff]
      %v305 = vld [vmem:[%s1 + $0x70] sm:$0xff]
      %v306 = vld [vmem:[%s1 + $0x78] sm:$0xff]
      %v307 = vld [vmem:[%s1 + $0x80] sm:$0xff]
      %v308 = vld [vmem:[%s1 + $0x88] sm:$0xff]
      %v309 = vld [vmem:[%s1 + $0x90] sm:$0xff]
      %v310 = vld [vmem:[%s1 + $0x98] sm:$0xff]
      %v311 = vld [vmem:[%s2] sm:$0x1]
      %v312 = vld [vmem:[%s3] sm:$0xff]
      %v313 = vld [vmem:[%s3 + $0x8] sm:$0xff]
      %v314 = vld [vmem:[%s3 + $0x10] sm:$0xff]
      %v315 = vld [vmem:[%s3 + $0x18] sm:$0xff]
      %v316 = vld [vmem:[%s3 + $0x20] sm:$0xff]
      %v317 = vld [vmem:[%s3 + $0x28] sm:$0xff]
      %v318 = vld [vmem:[%s3 + $0x30] sm:$0xff]
      %v319 = vld [vmem:[%s3 + $0x38] sm:$0xff]
      %v320 = vld [vmem:[%s4] sm:$0x1]
      %v321 = vld [vmem:[%s5] sm:$0xff]
      %v322 = vld [vmem:[%s5 + $0x8] sm:$0xff]
      %v323 = vld [vmem:[%s5 + $0x10] sm:$0xff]
      %v324 = vld [vmem:[%s5 + $0x18] sm:$0xff]
      %v325 = vld [vmem:[%s6] sm:$0x1]
      %v326 = vld [vmem:[#allocation2] sm:$0xff]
      %v327 = vld [vmem:[#allocation3] sm:$0xff]
      %v328 = vld [vmem:[#allocation4] sm:$0xff]
      %v329 = vld [vmem:[#allocation5] sm:$0xff]
      %v330 = vld [vmem:[%s274] sm:$0xff]
      %331 = vadd.xlane.f32.xlu0 %v330
      %v332 = vpop.xlane.xlu0 %331
      %v333 = vmul.f32 %v332, 0.0625
      %v334 = vmul.f32 %v330, %v330
      %335 = vadd.xlane.f32.xlu0 %v334
      %v336 = vpop.xlane.xlu0 %335
      %v337 = vmul.f32 %v336, 0.0625
      %v338 = vmul.f32 %v333, %v333
      %v339 = vsub.f32 %v337, %v338
      %v340 = vsub.f32 %v330, %v333
      %v341 = vadd.f32 %v339, 0.001
      %v342 = vrsqrt.pop %v341
      %v343 = vmul.f32 %v340, %v342
      %v345 = vlaneseq
      %v346 = vshrl.u32 %v345, 7
      %v347 = vsub.s32 0, %v346
      %v348 = vrot.slane %v311, %v347
      %vm350 = vcmask 261120
      %v352 = vsel %vm350, %v326, 0
      %354 = vmatprep.subr.mxu0 0.0
      %355 = vmatpush1.msra.mxu0 %v291
      %356 = vmatprep.subr.mxu0 0.0
      %357 = vmatpush1.msra.mxu0 %v292
      %358 = vmatprep.subr.mxu0 0.0
      %359 = vmatpush1.msra.mxu0 %v293
      %360 = vmatprep.subr.mxu0 0.0
      %361 = vmatpush1.msra.mxu0 %v294
      %362 = vmatprep.subr.mxu0 0.0
      %363 = vmatpush1.msra.mxu0 %v295
      %364 = vmatprep.subr.mxu0 0.0
      %365 = vmatpush1.msra.mxu0 %v296
      %366 = vmatprep.subr.mxu0 0.0
      %367 = vmatpush1.msra.mxu0 %v297
      %368 = vmatprep.subr.mxu0 0.0
      %369 = vmatpush1.msra.mxu0 %v298
      %370 = vmatprep.subr.mxu0 0.0
      %371 = vmatpush1.msra.mxu0 %v299
      %372 = vmatprep.subr.mxu0 0.0
      %373 = vmatpush1.msra.mxu0 %v300
      %374 = vmatprep.subr.mxu0 0.0
      %375 = vmatpush1.msra.mxu0 %v301
      %376 = vmatprep.subr.mxu0 0.0
      %377 = vmatpush1.msra.mxu0 %v302
      %378 = vmatprep.subr.mxu0 0.0
      %379 = vmatpush1.msra.mxu0 %v303
      %380 = vmatprep.subr.mxu0 0.0
      %381 = vmatpush1.msra.mxu0 %v304
      %382 = vmatprep.subr.mxu0 0.0
      %383 = vmatpush1.msra.mxu0 %v305
      %384 = vmatprep.subr.mxu0 0.0
      %385 = vmatpush1.msra.mxu0 %v306
      %386 = vmatprep.subr.mxu0 0.0
      %387 = vmatpush1.msra.mxu0 %v307
      %388 = vmatprep.subr.mxu0 0.0
      %389 = vmatpush1.msra.mxu0 %v308
      %390 = vmatprep.subr.mxu0 0.0
      %391 = vmatpush1.msra.mxu0 %v309
      %392 = vmatprep.subr.mxu0 0.0
      %393 = vmatpush1.msra.mxu0 %v310
      %394 = vmatprep.subr.mxu0 0.0
      %395 = vmatpush1.msra.mxu0 0.0
      %396 = vmatprep.subr.mxu0 0.0
      %397 = vmatpush1.msra.mxu0 0.0
      %398 = vmatprep.subr.mxu0 0.0
      %399 = vmatpush1.msra.mxu0 0.0
      %400 = vmatprep.subr.mxu0 0.0
      %401 = vmatpush1.msra.mxu0 0.0
      %402 = vmatprep.subr.mxu0 0.0
      %403 = vmatpush1.msra.mxu0 0.0
      %404 = vmatprep.subr.mxu0 0.0
      %405 = vmatpush1.msra.mxu0 0.0
      %406 = vmatprep.subr.mxu0 0.0
      %407 = vmatpush1.msra.mxu0 0.0
      %408 = vmatprep.subr.mxu0 0.0
      %409 = vmatpush1.msra.mxu0 0.0
      %410 = vmatprep.subr.mxu0 0.0
      %411 = vmatpush1.msra.mxu0 0.0
      %412 = vmatprep.subr.mxu0 0.0
      %413 = vmatpush1.msra.mxu0 0.0
      %414 = vmatprep.subr.mxu0 0.0
      %415 = vmatpush1.msra.mxu0 0.0
      %416 = vmatprep.subr.mxu0 0.0
      %417 = vmatpush1.msra.mxu0 0.0
      %418 = vmatprep.mubr.f32.mxu0 %v352
      %419 = vmatmul.mubr.f32.gmra.mrb[0].mxu0 %v343
      %v420 = vpop.f32.mrb[0].mxu0
      %v421 = vadd.f32 %v348, %v420
      %v422 = vpop.f32.mrb[0].mxu0
      %423 = vdwg.mxu0
      %v424 = vxor.u32 %v421, 2147483648
      %v425 = vmul.f32 %v424, 1.442695
      %v426 = vpow.pop %v425
      %v427 = vadd.f32 %v426, 1.0
      %v428 = vrcp.pop %v427
      %v429 = vmul.f32 1.0, %v428
      %v430 = vtanh.pop %v421
      %432 = vrot.lane.b32.xlu0 %v327, 32
      %v433 = vpop.permute.xlu0 %432
      %v435 = vmul.f32 %v429, %v433
      %437 = vrot.lane.b32.xlu0 %v430, 64
      %v438 = vpop.permute.xlu0 %437
      %v440 = vmul.f32 %v429, %v438
      %442 = vrot.lane.b32.xlu0 %v440, 32
      %v443 = vpop.permute.xlu0 %442
      %v445 = vadd.f32 %v435, %v443
      %v446 = vtanh.pop %v445
      %448 = vrot.lane.b32.xlu0 %v446, 64
      %v449 = vpop.permute.xlu0 %448
      %v451 = vmul.f32 %v429, %v449
      %v453 = vsel %vm350, %v328, 0
      %455 = vmatprep.subr.mxu0 0.0
      %456 = vmatpush1.msra.mxu0 %v316
      %457 = vmatprep.subr.mxu0 0.0
      %458 = vmatpush1.msra.mxu0 %v317
      %459 = vmatprep.subr.mxu0 0.0
      %460 = vmatpush1.msra.mxu0 %v318
      %461 = vmatprep.subr.mxu0 0.0
      %462 = vmatpush1.msra.mxu0 %v319
      %463 = vmatprep.subr.mxu0 0.0
      %464 = vmatpush1.msra.mxu0 0.0
      %465 = vmatprep.subr.mxu0 0.0
      %466 = vmatpush1.msra.mxu0 0.0
      %467 = vmatprep.subr.mxu0 0.0
      %468 = vmatpush1.msra.mxu0 0.0
      %469 = vmatprep.subr.mxu0 0.0
      %470 = vmatpush1.msra.mxu0 0.0
      %471 = vmatprep.subr.mxu0 0.0
      %472 = vmatpush1.msra.mxu0 0.0
      %473 = vmatprep.subr.mxu0 0.0
      %474 = vmatpush1.msra.mxu0 0.0
      %475 = vmatprep.subr.mxu0 0.0
      %476 = vmatpush1.msra.mxu0 0.0
      %477 = vmatprep.subr.mxu0 0.0
      %478 = vmatpush1.msra.mxu0 0.0
      %479 = vmatprep.subr.mxu0 0.0
      %480 = vmatpush1.msra.mxu0 0.0
      %481 = vmatprep.subr.mxu0 0.0
      %482 = vmatpush1.msra.mxu0 0.0
      %483 = vmatprep.subr.mxu0 0.0
      %484 = vmatpush1.msra.mxu0 0.0
      %485 = vmatprep.subr.mxu0 0.0
      %486 = vmatpush1.msra.mxu0 0.0
      %487 = vmatprep.subr.mxu0 0.0
      %488 = vmatpush1.msra.mxu0 0.0
      %489 = vmatprep.subr.mxu0 0.0
      %490 = vmatpush1.msra.mxu0 0.0
      %491 = vmatprep.subr.mxu0 0.0
      %492 = vmatpush1.msra.mxu0 0.0
      %493 = vmatprep.subr.mxu0 0.0
      %494 = vmatpush1.msra.mxu0 0.0
      %495 = vmatprep.subr.mxu0 0.0
      %496 = vmatpush1.msra.mxu0 0.0
      %497 = vmatprep.subr.mxu0 0.0
      %498 = vmatpush1.msra.mxu0 0.0
      %499 = vmatprep.subr.mxu0 0.0
      %500 = vmatpush1.msra.mxu0 0.0
      %501 = vmatprep.subr.mxu0 0.0
      %502 = vmatpush1.msra.mxu0 0.0
      %503 = vmatprep.subr.mxu0 0.0
      %504 = vmatpush1.msra.mxu0 0.0
      %505 = vmatprep.subr.mxu0 0.0
      %506 = vmatpush1.msra.mxu0 0.0
      %507 = vmatprep.subr.mxu0 0.0
      %508 = vmatpush1.msra.mxu0 0.0
      %509 = vmatprep.subr.mxu0 0.0
      %510 = vmatpush1.msra.mxu0 0.0
      %511 = vmatprep.subr.mxu0 0.0
      %512 = vmatpush1.msra.mxu0 0.0
      %513 = vmatprep.subr.mxu0 0.0
      %514 = vmatpush1.msra.mxu0 0.0
      %515 = vmatprep.subr.mxu0 0.0
      %516 = vmatpush1.msra.mxu0 0.0
      %517 = vmatprep.subr.mxu0 0.0
      %518 = vmatpush1.msra.mxu0 0.0
      %519 = vmatprep.mubr.f32.mxu0 0.0
      %520 = vmatmul.mubr.f32.gmra.mrb[0].mxu0 %v453
      %v521 = vpop.f32.mrb[0].mxu0
      %v522 = vadd.f32 0.0, %v521
      %v523 = vpop.f32.mrb[0].mxu0
      %524 = vdwg.mxu0
      %526 = vrot.lane.b32.xlu0 %v451, 32
      %v527 = vpop.permute.xlu0 %526
      %v528 = vsel %vm350, %v527, 0
      %530 = vmatprep.subr.mxu0 0.0
      %531 = vmatpush1.msra.mxu0 %v312
      %532 = vmatprep.subr.mxu0 0.0
      %533 = vmatpush1.msra.mxu0 %v313
      %534 = vmatprep.subr.mxu0 0.0
      %535 = vmatpush1.msra.mxu0 %v314
      %536 = vmatprep.subr.mxu0 0.0
      %537 = vmatpush1.msra.mxu0 %v315
      %538 = vmatprep.subr.mxu0 0.0
      %539 = vmatpush1.msra.mxu0 0.0
      %540 = vmatprep.subr.mxu0 0.0
      %541 = vmatpush1.msra.mxu0 0.0
      %542 = vmatprep.subr.mxu0 0.0
      %543 = vmatpush1.msra.mxu0 0.0
      %544 = vmatprep.subr.mxu0 0.0
      %545 = vmatpush1.msra.mxu0 0.0
      %546 = vmatprep.subr.mxu0 0.0
      %547 = vmatpush1.msra.mxu0 0.0
      %548 = vmatprep.subr.mxu0 0.0
      %549 = vmatpush1.msra.mxu0 0.0
      %550 = vmatprep.subr.mxu0 0.0
      %551 = vmatpush1.msra.mxu0 0.0
      %552 = vmatprep.subr.mxu0 0.0
      %553 = vmatpush1.msra.mxu0 0.0
      %554 = vmatprep.subr.mxu0 0.0
      %555 = vmatpush1.msra.mxu0 0.0
      %556 = vmatprep.subr.mxu0 0.0
      %557 = vmatpush1.msra.mxu0 0.0
      %558 = vmatprep.subr.mxu0 0.0
      %559 = vmatpush1.msra.mxu0 0.0
      %560 = vmatprep.subr.mxu0 0.0
      %561 = vmatpush1.msra.mxu0 0.0
      %562 = vmatprep.subr.mxu0 0.0
      %563 = vmatpush1.msra.mxu0 0.0
      %564 = vmatprep.subr.mxu0 0.0
      %565 = vmatpush1.msra.mxu0 0.0
      %566 = vmatprep.subr.mxu0 0.0
      %567 = vmatpush1.msra.mxu0 0.0
      %568 = vmatprep.subr.mxu0 0.0
      %569 = vmatpush1.msra.mxu0 0.0
      %570 = vmatprep.subr.mxu0 0.0
      %571 = vmatpush1.msra.mxu0 0.0
      %572 = vmatprep.subr.mxu0 0.0
      %573 = vmatpush1.msra.mxu0 0.0
      %574 = vmatprep.subr.mxu0 0.0
      %575 = vmatpush1.msra.mxu0 0.0
      %576 = vmatprep.subr.mxu0 0.0
      %577 = vmatpush1.msra.mxu0 0.0
      %578 = vmatprep.subr.mxu0 0.0
      %579 = vmatpush1.msra.mxu0 0.0
      %580 = vmatprep.subr.mxu0 0.0
      %581 = vmatpush1.msra.mxu0 0.0
      %582 = vmatprep.subr.mxu0 0.0
      %583 = vmatpush1.msra.mxu0 0.0
      %584 = vmatprep.subr.mxu0 0.0
      %585 = vmatpush1.msra.mxu0 0.0
      %586 = vmatprep.subr.mxu0 0.0
      %587 = vmatpush1.msra.mxu0 0.0
      %588 = vmatprep.subr.mxu0 0.0
      %589 = vmatpush1.msra.mxu0 0.0
      %590 = vmatprep.subr.mxu0 0.0
      %591 = vmatpush1.msra.mxu0 0.0
      %592 = vmatprep.subr.mxu0 0.0
      %593 = vmatpush1.msra.mxu0 0.0
      %594 = vmatprep.mubr.f32.mxu0 0.0
      %595 = vmatmul.mubr.f32.gmra.mrb[0].mxu0 %v528
      %v596 = vpop.f32.mrb[0].mxu0
      %v597 = vadd.f32 %v522, %v596
      %v598 = vpop.f32.mrb[0].mxu0
      %599 = vdwg.mxu0
      %v601 = vlaneseq
      %v602 = vshrl.u32 %v601, 7
      %v603 = vsub.s32 0, %v602
      %v604 = vrot.slane %v320, %v603
      %v606 = vadd.f32 %v597, %v604
      %v607 = vxor.u32 %v606, 2147483648
      %v608 = vmul.f32 %v607, 1.442695
      %v609 = vpow.pop %v608
      %v610 = vadd.f32 %v609, 1.0
      %v611 = vrcp.pop %v610
      %v612 = vmul.f32 1.0, %v611
      %v613 = vtanh.pop %v606
      %615 = vrot.lane.b32.xlu0 %v329, 32
      %v616 = vpop.permute.xlu0 %615
      %v618 = vmul.f32 %v612, %v616
      %620 = vrot.lane.b32.xlu0 %v613, 64
      %v621 = vpop.permute.xlu0 %620
      %v623 = vmul.f32 %v612, %v621
      %625 = vrot.lane.b32.xlu0 %v623, 32
      %v626 = vpop.permute.xlu0 %625
      %v628 = vadd.f32 %v618, %v626
      %v629 = vtanh.pop %v628
      %631 = vrot.lane.b32.xlu0 %v629, 64
      %v632 = vpop.permute.xlu0 %631
      %v634 = vmul.f32 %v612, %v632
      %636 = vrot.lane.b32.xlu0 %v634, 32
      %v637 = vpop.permute.xlu0 %636
      %v639 = vsel %vm350, %v637, 0.0
      %640 = vadd.xlane.f32.xlu0 %v639
      %v641 = vpop.xlane.xlu0 %640
      %v642 = vmul.f32 %v641, 0.03125
      %v643 = vmul.f32 %v634, %v634
      %645 = vrot.lane.b32.xlu0 %v643, 32
      %v646 = vpop.permute.xlu0 %645
      %v648 = vsel %vm350, %v646, 0.0
      %649 = vadd.xlane.f32.xlu0 %v648
      %v650 = vpop.xlane.xlu0 %649
      %v651 = vmul.f32 %v650, 0.03125
      %v652 = vmul.f32 %v642, %v642
      %v653 = vsub.f32 %v651, %v652
      %v654 = vsub.f32 %v634, %v642
      %v655 = vadd.f32 %v653, 0.001
      %v656 = vrsqrt.pop %v655
      %v657 = vmul.f32 %v654, %v656
      %v659 = vlaneseq
      %v660 = vshrl.u32 %v659, 7
      %v661 = vsub.s32 0, %v660
      %v662 = vrot.slane %v325, %v661
      %665 = vrot.lane.b32.xlu0 %v657, 32
      %v666 = vpop.permute.xlu0 %665
      %v667 = vsel %vm350, %v666, 0
      %669 = vmatprep.subr.mxu0 0.0
      %670 = vmatpush1.msra.mxu0 %v321
      %671 = vmatprep.subr.mxu0 0.0
      %672 = vmatpush1.msra.mxu0 %v322
      %673 = vmatprep.subr.mxu0 0.0
      %674 = vmatpush1.msra.mxu0 %v323
      %675 = vmatprep.subr.mxu0 0.0
      %676 = vmatpush1.msra.mxu0 %v324
      %677 = vmatprep.subr.mxu0 0.0
      %678 = vmatpush1.msra.mxu0 0.0
      %679 = vmatprep.subr.mxu0 0.0
      %680 = vmatpush1.msra.mxu0 0.0
      %681 = vmatprep.subr.mxu0 0.0
      %682 = vmatpush1.msra.mxu0 0.0
      %683 = vmatprep.subr.mxu0 0.0
      %684 = vmatpush1.msra.mxu0 0.0
      %685 = vmatprep.subr.mxu0 0.0
      %686 = vmatpush1.msra.mxu0 0.0
      %687 = vmatprep.subr.mxu0 0.0
      %688 = vmatpush1.msra.mxu0 0.0
      %689 = vmatprep.subr.mxu0 0.0
      %690 = vmatpush1.msra.mxu0 0.0
      %691 = vmatprep.subr.mxu0 0.0
      %692 = vmatpush1.msra.mxu0 0.0
      %693 = vmatprep.subr.mxu0 0.0
      %694 = vmatpush1.msra.mxu0 0.0
      %695 = vmatprep.subr.mxu0 0.0
      %696 = vmatpush1.msra.mxu0 0.0
      %697 = vmatprep.subr.mxu0 0.0
      %698 = vmatpush1.msra.mxu0 0.0
      %699 = vmatprep.subr.mxu0 0.0
      %700 = vmatpush1.msra.mxu0 0.0
      %701 = vmatprep.subr.mxu0 0.0
      %702 = vmatpush1.msra.mxu0 0.0
      %703 = vmatprep.subr.mxu0 0.0
      %704 = vmatpush1.msra.mxu0 0.0
      %705 = vmatprep.subr.mxu0 0.0
      %706 = vmatpush1.msra.mxu0 0.0
      %707 = vmatprep.subr.mxu0 0.0
      %708 = vmatpush1.msra.mxu0 0.0
      %709 = vmatprep.subr.mxu0 0.0
      %710 = vmatpush1.msra.mxu0 0.0
      %711 = vmatprep.subr.mxu0 0.0
      %712 = vmatpush1.msra.mxu0 0.0
      %713 = vmatprep.subr.mxu0 0.0
      %714 = vmatpush1.msra.mxu0 0.0
      %715 = vmatprep.subr.mxu0 0.0
      %716 = vmatpush1.msra.mxu0 0.0
      %717 = vmatprep.subr.mxu0 0.0
      %718 = vmatpush1.msra.mxu0 0.0
      %719 = vmatprep.subr.mxu0 0.0
      %720 = vmatpush1.msra.mxu0 0.0
      %721 = vmatprep.subr.mxu0 0.0
      %722 = vmatpush1.msra.mxu0 0.0
      %723 = vmatprep.subr.mxu0 0.0
      %724 = vmatpush1.msra.mxu0 0.0
      %725 = vmatprep.subr.mxu0 0.0
      %726 = vmatpush1.msra.mxu0 0.0
      %727 = vmatprep.subr.mxu0 0.0
      %728 = vmatpush1.msra.mxu0 0.0
      %729 = vmatprep.subr.mxu0 0.0
      %730 = vmatpush1.msra.mxu0 0.0
      %731 = vmatprep.subr.mxu0 0.0
      %732 = vmatpush1.msra.mxu0 0.0
      %733 = vmatprep.mubr.f32.mxu0 0.0
      %734 = vmatmul.mubr.f32.gmra.mrb[0].mxu0 %v667
      %v735 = vpop.f32.mrb[0].mxu0
      %v736 = vadd.f32 %v662, %v735
      %v737 = vpop.f32.mrb[0].mxu0
      %738 = vdwg.mxu0
      %739 = vst [vmem:[%s280] sm:$0xff] %v736
      %s740 = scalar_lea.vmem %s274, 8
      %v741 = vld [vmem:[%s740] sm:$0xff]
      %742 = vadd.xlane.f32.xlu0 %v741
      %v743 = vpop.xlane.xlu0 %742
      %v744 = vmul.f32 %v743, 0.0625
      %v745 = vmul.f32 %v741, %v741
      %746 = vadd.xlane.f32.xlu0 %v745
      %v747 = vpop.xlane.xlu0 %746
      %v748 = vmul.f32 %v747, 0.0625
      %v749 = vmul.f32 %v744, %v744
      %v750 = vsub.f32 %v748, %v749
      %v751 = vsub.f32 %v741, %v744
      %v752 = vadd.f32 %v750, 0.001
      %v753 = vrsqrt.pop %v752
      %v754 = vmul.f32 %v751, %v753
      %755 = vmatprep.subr.mxu0 0.0
      %756 = vmatpush1.msra.mxu0 %v291
      %757 = vmatprep.subr.mxu0 0.0
      %758 = vmatpush1.msra.mxu0 %v292
      %759 = vmatprep.subr.mxu0 0.0
      %760 = vmatpush1.msra.mxu0 %v293
      %761 = vmatprep.subr.mxu0 0.0
      %762 = vmatpush1.msra.mxu0 %v294
      %763 = vmatprep.subr.mxu0 0.0
      %764 = vmatpush1.msra.mxu0 %v295
      %765 = vmatprep.subr.mxu0 0.0
      %766 = vmatpush1.msra.mxu0 %v296
      %767 = vmatprep.subr.mxu0 0.0
      %768 = vmatpush1.msra.mxu0 %v297
      %769 = vmatprep.subr.mxu0 0.0
      %770 = vmatpush1.msra.mxu0 %v298
      %771 = vmatprep.subr.mxu0 0.0
      %772 = vmatpush1.msra.mxu0 %v299
      %773 = vmatprep.subr.mxu0 0.0
      %774 = vmatpush1.msra.mxu0 %v300
      %775 = vmatprep.subr.mxu0 0.0
      %776 = vmatpush1.msra.mxu0 %v301
      %777 = vmatprep.subr.mxu0 0.0
      %778 = vmatpush1.msra.mxu0 %v302
      %779 = vmatprep.subr.mxu0 0.0
      %780 = vmatpush1.msra.mxu0 %v303
      %781 = vmatprep.subr.mxu0 0.0
      %782 = vmatpush1.msra.mxu0 %v304
      %783 = vmatprep.subr.mxu0 0.0
      %784 = vmatpush1.msra.mxu0 %v305
      %785 = vmatprep.subr.mxu0 0.0
      %786 = vmatpush1.msra.mxu0 %v306
      %787 = vmatprep.subr.mxu0 0.0
      %788 = vmatpush1.msra.mxu0 %v307
      %789 = vmatprep.subr.mxu0 0.0
      %790 = vmatpush1.msra.mxu0 %v308
      %791 = vmatprep.subr.mxu0 0.0
      %792 = vmatpush1.msra.mxu0 %v309
      %793 = vmatprep.subr.mxu0 0.0
      %794 = vmatpush1.msra.mxu0 %v310
      %795 = vmatprep.subr.mxu0 0.0
      %796 = vmatpush1.msra.mxu0 0.0
      %797 = vmatprep.subr.mxu0 0.0
      %798 = vmatpush1.msra.mxu0 0.0
      %799 = vmatprep.subr.mxu0 0.0
      %800 = vmatpush1.msra.mxu0 0.0
      %801 = vmatprep.subr.mxu0 0.0
      %802 = vmatpush1.msra.mxu0 0.0
      %803 = vmatprep.subr.mxu0 0.0
      %804 = vmatpush1.msra.mxu0 0.0
      %805 = vmatprep.subr.mxu0 0.0
      %806 = vmatpush1.msra.mxu0 0.0
      %807 = vmatprep.subr.mxu0 0.0
      %808 = vmatpush1.msra.mxu0 0.0
      %809 = vmatprep.subr.mxu0 0.0
      %810 = vmatpush1.msra.mxu0 0.0
      %811 = vmatprep.subr.mxu0 0.0
      %812 = vmatpush1.msra.mxu0 0.0
      %813 = vmatprep.subr.mxu0 0.0
      %814 = vmatpush1.msra.mxu0 0.0
      %815 = vmatprep.subr.mxu0 0.0
      %816 = vmatpush1.msra.mxu0 0.0
      %817 = vmatprep.subr.mxu0 0.0
      %818 = vmatpush1.msra.mxu0 0.0
      %819 = vmatprep.mubr.f32.mxu0 %v528
      %820 = vmatmul.mubr.f32.gmra.mrb[0].mxu0 %v754
      %v821 = vpop.f32.mrb[0].mxu0
      %v822 = vadd.f32 %v348, %v821
      %v823 = vpop.f32.mrb[0].mxu0
      %824 = vdwg.mxu0
      %v825 = vxor.u32 %v822, 2147483648
      %v826 = vmul.f32 %v825, 1.442695
      %v827 = vpow.pop %v826
      %v828 = vadd.f32 %v827, 1.0
      %v829 = vrcp.pop %v828
      %v830 = vmul.f32 1.0, %v829
      %v831 = vtanh.pop %v822
      %v832 = vmul.f32 %v830, %v445
      %834 = vrot.lane.b32.xlu0 %v831, 64
      %v835 = vpop.permute.xlu0 %834
      %v837 = vmul.f32 %v830, %v835
      %839 = vrot.lane.b32.xlu0 %v837, 32
      %v840 = vpop.permute.xlu0 %839
      %v842 = vadd.f32 %v832, %v840
      %v843 = vtanh.pop %v842
      %845 = vrot.lane.b32.xlu0 %v843, 64
      %v846 = vpop.permute.xlu0 %845
      %v848 = vmul.f32 %v830, %v846
      %v849 = vsel %vm350, %v637, 0
      %851 = vmatprep.subr.mxu0 0.0
      %852 = vmatpush1.msra.mxu0 %v316
      %853 = vmatprep.subr.mxu0 0.0
      %854 = vmatpush1.msra.mxu0 %v317
      %855 = vmatprep.subr.mxu0 0.0
      %856 = vmatpush1.msra.mxu0 %v318
      %857 = vmatprep.subr.mxu0 0.0
      %858 = vmatpush1.msra.mxu0 %v319
      %859 = vmatprep.subr.mxu0 0.0
      %860 = vmatpush1.msra.mxu0 0.0
      %861 = vmatprep.subr.mxu0 0.0
      %862 = vmatpush1.msra.mxu0 0.0
      %863 = vmatprep.subr.mxu0 0.0
      %864 = vmatpush1.msra.mxu0 0.0
      %865 = vmatprep.subr.mxu0 0.0
      %866 = vmatpush1.msra.mxu0 0.0
      %867 = vmatprep.subr.mxu0 0.0
      %868 = vmatpush1.msra.mxu0 0.0
      %869 = vmatprep.subr.mxu0 0.0
      %870 = vmatpush1.msra.mxu0 0.0
      %871 = vmatprep.subr.mxu0 0.0
      %872 = vmatpush1.msra.mxu0 0.0
      %873 = vmatprep.subr.mxu0 0.0
      %874 = vmatpush1.msra.mxu0 0.0
      %875 = vmatprep.subr.mxu0 0.0
      %876 = vmatpush1.msra.mxu0 0.0
      %877 = vmatprep.subr.mxu0 0.0
      %878 = vmatpush1.msra.mxu0 0.0
      %879 = vmatprep.subr.mxu0 0.0
      %880 = vmatpush1.msra.mxu0 0.0
      %881 = vmatprep.subr.mxu0 0.0
      %882 = vmatpush1.msra.mxu0 0.0
      %883 = vmatprep.subr.mxu0 0.0
      %884 = vmatpush1.msra.mxu0 0.0
      %885 = vmatprep.subr.mxu0 0.0
      %886 = vmatpush1.msra.mxu0 0.0
      %887 = vmatprep.subr.mxu0 0.0
      %888 = vmatpush1.msra.mxu0 0.0
      %889 = vmatprep.subr.mxu0 0.0
      %890 = vmatpush1.msra.mxu0 0.0
      %891 = vmatprep.subr.mxu0 0.0
      %892 = vmatpush1.msra.mxu0 0.0
      %893 = vmatprep.subr.mxu0 0.0
      %894 = vmatpush1.msra.mxu0 0.0
      %895 = vmatprep.subr.mxu0 0.0
      %896 = vmatpush1.msra.mxu0 0.0
      %897 = vmatprep.subr.mxu0 0.0
      %898 = vmatpush1.msra.mxu0 0.0
      %899 = vmatprep.subr.mxu0 0.0
      %900 = vmatpush1.msra.mxu0 0.0
      %901 = vmatprep.subr.mxu0 0.0
      %902 = vmatpush1.msra.mxu0 0.0
      %903 = vmatprep.subr.mxu0 0.0
      %904 = vmatpush1.msra.mxu0 0.0
      %905 = vmatprep.subr.mxu0 0.0
      %906 = vmatpush1.msra.mxu0 0.0
      %907 = vmatprep.subr.mxu0 0.0
      %908 = vmatpush1.msra.mxu0 0.0
      %909 = vmatprep.subr.mxu0 0.0
      %910 = vmatpush1.msra.mxu0 0.0
      %911 = vmatprep.subr.mxu0 0.0
      %912 = vmatpush1.msra.mxu0 0.0
      %913 = vmatprep.subr.mxu0 0.0
      %914 = vmatpush1.msra.mxu0 0.0
      %915 = vmatprep.mubr.f32.mxu0 0.0
      %916 = vmatmul.mubr.f32.gmra.mrb[0].mxu0 %v849
      %v917 = vpop.f32.mrb[0].mxu0
      %v918 = vadd.f32 0.0, %v917
      %v919 = vpop.f32.mrb[0].mxu0
      %920 = vdwg.mxu0
      %922 = vrot.lane.b32.xlu0 %v848, 32
      %v923 = vpop.permute.xlu0 %922
      %v924 = vsel %vm350, %v923, 0
      %926 = vmatprep.subr.mxu0 0.0
      %927 = vmatpush1.msra.mxu0 %v312
      %928 = vmatprep.subr.mxu0 0.0
      %929 = vmatpush1.msra.mxu0 %v313
      %930 = vmatprep.subr.mxu0 0.0
      %931 = vmatpush1.msra.mxu0 %v314
      %932 = vmatprep.subr.mxu0 0.0
      %933 = vmatpush1.msra.mxu0 %v315
      %934 = vmatprep.subr.mxu0 0.0
      %935 = vmatpush1.msra.mxu0 0.0
      %936 = vmatprep.subr.mxu0 0.0
      %937 = vmatpush1.msra.mxu0 0.0
      %938 = vmatprep.subr.mxu0 0.0
      %939 = vmatpush1.msra.mxu0 0.0
      %940 = vmatprep.subr.mxu0 0.0
      %941 = vmatpush1.msra.mxu0 0.0
      %942 = vmatprep.subr.mxu0 0.0
      %943 = vmatpush1.msra.mxu0 0.0
      %944 = vmatprep.subr.mxu0 0.0
      %945 = vmatpush1.msra.mxu0 0.0
      %946 = vmatprep.subr.mxu0 0.0
      %947 = vmatpush1.msra.mxu0 0.0
      %948 = vmatprep.subr.mxu0 0.0
      %949 = vmatpush1.msra.mxu0 0.0
      %950 = vmatprep.subr.mxu0 0.0
      %951 = vmatpush1.msra.mxu0 0.0
      %952 = vmatprep.subr.mxu0 0.0
      %953 = vmatpush1.msra.mxu0 0.0
      %954 = vmatprep.subr.mxu0 0.0
      %955 = vmatpush1.msra.mxu0 0.0
      %956 = vmatprep.subr.mxu0 0.0
      %957 = vmatpush1.msra.mxu0 0.0
      %958 = vmatprep.subr.mxu0 0.0
      %959 = vmatpush1.msra.mxu0 0.0
      %960 = vmatprep.subr.mxu0 0.0
      %961 = vmatpush1.msra.mxu0 0.0
      %962 = vmatprep.subr.mxu0 0.0
      %963 = vmatpush1.msra.mxu0 0.0
      %964 = vmatprep.subr.mxu0 0.0
      %965 = vmatpush1.msra.mxu0 0.0
      %966 = vmatprep.subr.mxu0 0.0
      %967 = vmatpush1.msra.mxu0 0.0
      %968 = vmatprep.subr.mxu0 0.0
      %969 = vmatpush1.msra.mxu0 0.0
      %970 = vmatprep.subr.mxu0 0.0
      %971 = vmatpush1.msra.mxu0 0.0
      %972 = vmatprep.subr.mxu0 0.0
      %973 = vmatpush1.msra.mxu0 0.0
      %974 = vmatprep.subr.mxu0 0.0
      %975 = vmatpush1.msra.mxu0 0.0
      %976 = vmatprep.subr.mxu0 0.0
      %977 = vmatpush1.msra.mxu0 0.0
      %978 = vmatprep.subr.mxu0 0.0
      %979 = vmatpush1.msra.mxu0 0.0
      %980 = vmatprep.subr.mxu0 0.0
      %981 = vmatpush1.msra.mxu0 0.0
      %982 = vmatprep.subr.mxu0 0.0
      %983 = vmatpush1.msra.mxu0 0.0
      %984 = vmatprep.subr.mxu0 0.0
      %985 = vmatpush1.msra.mxu0 0.0
      %986 = vmatprep.subr.mxu0 0.0
      %987 = vmatpush1.msra.mxu0 0.0
      %988 = vmatprep.subr.mxu0 0.0
      %989 = vmatpush1.msra.mxu0 0.0
      %990 = vmatprep.mubr.f32.mxu0 0.0
      %991 = vmatmul.mubr.f32.gmra.mrb[0].mxu0 %v924
      %v992 = vpop.f32.mrb[0].mxu0
      %v993 = vadd.f32 %v918, %v992
      %v994 = vpop.f32.mrb[0].mxu0
      %995 = vdwg.mxu0
      %v996 = vadd.f32 %v993, %v604
      %v997 = vxor.u32 %v996, 2147483648
      %v998 = vmul.f32 %v997, 1.442695
      %v999 = vpow.pop %v998
      %v1000 = vadd.f32 %v999, 1.0
      %v1001 = vrcp.pop %v1000
      %v1002 = vmul.f32 1.0, %v1001
      %v1003 = vtanh.pop %v996
      %v1004 = vmul.f32 %v1002, %v628
      %1006 = vrot.lane.b32.xlu0 %v1003, 64
      %v1007 = vpop.permute.xlu0 %1006
      %v1009 = vmul.f32 %v1002, %v1007
      %1011 = vrot.lane.b32.xlu0 %v1009, 32
      %v1012 = vpop.permute.xlu0 %1011
      %v1014 = vadd.f32 %v1004, %v1012
      %v1015 = vtanh.pop %v1014
      %1017 = vrot.lane.b32.xlu0 %v1015, 64
      %v1018 = vpop.permute.xlu0 %1017
      %v1020 = vmul.f32 %v1002, %v1018
      %1022 = vrot.lane.b32.xlu0 %v1020, 32
      %v1023 = vpop.permute.xlu0 %1022
      %v1025 = vsel %vm350, %v1023, 0.0
      %1026 = vadd.xlane.f32.xlu0 %v1025
      %v1027 = vpop.xlane.xlu0 %1026
      %v1028 = vmul.f32 %v1027, 0.03125
      %v1029 = vmul.f32 %v1020, %v1020
      %1031 = vrot.lane.b32.xlu0 %v1029, 32
      %v1032 = vpop.permute.xlu0 %1031
      %v1034 = vsel %vm350, %v1032, 0.0
      %1035 = vadd.xlane.f32.xlu0 %v1034
      %v1036 = vpop.xlane.xlu0 %1035
      %v1037 = vmul.f32 %v1036, 0.03125
      %v1038 = vmul.f32 %v1028, %v1028
      %v1039 = vsub.f32 %v1037, %v1038
      %v1040 = vsub.f32 %v1020, %v1028
      %v1041 = vadd.f32 %v1039, 0.001
      %v1042 = vrsqrt.pop %v1041
      %v1043 = vmul.f32 %v1040, %v1042
      %1045 = vrot.lane.b32.xlu0 %v1043, 32
      %v1046 = vpop.permute.xlu0 %1045
      %v1047 = vsel %vm350, %v1046, 0
      %1049 = vmatprep.subr.mxu0 0.0
      %1050 = vmatpush1.msra.mxu0 %v321
      %1051 = vmatprep.subr.mxu0 0.0
      %1052 = vmatpush1.msra.mxu0 %v322
      %1053 = vmatprep.subr.mxu0 0.0
      %1054 = vmatpush1.msra.mxu0 %v323
      %1055 = vmatprep.subr.mxu0 0.0
      %1056 = vmatpush1.msra.mxu0 %v324
      %1057 = vmatprep.subr.mxu0 0.0
      %1058 = vmatpush1.msra.mxu0 0.0
      %1059 = vmatprep.subr.mxu0 0.0
      %1060 = vmatpush1.msra.mxu0 0.0
      %1061 = vmatprep.subr.mxu0 0.0
      %1062 = vmatpush1.msra.mxu0 0.0
      %1063 = vmatprep.subr.mxu0 0.0
      %1064 = vmatpush1.msra.mxu0 0.0
      %1065 = vmatprep.subr.mxu0 0.0
      %1066 = vmatpush1.msra.mxu0 0.0
      %1067 = vmatprep.subr.mxu0 0.0
      %1068 = vmatpush1.msra.mxu0 0.0
      %1069 = vmatprep.subr.mxu0 0.0
      %1070 = vmatpush1.msra.mxu0 0.0
      %1071 = vmatprep.subr.mxu0 0.0
      %1072 = vmatpush1.msra.mxu0 0.0
      %1073 = vmatprep.subr.mxu0 0.0
      %1074 = vmatpush1.msra.mxu0 0.0
      %1075 = vmatprep.subr.mxu0 0.0
      %1076 = vmatpush1.msra.mxu0 0.0
      %1077 = vmatprep.subr.mxu0 0.0
      %1078 = vmatpush1.msra.mxu0 0.0
      %1079 = vmatprep.subr.mxu0 0.0
      %1080 = vmatpush1.msra.mxu0 0.0
      %1081 = vmatprep.subr.mxu0 0.0
      %1082 = vmatpush1.msra.mxu0 0.0
      %1083 = vmatprep.subr.mxu0 0.0
      %1084 = vmatpush1.msra.mxu0 0.0
      %1085 = vmatprep.subr.mxu0 0.0
      %1086 = vmatpush1.msra.mxu0 0.0
      %1087 = vmatprep.subr.mxu0 0.0
      %1088 = vmatpush1.msra.mxu0 0.0
      %1089 = vmatprep.subr.mxu0 0.0
      %1090 = vmatpush1.msra.mxu0 0.0
      %1091 = vmatprep.subr.mxu0 0.0
      %1092 = vmatpush1.msra.mxu0 0.0
      %1093 = vmatprep.subr.mxu0 0.0
      %1094 = vmatpush1.msra.mxu0 0.0
      %1095 = vmatprep.subr.mxu0 0.0
      %1096 = vmatpush1.msra.mxu0 0.0
      %1097 = vmatprep.subr.mxu0 0.0
      %1098 = vmatpush1.msra.mxu0 0.0
      %1099 = vmatprep.subr.mxu0 0.0
      %1100 = vmatpush1.msra.mxu0 0.0
      %1101 = vmatprep.subr.mxu0 0.0
      %1102 = vmatpush1.msra.mxu0 0.0
      %1103 = vmatprep.subr.mxu0 0.0
      %1104 = vmatpush1.msra.mxu0 0.0
      %1105 = vmatprep.subr.mxu0 0.0
      %1106 = vmatpush1.msra.mxu0 0.0
      %1107 = vmatprep.subr.mxu0 0.0
      %1108 = vmatpush1.msra.mxu0 0.0
      %1109 = vmatprep.subr.mxu0 0.0
      %1110 = vmatpush1.msra.mxu0 0.0
      %1111 = vmatprep.subr.mxu0 0.0
      %1112 = vmatpush1.msra.mxu0 0.0
      %1113 = vmatprep.mubr.f32.mxu0 0.0
      %1114 = vmatmul.mubr.f32.gmra.mrb[0].mxu0 %v1047
      %v1115 = vpop.f32.mrb[0].mxu0
      %v1116 = vadd.f32 %v662, %v1115
      %v1117 = vpop.f32.mrb[0].mxu0
      %1118 = vdwg.mxu0
      %s1119 = scalar_lea.vmem %s280, 8
      %1120 = vst [vmem:[%s1119] sm:$0xff] %v1116
      %s1121 = scalar_lea.vmem %s274, 16
      %v1122 = vld [vmem:[%s1121] sm:$0xff]
      %1123 = vadd.xlane.f32.xlu0 %v1122
      %v1124 = vpop.xlane.xlu0 %1123
      %v1125 = vmul.f32 %v1124, 0.0625
      %v1126 = vmul.f32 %v1122, %v1122
      %1127 = vadd.xlane.f32.xlu0 %v1126
      %v1128 = vpop.xlane.xlu0 %1127
      %v1129 = vmul.f32 %v1128, 0.0625
      %v1130 = vmul.f32 %v1125, %v1125
      %v1131 = vsub.f32 %v1129, %v1130
      %v1132 = vsub.f32 %v1122, %v1125
      %v1133 = vadd.f32 %v1131, 0.001
      %v1134 = vrsqrt.pop %v1133
      %v1135 = vmul.f32 %v1132, %v1134
      %1136 = vmatprep.subr.mxu0 0.0
      %1137 = vmatpush1.msra.mxu0 %v291
      %1138 = vmatprep.subr.mxu0 0.0
      %1139 = vmatpush1.msra.mxu0 %v292
      %1140 = vmatprep.subr.mxu0 0.0
      %1141 = vmatpush1.msra.mxu0 %v293
      %1142 = vmatprep.subr.mxu0 0.0
      %1143 = vmatpush1.msra.mxu0 %v294
      %1144 = vmatprep.subr.mxu0 0.0
      %1145 = vmatpush1.msra.mxu0 %v295
      %1146 = vmatprep.subr.mxu0 0.0
      %1147 = vmatpush1.msra.mxu0 %v296
      %1148 = vmatprep.subr.mxu0 0.0
      %1149 = vmatpush1.msra.mxu0 %v297
      %1150 = vmatprep.subr.mxu0 0.0
      %1151 = vmatpush1.msra.mxu0 %v298
      %1152 = vmatprep.subr.mxu0 0.0
      %1153 = vmatpush1.msra.mxu0 %v299
      %1154 = vmatprep.subr.mxu0 0.0
      %1155 = vmatpush1.msra.mxu0 %v300
      %1156 = vmatprep.subr.mxu0 0.0
      %1157 = vmatpush1.msra.mxu0 %v301
      %1158 = vmatprep.subr.mxu0 0.0
      %1159 = vmatpush1.msra.mxu0 %v302
      %1160 = vmatprep.subr.mxu0 0.0
      %1161 = vmatpush1.msra.mxu0 %v303
      %1162 = vmatprep.subr.mxu0 0.0
      %1163 = vmatpush1.msra.mxu0 %v304
      %1164 = vmatprep.subr.mxu0 0.0
      %1165 = vmatpush1.msra.mxu0 %v305
      %1166 = vmatprep.subr.mxu0 0.0
      %1167 = vmatpush1.msra.mxu0 %v306
      %1168 = vmatprep.subr.mxu0 0.0
      %1169 = vmatpush1.msra.mxu0 %v307
      %1170 = vmatprep.subr.mxu0 0.0
      %1171 = vmatpush1.msra.mxu0 %v308
      %1172 = vmatprep.subr.mxu0 0.0
      %1173 = vmatpush1.msra.mxu0 %v309
      %1174 = vmatprep.subr.mxu0 0.0
      %1175 = vmatpush1.msra.mxu0 %v310
      %1176 = vmatprep.subr.mxu0 0.0
      %1177 = vmatpush1.msra.mxu0 0.0
      %1178 = vmatprep.subr.mxu0 0.0
      %1179 = vmatpush1.msra.mxu0 0.0
      %1180 = vmatprep.subr.mxu0 0.0
      %1181 = vmatpush1.msra.mxu0 0.0
      %1182 = vmatprep.subr.mxu0 0.0
      %1183 = vmatpush1.msra.mxu0 0.0
      %1184 = vmatprep.subr.mxu0 0.0
      %1185 = vmatpush1.msra.mxu0 0.0
      %1186 = vmatprep.subr.mxu0 0.0
      %1187 = vmatpush1.msra.mxu0 0.0
      %1188 = vmatprep.subr.mxu0 0.0
      %1189 = vmatpush1.msra.mxu0 0.0
      %1190 = vmatprep.subr.mxu0 0.0
      %1191 = vmatpush1.msra.mxu0 0.0
      %1192 = vmatprep.subr.mxu0 0.0
      %1193 = vmatpush1.msra.mxu0 0.0
      %1194 = vmatprep.subr.mxu0 0.0
      %1195 = vmatpush1.msra.mxu0 0.0
      %1196 = vmatprep.subr.mxu0 0.0
      %1197 = vmatpush1.msra.mxu0 0.0
      %1198 = vmatprep.subr.mxu0 0.0
      %1199 = vmatpush1.msra.mxu0 0.0
      %1200 = vmatprep.mubr.f32.mxu0 %v924
      %1201 = vmatmul.mubr.f32.gmra.mrb[0].mxu0 %v1135
      %v1202 = vpop.f32.mrb[0].mxu0
      %v1203 = vadd.f32 %v348, %v1202
      %v1204 = vpop.f32.mrb[0].mxu0
      %1205 = vdwg.mxu0
      %v1206 = vxor.u32 %v1203, 2147483648
      %v1207 = vmul.f32 %v1206, 1.442695
      %v1208 = vpow.pop %v1207
      %v1209 = vadd.f32 %v1208, 1.0
      %v1210 = vrcp.pop %v1209
      %v1211 = vmul.f32 1.0, %v1210
      %v1212 = vtanh.pop %v1203
      %v1213 = vmul.f32 %v1211, %v842
      %1215 = vrot.lane.b32.xlu0 %v1212, 64
      %v1216 = vpop.permute.xlu0 %1215
      %v1218 = vmul.f32 %v1211, %v1216
      %1220 = vrot.lane.b32.xlu0 %v1218, 32
      %v1221 = vpop.permute.xlu0 %1220
      %v1223 = vadd.f32 %v1213, %v1221
      %v1224 = vtanh.pop %v1223
      %1226 = vrot.lane.b32.xlu0 %v1224, 64
      %v1227 = vpop.permute.xlu0 %1226
      %v1229 = vmul.f32 %v1211, %v1227
      %v1230 = vsel %vm350, %v1023, 0
      %1232 = vmatprep.subr.mxu0 0.0
      %1233 = vmatpush1.msra.mxu0 %v316
      %1234 = vmatprep.subr.mxu0 0.0
      %1235 = vmatpush1.msra.mxu0 %v317
      %1236 = vmatprep.subr.mxu0 0.0
      %1237 = vmatpush1.msra.mxu0 %v318
      %1238 = vmatprep.subr.mxu0 0.0
      %1239 = vmatpush1.msra.mxu0 %v319
      %1240 = vmatprep.subr.mxu0 0.0
      %1241 = vmatpush1.msra.mxu0 0.0
      %1242 = vmatprep.subr.mxu0 0.0
      %1243 = vmatpush1.msra.mxu0 0.0
      %1244 = vmatprep.subr.mxu0 0.0
      %1245 = vmatpush1.msra.mxu0 0.0
      %1246 = vmatprep.subr.mxu0 0.0
      %1247 = vmatpush1.msra.mxu0 0.0
      %1248 = vmatprep.subr.mxu0 0.0
      %1249 = vmatpush1.msra.mxu0 0.0
      %1250 = vmatprep.subr.mxu0 0.0
      %1251 = vmatpush1.msra.mxu0 0.0
      %1252 = vmatprep.subr.mxu0 0.0
      %1253 = vmatpush1.msra.mxu0 0.0
      %1254 = vmatprep.subr.mxu0 0.0
      %1255 = vmatpush1.msra.mxu0 0.0
      %1256 = vmatprep.subr.mxu0 0.0
      %1257 = vmatpush1.msra.mxu0 0.0
      %1258 = vmatprep.subr.mxu0 0.0
      %1259 = vmatpush1.msra.mxu0 0.0
      %1260 = vmatprep.subr.mxu0 0.0
      %1261 = vmatpush1.msra.mxu0 0.0
      %1262 = vmatprep.subr.mxu0 0.0
      %1263 = vmatpush1.msra.mxu0 0.0
      %1264 = vmatprep.subr.mxu0 0.0
      %1265 = vmatpush1.msra.mxu0 0.0
      %1266 = vmatprep.subr.mxu0 0.0
      %1267 = vmatpush1.msra.mxu0 0.0
      %1268 = vmatprep.subr.mxu0 0.0
      %1269 = vmatpush1.msra.mxu0 0.0
      %1270 = vmatprep.subr.mxu0 0.0
      %1271 = vmatpush1.msra.mxu0 0.0
      %1272 = vmatprep.subr.mxu0 0.0
      %1273 = vmatpush1.msra.mxu0 0.0
      %1274 = vmatprep.subr.mxu0 0.0
      %1275 = vmatpush1.msra.mxu0 0.0
      %1276 = vmatprep.subr.mxu0 0.0
      %1277 = vmatpush1.msra.mxu0 0.0
      %1278 = vmatprep.subr.mxu0 0.0
      %1279 = vmatpush1.msra.mxu0 0.0
      %1280 = vmatprep.subr.mxu0 0.0
      %1281 = vmatpush1.msra.mxu0 0.0
      %1282 = vmatprep.subr.mxu0 0.0
      %1283 = vmatpush1.msra.mxu0 0.0
      %1284 = vmatprep.subr.mxu0 0.0
      %1285 = vmatpush1.msra.mxu0 0.0
      %1286 = vmatprep.subr.mxu0 0.0
      %1287 = vmatpush1.msra.mxu0 0.0
      %1288 = vmatprep.subr.mxu0 0.0
      %1289 = vmatpush1.msra.mxu0 0.0
      %1290 = vmatprep.subr.mxu0 0.0
      %1291 = vmatpush1.msra.mxu0 0.0
      %1292 = vmatprep.subr.mxu0 0.0
      %1293 = vmatpush1.msra.mxu0 0.0
      %1294 = vmatprep.subr.mxu0 0.0
      %1295 = vmatpush1.msra.mxu0 0.0
      %1296 = vmatprep.mubr.f32.mxu0 0.0
      %1297 = vmatmul.mubr.f32.gmra.mrb[0].mxu0 %v1230
      %v1298 = vpop.f32.mrb[0].mxu0
      %v1299 = vadd.f32 0.0, %v1298
      %v1300 = vpop.f32.mrb[0].mxu0
      %1301 = vdwg.mxu0
      %1303 = vrot.lane.b32.xlu0 %v1229, 32
      %v1304 = vpop.permute.xlu0 %1303
      %v1305 = vsel %vm350, %v1304, 0
      %1307 = vmatprep.subr.mxu0 0.0
      %1308 = vmatpush1.msra.mxu0 %v312
      %1309 = vmatprep.subr.mxu0 0.0
      %1310 = vmatpush1.msra.mxu0 %v313
      %1311 = vmatprep.subr.mxu0 0.0
      %1312 = vmatpush1.msra.mxu0 %v314
      %1313 = vmatprep.subr.mxu0 0.0
      %1314 = vmatpush1.msra.mxu0 %v315
      %1315 = vmatprep.subr.mxu0 0.0
      %1316 = vmatpush1.msra.mxu0 0.0
      %1317 = vmatprep.subr.mxu0 0.0
      %1318 = vmatpush1.msra.mxu0 0.0
      %1319 = vmatprep.subr.mxu0 0.0
      %1320 = vmatpush1.msra.mxu0 0.0
      %1321 = vmatprep.subr.mxu0 0.0
      %1322 = vmatpush1.msra.mxu0 0.0
      %1323 = vmatprep.subr.mxu0 0.0
      %1324 = vmatpush1.msra.mxu0 0.0
      %1325 = vmatprep.subr.mxu0 0.0
      %1326 = vmatpush1.msra.mxu0 0.0
      %1327 = vmatprep.subr.mxu0 0.0
      %1328 = vmatpush1.msra.mxu0 0.0
      %1329 = vmatprep.subr.mxu0 0.0
      %1330 = vmatpush1.msra.mxu0 0.0
      %1331 = vmatprep.subr.mxu0 0.0
      %1332 = vmatpush1.msra.mxu0 0.0
      %1333 = vmatprep.subr.mxu0 0.0
      %1334 = vmatpush1.msra.mxu0 0.0
      %1335 = vmatprep.subr.mxu0 0.0
      %1336 = vmatpush1.msra.mxu0 0.0
      %1337 = vmatprep.subr.mxu0 0.0
      %1338 = vmatpush1.msra.mxu0 0.0
      %1339 = vmatprep.subr.mxu0 0.0
      %1340 = vmatpush1.msra.mxu0 0.0
      %1341 = vmatprep.subr.mxu0 0.0
      %1342 = vmatpush1.msra.mxu0 0.0
      %1343 = vmatprep.subr.mxu0 0.0
      %1344 = vmatpush1.msra.mxu0 0.0
      %1345 = vmatprep.subr.mxu0 0.0
      %1346 = vmatpush1.msra.mxu0 0.0
      %1347 = vmatprep.subr.mxu0 0.0
      %1348 = vmatpush1.msra.mxu0 0.0
      %1349 = vmatprep.subr.mxu0 0.0
      %1350 = vmatpush1.msra.mxu0 0.0
      %1351 = vmatprep.subr.mxu0 0.0
      %1352 = vmatpush1.msra.mxu0 0.0
      %1353 = vmatprep.subr.mxu0 0.0
      %1354 = vmatpush1.msra.mxu0 0.0
      %1355 = vmatprep.subr.mxu0 0.0
      %1356 = vmatpush1.msra.mxu0 0.0
      %1357 = vmatprep.subr.mxu0 0.0
      %1358 = vmatpush1.msra.mxu0 0.0
      %1359 = vmatprep.subr.mxu0 0.0
      %1360 = vmatpush1.msra.mxu0 0.0
      %1361 = vmatprep.subr.mxu0 0.0
      %1362 = vmatpush1.msra.mxu0 0.0
      %1363 = vmatprep.subr.mxu0 0.0
      %1364 = vmatpush1.msra.mxu0 0.0
      %1365 = vmatprep.subr.mxu0 0.0
      %1366 = vmatpush1.msra.mxu0 0.0
      %1367 = vmatprep.subr.mxu0 0.0
      %1368 = vmatpush1.msra.mxu0 0.0
      %1369 = vmatprep.subr.mxu0 0.0
      %1370 = vmatpush1.msra.mxu0 0.0
      %1371 = vmatprep.mubr.f32.mxu0 0.0
      %1372 = vmatmul.mubr.f32.gmra.mrb[0].mxu0 %v1305
      %v1373 = vpop.f32.mrb[0].mxu0
      %v1374 = vadd.f32 %v1299, %v1373
      %v1375 = vpop.f32.mrb[0].mxu0
      %1376 = vdwg.mxu0
      %v1377 = vadd.f32 %v1374, %v604
      %v1378 = vxor.u32 %v1377, 2147483648
      %v1379 = vmul.f32 %v1378, 1.442695
      %v1380 = vpow.pop %v1379
      %v1381 = vadd.f32 %v1380, 1.0
      %v1382 = vrcp.pop %v1381
      %v1383 = vmul.f32 1.0, %v1382
      %v1384 = vtanh.pop %v1377
      %v1385 = vmul.f32 %v1383, %v1014
      %1387 = vrot.lane.b32.xlu0 %v1384, 64
      %v1388 = vpop.permute.xlu0 %1387
      %v1390 = vmul.f32 %v1383, %v1388
      %1392 = vrot.lane.b32.xlu0 %v1390, 32
      %v1393 = vpop.permute.xlu0 %1392
      %v1395 = vadd.f32 %v1385, %v1393
      %v1396 = vtanh.pop %v1395
      %1398 = vrot.lane.b32.xlu0 %v1396, 64
      %v1399 = vpop.permute.xlu0 %1398
      %v1401 = vmul.f32 %v1383, %v1399
      %1403 = vrot.lane.b32.xlu0 %v1401, 32
      %v1404 = vpop.permute.xlu0 %1403
      %v1406 = vsel %vm350, %v1404, 0.0
      %1407 = vadd.xlane.f32.xlu0 %v1406
      %v1408 = vpop.xlane.xlu0 %1407
      %v1409 = vmul.f32 %v1408, 0.03125
      %v1410 = vmul.f32 %v1401, %v1401
      %1412 = vrot.lane.b32.xlu0 %v1410, 32
      %v1413 = vpop.permute.xlu0 %1412
      %v1415 = vsel %vm350, %v1413, 0.0
      %1416 = vadd.xlane.f32.xlu0 %v1415
      %v1417 = vpop.xlane.xlu0 %1416
      %v1418 = vmul.f32 %v1417, 0.03125
      %v1419 = vmul.f32 %v1409, %v1409
      %v1420 = vsub.f32 %v1418, %v1419
      %v1421 = vsub.f32 %v1401, %v1409
      %v1422 = vadd.f32 %v1420, 0.001
      %v1423 = vrsqrt.pop %v1422
      %v1424 = vmul.f32 %v1421, %v1423
      %1426 = vrot.lane.b32.xlu0 %v1424, 32
      %v1427 = vpop.permute.xlu0 %1426
      %v1428 = vsel %vm350, %v1427, 0
      %1430 = vmatprep.subr.mxu0 0.0
      %1431 = vmatpush1.msra.mxu0 %v321
      %1432 = vmatprep.subr.mxu0 0.0
      %1433 = vmatpush1.msra.mxu0 %v322
      %1434 = vmatprep.subr.mxu0 0.0
      %1435 = vmatpush1.msra.mxu0 %v323
      %1436 = vmatprep.subr.mxu0 0.0
      %1437 = vmatpush1.msra.mxu0 %v324
      %1438 = vmatprep.subr.mxu0 0.0
      %1439 = vmatpush1.msra.mxu0 0.0
      %1440 = vmatprep.subr.mxu0 0.0
      %1441 = vmatpush1.msra.mxu0 0.0
      %1442 = vmatprep.subr.mxu0 0.0
      %1443 = vmatpush1.msra.mxu0 0.0
      %1444 = vmatprep.subr.mxu0 0.0
      %1445 = vmatpush1.msra.mxu0 0.0
      %1446 = vmatprep.subr.mxu0 0.0
      %1447 = vmatpush1.msra.mxu0 0.0
      %1448 = vmatprep.subr.mxu0 0.0
      %1449 = vmatpush1.msra.mxu0 0.0
      %1450 = vmatprep.subr.mxu0 0.0
      %1451 = vmatpush1.msra.mxu0 0.0
      %1452 = vmatprep.subr.mxu0 0.0
      %1453 = vmatpush1.msra.mxu0 0.0
      %1454 = vmatprep.subr.mxu0 0.0
      %1455 = vmatpush1.msra.mxu0 0.0
      %1456 = vmatprep.subr.mxu0 0.0
      %1457 = vmatpush1.msra.mxu0 0.0
      %1458 = vmatprep.subr.mxu0 0.0
      %1459 = vmatpush1.msra.mxu0 0.0
      %1460 = vmatprep.subr.mxu0 0.0
      %1461 = vmatpush1.msra.mxu0 0.0
      %1462 = vmatprep.subr.mxu0 0.0
      %1463 = vmatpush1.msra.mxu0 0.0
      %1464 = vmatprep.subr.mxu0 0.0
      %1465 = vmatpush1.msra.mxu0 0.0
      %1466 = vmatprep.subr.mxu0 0.0
      %1467 = vmatpush1.msra.mxu0 0.0
      %1468 = vmatprep.subr.mxu0 0.0
      %1469 = vmatpush1.msra.mxu0 0.0
      %1470 = vmatprep.subr.mxu0 0.0
      %1471 = vmatpush1.msra.mxu0 0.0
      %1472 = vmatprep.subr.mxu0 0.0
      %1473 = vmatpush1.msra.mxu0 0.0
      %1474 = vmatprep.subr.mxu0 0.0
      %1475 = vmatpush1.msra.mxu0 0.0
      %1476 = vmatprep.subr.mxu0 0.0
      %1477 = vmatpush1.msra.mxu0 0.0
      %1478 = vmatprep.subr.mxu0 0.0
      %1479 = vmatpush1.msra.mxu0 0.0
      %1480 = vmatprep.subr.mxu0 0.0
      %1481 = vmatpush1.msra.mxu0 0.0
      %1482 = vmatprep.subr.mxu0 0.0
      %1483 = vmatpush1.msra.mxu0 0.0
      %1484 = vmatprep.subr.mxu0 0.0
      %1485 = vmatpush1.msra.mxu0 0.0
      %1486 = vmatprep.subr.mxu0 0.0
      %1487 = vmatpush1.msra.mxu0 0.0
      %1488 = vmatprep.subr.mxu0 0.0
      %1489 = vmatpush1.msra.mxu0 0.0
      %1490 = vmatprep.subr.mxu0 0.0
      %1491 = vmatpush1.msra.mxu0 0.0
      %1492 = vmatprep.subr.mxu0 0.0
      %1493 = vmatpush1.msra.mxu0 0.0
      %1494 = vmatprep.mubr.f32.mxu0 0.0
      %1495 = vmatmul.mubr.f32.gmra.mrb[0].mxu0 %v1428
      %v1496 = vpop.f32.mrb[0].mxu0
      %v1497 = vadd.f32 %v662, %v1496
      %v1498 = vpop.f32.mrb[0].mxu0
      %1499 = vdwg.mxu0
      %s1500 = scalar_lea.vmem %s280, 16
      %1501 = vst [vmem:[%s1500] sm:$0xff] %v1497
      %s1502 = scalar_lea.vmem %s274, 24
      %v1503 = vld [vmem:[%s1502] sm:$0xff]
      %1504 = vadd.xlane.f32.xlu0 %v1503
      %v1505 = vpop.xlane.xlu0 %1504
      %v1506 = vmul.f32 %v1505, 0.0625
      %v1507 = vmul.f32 %v1503, %v1503
      %1508 = vadd.xlane.f32.xlu0 %v1507
      %v1509 = vpop.xlane.xlu0 %1508
      %v1510 = vmul.f32 %v1509, 0.0625
      %v1511 = vmul.f32 %v1506, %v1506
      %v1512 = vsub.f32 %v1510, %v1511
      %v1513 = vsub.f32 %v1503, %v1506
      %v1514 = vadd.f32 %v1512, 0.001
      %v1515 = vrsqrt.pop %v1514
      %v1516 = vmul.f32 %v1513, %v1515
      %1517 = vmatprep.subr.mxu0 0.0
      %1518 = vmatpush1.msra.mxu0 %v291
      %1519 = vmatprep.subr.mxu0 0.0
      %1520 = vmatpush1.msra.mxu0 %v292
      %1521 = vmatprep.subr.mxu0 0.0
      %1522 = vmatpush1.msra.mxu0 %v293
      %1523 = vmatprep.subr.mxu0 0.0
      %1524 = vmatpush1.msra.mxu0 %v294
      %1525 = vmatprep.subr.mxu0 0.0
      %1526 = vmatpush1.msra.mxu0 %v295
      %1527 = vmatprep.subr.mxu0 0.0
      %1528 = vmatpush1.msra.mxu0 %v296
      %1529 = vmatprep.subr.mxu0 0.0
      %1530 = vmatpush1.msra.mxu0 %v297
      %1531 = vmatprep.subr.mxu0 0.0
      %1532 = vmatpush1.msra.mxu0 %v298
      %1533 = vmatprep.subr.mxu0 0.0
      %1534 = vmatpush1.msra.mxu0 %v299
      %1535 = vmatprep.subr.mxu0 0.0
      %1536 = vmatpush1.msra.mxu0 %v300
      %1537 = vmatprep.subr.mxu0 0.0
      %1538 = vmatpush1.msra.mxu0 %v301
      %1539 = vmatprep.subr.mxu0 0.0
      %1540 = vmatpush1.msra.mxu0 %v302
      %1541 = vmatprep.subr.mxu0 0.0
      %1542 = vmatpush1.msra.mxu0 %v303
      %1543 = vmatprep.subr.mxu0 0.0
      %1544 = vmatpush1.msra.mxu0 %v304
      %1545 = vmatprep.subr.mxu0 0.0
      %1546 = vmatpush1.msra.mxu0 %v305
      %1547 = vmatprep.subr.mxu0 0.0
      %1548 = vmatpush1.msra.mxu0 %v306
      %1549 = vmatprep.subr.mxu0 0.0
      %1550 = vmatpush1.msra.mxu0 %v307
      %1551 = vmatprep.subr.mxu0 0.0
      %1552 = vmatpush1.msra.mxu0 %v308
      %1553 = vmatprep.subr.mxu0 0.0
      %1554 = vmatpush1.msra.mxu0 %v309
      %1555 = vmatprep.subr.mxu0 0.0
      %1556 = vmatpush1.msra.mxu0 %v310
      %1557 = vmatprep.subr.mxu0 0.0
      %1558 = vmatpush1.msra.mxu0 0.0
      %1559 = vmatprep.subr.mxu0 0.0
      %1560 = vmatpush1.msra.mxu0 0.0
      %1561 = vmatprep.subr.mxu0 0.0
      %1562 = vmatpush1.msra.mxu0 0.0
      %1563 = vmatprep.subr.mxu0 0.0
      %1564 = vmatpush1.msra.mxu0 0.0
      %1565 = vmatprep.subr.mxu0 0.0
      %1566 = vmatpush1.msra.mxu0 0.0
      %1567 = vmatprep.subr.mxu0 0.0
      %1568 = vmatpush1.msra.mxu0 0.0
      %1569 = vmatprep.subr.mxu0 0.0
      %1570 = vmatpush1.msra.mxu0 0.0
      %1571 = vmatprep.subr.mxu0 0.0
      %1572 = vmatpush1.msra.mxu0 0.0
      %1573 = vmatprep.subr.mxu0 0.0
      %1574 = vmatpush1.msra.mxu0 0.0
      %1575 = vmatprep.subr.mxu0 0.0
      %1576 = vmatpush1.msra.mxu0 0.0
      %1577 = vmatprep.subr.mxu0 0.0
      %1578 = vmatpush1.msra.mxu0 0.0
      %1579 = vmatprep.subr.mxu0 0.0
      %1580 = vmatpush1.msra.mxu0 0.0
      %1581 = vmatprep.mubr.f32.mxu0 %v1305
      %1582 = vmatmul.mubr.f32.gmra.mrb[0].mxu0 %v1516
      %v1583 = vpop.f32.mrb[0].mxu0
      %v1584 = vadd.f32 %v348, %v1583
      %v1585 = vpop.f32.mrb[0].mxu0
      %1586 = vdwg.mxu0
      %v1587 = vxor.u32 %v1584, 2147483648
      %v1588 = vmul.f32 %v1587, 1.442695
      %v1589 = vpow.pop %v1588
      %v1590 = vadd.f32 %v1589, 1.0
      %v1591 = vrcp.pop %v1590
      %v1592 = vmul.f32 1.0, %v1591
      %v1593 = vtanh.pop %v1584
      %v1594 = vmul.f32 %v1592, %v1223
      %1596 = vrot.lane.b32.xlu0 %v1593, 64
      %v1597 = vpop.permute.xlu0 %1596
      %v1599 = vmul.f32 %v1592, %v1597
      %1601 = vrot.lane.b32.xlu0 %v1599, 32
      %v1602 = vpop.permute.xlu0 %1601
      %v1604 = vadd.f32 %v1594, %v1602
      %v1605 = vtanh.pop %v1604
      %1607 = vrot.lane.b32.xlu0 %v1605, 64
      %v1608 = vpop.permute.xlu0 %1607
      %v1610 = vmul.f32 %v1592, %v1608
      %v1611 = vsel %vm350, %v1404, 0
      %1613 = vmatprep.subr.mxu0 0.0
      %1614 = vmatpush1.msra.mxu0 %v316
      %1615 = vmatprep.subr.mxu0 0.0
      %1616 = vmatpush1.msra.mxu0 %v317
      %1617 = vmatprep.subr.mxu0 0.0
      %1618 = vmatpush1.msra.mxu0 %v318
      %1619 = vmatprep.subr.mxu0 0.0
      %1620 = vmatpush1.msra.mxu0 %v319
      %1621 = vmatprep.subr.mxu0 0.0
      %1622 = vmatpush1.msra.mxu0 0.0
      %1623 = vmatprep.subr.mxu0 0.0
      %1624 = vmatpush1.msra.mxu0 0.0
      %1625 = vmatprep.subr.mxu0 0.0
      %1626 = vmatpush1.msra.mxu0 0.0
      %1627 = vmatprep.subr.mxu0 0.0
      %1628 = vmatpush1.msra.mxu0 0.0
      %1629 = vmatprep.subr.mxu0 0.0
      %1630 = vmatpush1.msra.mxu0 0.0
      %1631 = vmatprep.subr.mxu0 0.0
      %1632 = vmatpush1.msra.mxu0 0.0
      %1633 = vmatprep.subr.mxu0 0.0
      %1634 = vmatpush1.msra.mxu0 0.0
      %1635 = vmatprep.subr.mxu0 0.0
      %1636 = vmatpush1.msra.mxu0 0.0
      %1637 = vmatprep.subr.mxu0 0.0
      %1638 = vmatpush1.msra.mxu0 0.0
      %1639 = vmatprep.subr.mxu0 0.0
      %1640 = vmatpush1.msra.mxu0 0.0
      %1641 = vmatprep.subr.mxu0 0.0
      %1642 = vmatpush1.msra.mxu0 0.0
      %1643 = vmatprep.subr.mxu0 0.0
      %1644 = vmatpush1.msra.mxu0 0.0
      %1645 = vmatprep.subr.mxu0 0.0
      %1646 = vmatpush1.msra.mxu0 0.0
      %1647 = vmatprep.subr.mxu0 0.0
      %1648 = vmatpush1.msra.mxu0 0.0
      %1649 = vmatprep.subr.mxu0 0.0
      %1650 = vmatpush1.msra.mxu0 0.0
      %1651 = vmatprep.subr.mxu0 0.0
      %1652 = vmatpush1.msra.mxu0 0.0
      %1653 = vmatprep.subr.mxu0 0.0
      %1654 = vmatpush1.msra.mxu0 0.0
      %1655 = vmatprep.subr.mxu0 0.0
      %1656 = vmatpush1.msra.mxu0 0.0
      %1657 = vmatprep.subr.mxu0 0.0
      %1658 = vmatpush1.msra.mxu0 0.0
      %1659 = vmatprep.subr.mxu0 0.0
      %1660 = vmatpush1.msra.mxu0 0.0
      %1661 = vmatprep.subr.mxu0 0.0
      %1662 = vmatpush1.msra.mxu0 0.0
      %1663 = vmatprep.subr.mxu0 0.0
      %1664 = vmatpush1.msra.mxu0 0.0
      %1665 = vmatprep.subr.mxu0 0.0
      %1666 = vmatpush1.msra.mxu0 0.0
      %1667 = vmatprep.subr.mxu0 0.0
      %1668 = vmatpush1.msra.mxu0 0.0
      %1669 = vmatprep.subr.mxu0 0.0
      %1670 = vmatpush1.msra.mxu0 0.0
      %1671 = vmatprep.subr.mxu0 0.0
      %1672 = vmatpush1.msra.mxu0 0.0
      %1673 = vmatprep.subr.mxu0 0.0
      %1674 = vmatpush1.msra.mxu0 0.0
      %1675 = vmatprep.subr.mxu0 0.0
      %1676 = vmatpush1.msra.mxu0 0.0
      %1677 = vmatprep.mubr.f32.mxu0 0.0
      %1678 = vmatmul.mubr.f32.gmra.mrb[0].mxu0 %v1611
      %v1679 = vpop.f32.mrb[0].mxu0
      %v1680 = vadd.f32 0.0, %v1679
      %v1681 = vpop.f32.mrb[0].mxu0
      %1682 = vdwg.mxu0
      %1684 = vrot.lane.b32.xlu0 %v1610, 32
      %v1685 = vpop.permute.xlu0 %1684
      %v1686 = vsel %vm350, %v1685, 0
      %1688 = vmatprep.subr.mxu0 0.0
      %1689 = vmatpush1.msra.mxu0 %v312
      %1690 = vmatprep.subr.mxu0 0.0
      %1691 = vmatpush1.msra.mxu0 %v313
      %1692 = vmatprep.subr.mxu0 0.0
      %1693 = vmatpush1.msra.mxu0 %v314
      %1694 = vmatprep.subr.mxu0 0.0
      %1695 = vmatpush1.msra.mxu0 %v315
      %1696 = vmatprep.subr.mxu0 0.0
      %1697 = vmatpush1.msra.mxu0 0.0
      %1698 = vmatprep.subr.mxu0 0.0
      %1699 = vmatpush1.msra.mxu0 0.0
      %1700 = vmatprep.subr.mxu0 0.0
      %1701 = vmatpush1.msra.mxu0 0.0
      %1702 = vmatprep.subr.mxu0 0.0
      %1703 = vmatpush1.msra.mxu0 0.0
      %1704 = vmatprep.subr.mxu0 0.0
      %1705 = vmatpush1.msra.mxu0 0.0
      %1706 = vmatprep.subr.mxu0 0.0
      %1707 = vmatpush1.msra.mxu0 0.0
      %1708 = vmatprep.subr.mxu0 0.0
      %1709 = vmatpush1.msra.mxu0 0.0
      %1710 = vmatprep.subr.mxu0 0.0
      %1711 = vmatpush1.msra.mxu0 0.0
      %1712 = vmatprep.subr.mxu0 0.0
      %1713 = vmatpush1.msra.mxu0 0.0
      %1714 = vmatprep.subr.mxu0 0.0
      %1715 = vmatpush1.msra.mxu0 0.0
      %1716 = vmatprep.subr.mxu0 0.0
      %1717 = vmatpush1.msra.mxu0 0.0
      %1718 = vmatprep.subr.mxu0 0.0
      %1719 = vmatpush1.msra.mxu0 0.0
      %1720 = vmatprep.subr.mxu0 0.0
      %1721 = vmatpush1.msra.mxu0 0.0
      %1722 = vmatprep.subr.mxu0 0.0
      %1723 = vmatpush1.msra.mxu0 0.0
      %1724 = vmatprep.subr.mxu0 0.0
      %1725 = vmatpush1.msra.mxu0 0.0
      %1726 = vmatprep.subr.mxu0 0.0
      %1727 = vmatpush1.msra.mxu0 0.0
      %1728 = vmatprep.subr.mxu0 0.0
      %1729 = vmatpush1.msra.mxu0 0.0
      %1730 = vmatprep.subr.mxu0 0.0
      %1731 = vmatpush1.msra.mxu0 0.0
      %1732 = vmatprep.subr.mxu0 0.0
      %1733 = vmatpush1.msra.mxu0 0.0
      %1734 = vmatprep.subr.mxu0 0.0
      %1735 = vmatpush1.msra.mxu0 0.0
      %1736 = vmatprep.subr.mxu0 0.0
      %1737 = vmatpush1.msra.mxu0 0.0
      %1738 = vmatprep.subr.mxu0 0.0
      %1739 = vmatpush1.msra.mxu0 0.0
      %1740 = vmatprep.subr.mxu0 0.0
      %1741 = vmatpush1.msra.mxu0 0.0
      %1742 = vmatprep.subr.mxu0 0.0
      %1743 = vmatpush1.msra.mxu0 0.0
      %1744 = vmatprep.subr.mxu0 0.0
      %1745 = vmatpush1.msra.mxu0 0.0
      %1746 = vmatprep.subr.mxu0 0.0
      %1747 = vmatpush1.msra.mxu0 0.0
      %1748 = vmatprep.subr.mxu0 0.0
      %1749 = vmatpush1.msra.mxu0 0.0
      %1750 = vmatprep.subr.mxu0 0.0
      %1751 = vmatpush1.msra.mxu0 0.0
      %1752 = vmatprep.mubr.f32.mxu0 0.0
      %1753 = vmatmul.mubr.f32.gmra.mrb[0].mxu0 %v1686
      %v1754 = vpop.f32.mrb[0].mxu0
      %v1755 = vadd.f32 %v1680, %v1754
      %v1756 = vpop.f32.mrb[0].mxu0
      %1757 = vdwg.mxu0
      %v1758 = vadd.f32 %v1755, %v604
      %v1759 = vxor.u32 %v1758, 2147483648
      %v1760 = vmul.f32 %v1759, 1.442695
      %v1761 = vpow.pop %v1760
      %v1762 = vadd.f32 %v1761, 1.0
      %v1763 = vrcp.pop %v1762
      %v1764 = vmul.f32 1.0, %v1763
      %v1765 = vtanh.pop %v1758
      %v1766 = vmul.f32 %v1764, %v1395
      %1768 = vrot.lane.b32.xlu0 %v1765, 64
      %v1769 = vpop.permute.xlu0 %1768
      %v1771 = vmul.f32 %v1764, %v1769
      %1773 = vrot.lane.b32.xlu0 %v1771, 32
      %v1774 = vpop.permute.xlu0 %1773
      %v1776 = vadd.f32 %v1766, %v1774
      %v1777 = vtanh.pop %v1776
      %1779 = vrot.lane.b32.xlu0 %v1777, 64
      %v1780 = vpop.permute.xlu0 %1779
      %v1782 = vmul.f32 %v1764, %v1780
      %1784 = vrot.lane.b32.xlu0 %v1782, 32
      %v1785 = vpop.permute.xlu0 %1784
      %v1787 = vsel %vm350, %v1785, 0.0
      %1788 = vadd.xlane.f32.xlu0 %v1787
      %v1789 = vpop.xlane.xlu0 %1788
      %v1790 = vmul.f32 %v1789, 0.03125
      %v1791 = vmul.f32 %v1782, %v1782
      %1793 = vrot.lane.b32.xlu0 %v1791, 32
      %v1794 = vpop.permute.xlu0 %1793
      %v1796 = vsel %vm350, %v1794, 0.0
      %1797 = vadd.xlane.f32.xlu0 %v1796
      %v1798 = vpop.xlane.xlu0 %1797
      %v1799 = vmul.f32 %v1798, 0.03125
      %v1800 = vmul.f32 %v1790, %v1790
      %v1801 = vsub.f32 %v1799, %v1800
      %v1802 = vsub.f32 %v1782, %v1790
      %v1803 = vadd.f32 %v1801, 0.001
      %v1804 = vrsqrt.pop %v1803
      %v1805 = vmul.f32 %v1802, %v1804
      %1807 = vrot.lane.b32.xlu0 %v1805, 32
      %v1808 = vpop.permute.xlu0 %1807
      %v1809 = vsel %vm350, %v1808, 0
      %1811 = vmatprep.subr.mxu0 0.0
      %1812 = vmatpush1.msra.mxu0 %v321
      %1813 = vmatprep.subr.mxu0 0.0
      %1814 = vmatpush1.msra.mxu0 %v322
      %1815 = vmatprep.subr.mxu0 0.0
      %1816 = vmatpush1.msra.mxu0 %v323
      %1817 = vmatprep.subr.mxu0 0.0
      %1818 = vmatpush1.msra.mxu0 %v324
      %1819 = vmatprep.subr.mxu0 0.0
      %1820 = vmatpush1.msra.mxu0 0.0
      %1821 = vmatprep.subr.mxu0 0.0
      %1822 = vmatpush1.msra.mxu0 0.0
      %1823 = vmatprep.subr.mxu0 0.0
      %1824 = vmatpush1.msra.mxu0 0.0
      %1825 = vmatprep.subr.mxu0 0.0
      %1826 = vmatpush1.msra.mxu0 0.0
      %1827 = vmatprep.subr.mxu0 0.0
      %1828 = vmatpush1.msra.mxu0 0.0
      %1829 = vmatprep.subr.mxu0 0.0
      %1830 = vmatpush1.msra.mxu0 0.0
      %1831 = vmatprep.subr.mxu0 0.0
      %1832 = vmatpush1.msra.mxu0 0.0
      %1833 = vmatprep.subr.mxu0 0.0
      %1834 = vmatpush1.msra.mxu0 0.0
      %1835 = vmatprep.subr.mxu0 0.0
      %1836 = vmatpush1.msra.mxu0 0.0
      %1837 = vmatprep.subr.mxu0 0.0
      %1838 = vmatpush1.msra.mxu0 0.0
      %1839 = vmatprep.subr.mxu0 0.0
      %1840 = vmatpush1.msra.mxu0 0.0
      %1841 = vmatprep.subr.mxu0 0.0
      %1842 = vmatpush1.msra.mxu0 0.0
      %1843 = vmatprep.subr.mxu0 0.0
      %1844 = vmatpush1.msra.mxu0 0.0
      %1845 = vmatprep.subr.mxu0 0.0
      %1846 = vmatpush1.msra.mxu0 0.0
      %1847 = vmatprep.subr.mxu0 0.0
      %1848 = vmatpush1.msra.mxu0 0.0
      %1849 = vmatprep.subr.mxu0 0.0
      %1850 = vmatpush1.msra.mxu0 0.0
      %1851 = vmatprep.subr.mxu0 0.0
      %1852 = vmatpush1.msra.mxu0 0.0
      %1853 = vmatprep.subr.mxu0 0.0
      %1854 = vmatpush1.msra.mxu0 0.0
      %1855 = vmatprep.subr.mxu0 0.0
      %1856 = vmatpush1.msra.mxu0 0.0
      %1857 = vmatprep.subr.mxu0 0.0
      %1858 = vmatpush1.msra.mxu0 0.0
      %1859 = vmatprep.subr.mxu0 0.0
      %1860 = vmatpush1.msra.mxu0 0.0
      %1861 = vmatprep.subr.mxu0 0.0
      %1862 = vmatpush1.msra.mxu0 0.0
      %1863 = vmatprep.subr.mxu0 0.0
      %1864 = vmatpush1.msra.mxu0 0.0
      %1865 = vmatprep.subr.mxu0 0.0
      %1866 = vmatpush1.msra.mxu0 0.0
      %1867 = vmatprep.subr.mxu0 0.0
      %1868 = vmatpush1.msra.mxu0 0.0
      %1869 = vmatprep.subr.mxu0 0.0
      %1870 = vmatpush1.msra.mxu0 0.0
      %1871 = vmatprep.subr.mxu0 0.0
      %1872 = vmatpush1.msra.mxu0 0.0
      %1873 = vmatprep.subr.mxu0 0.0
      %1874 = vmatpush1.msra.mxu0 0.0
      %1875 = vmatprep.mubr.f32.mxu0 0.0
      %1876 = vmatmul.mubr.f32.gmra.mrb[0].mxu0 %v1809
      %v1877 = vpop.f32.mrb[0].mxu0
      %v1878 = vadd.f32 %v662, %v1877
      %v1879 = vpop.f32.mrb[0].mxu0
      %1880 = vdwg.mxu0
      %s1881 = scalar_lea.vmem %s280, 24
      %1882 = vst [vmem:[%s1881] sm:$0xff] %v1878
      %s1883 = scalar_lea.vmem %s274, 32
      %v1884 = vld [vmem:[%s1883] sm:$0xff]
      %1885 = vadd.xlane.f32.xlu0 %v1884
      %v1886 = vpop.xlane.xlu0 %1885
      %v1887 = vmul.f32 %v1886, 0.0625
      %v1888 = vmul.f32 %v1884, %v1884
      %1889 = vadd.xlane.f32.xlu0 %v1888
      %v1890 = vpop.xlane.xlu0 %1889
      %v1891 = vmul.f32 %v1890, 0.0625
      %v1892 = vmul.f32 %v1887, %v1887
      %v1893 = vsub.f32 %v1891, %v1892
      %v1894 = vsub.f32 %v1884, %v1887
      %v1895 = vadd.f32 %v1893, 0.001
      %v1896 = vrsqrt.pop %v1895
      %v1897 = vmul.f32 %v1894, %v1896
      %1898 = vmatprep.subr.mxu0 0.0
      %1899 = vmatpush1.msra.mxu0 %v291
      %1900 = vmatprep.subr.mxu0 0.0
      %1901 = vmatpush1.msra.mxu0 %v292
      %1902 = vmatprep.subr.mxu0 0.0
      %1903 = vmatpush1.msra.mxu0 %v293
      %1904 = vmatprep.subr.mxu0 0.0
      %1905 = vmatpush1.msra.mxu0 %v294
      %1906 = vmatprep.subr.mxu0 0.0
      %1907 = vmatpush1.msra.mxu0 %v295
      %1908 = vmatprep.subr.mxu0 0.0
      %1909 = vmatpush1.msra.mxu0 %v296
      %1910 = vmatprep.subr.mxu0 0.0
      %1911 = vmatpush1.msra.mxu0 %v297
      %1912 = vmatprep.subr.mxu0 0.0
      %1913 = vmatpush1.msra.mxu0 %v298
      %1914 = vmatprep.subr.mxu0 0.0
      %1915 = vmatpush1.msra.mxu0 %v299
      %1916 = vmatprep.subr.mxu0 0.0
      %1917 = vmatpush1.msra.mxu0 %v300
      %1918 = vmatprep.subr.mxu0 0.0
      %1919 = vmatpush1.msra.mxu0 %v301
      %1920 = vmatprep.subr.mxu0 0.0
      %1921 = vmatpush1.msra.mxu0 %v302
      %1922 = vmatprep.subr.mxu0 0.0
      %1923 = vmatpush1.msra.mxu0 %v303
      %1924 = vmatprep.subr.mxu0 0.0
      %1925 = vmatpush1.msra.mxu0 %v304
      %1926 = vmatprep.subr.mxu0 0.0
      %1927 = vmatpush1.msra.mxu0 %v305
      %1928 = vmatprep.subr.mxu0 0.0
      %1929 = vmatpush1.msra.mxu0 %v306
      %1930 = vmatprep.subr.mxu0 0.0
      %1931 = vmatpush1.msra.mxu0 %v307
      %1932 = vmatprep.subr.mxu0 0.0
      %1933 = vmatpush1.msra.mxu0 %v308
      %1934 = vmatprep.subr.mxu0 0.0
      %1935 = vmatpush1.msra.mxu0 %v309
      %1936 = vmatprep.subr.mxu0 0.0
      %1937 = vmatpush1.msra.mxu0 %v310
      %1938 = vmatprep.subr.mxu0 0.0
      %1939 = vmatpush1.msra.mxu0 0.0
      %1940 = vmatprep.subr.mxu0 0.0
      %1941 = vmatpush1.msra.mxu0 0.0
      %1942 = vmatprep.subr.mxu0 0.0
      %1943 = vmatpush1.msra.mxu0 0.0
      %1944 = vmatprep.subr.mxu0 0.0
      %1945 = vmatpush1.msra.mxu0 0.0
      %1946 = vmatprep.subr.mxu0 0.0
      %1947 = vmatpush1.msra.mxu0 0.0
      %1948 = vmatprep.subr.mxu0 0.0
      %1949 = vmatpush1.msra.mxu0 0.0
      %1950 = vmatprep.subr.mxu0 0.0
      %1951 = vmatpush1.msra.mxu0 0.0
      %1952 = vmatprep.subr.mxu0 0.0
      %1953 = vmatpush1.msra.mxu0 0.0
      %1954 = vmatprep.subr.mxu0 0.0
      %1955 = vmatpush1.msra.mxu0 0.0
      %1956 = vmatprep.subr.mxu0 0.0
      %1957 = vmatpush1.msra.mxu0 0.0
      %1958 = vmatprep.subr.mxu0 0.0
      %1959 = vmatpush1.msra.mxu0 0.0
      %1960 = vmatprep.subr.mxu0 0.0
      %1961 = vmatpush1.msra.mxu0 0.0
      %1962 = vmatprep.mubr.f32.mxu0 %v1686
      %1963 = vmatmul.mubr.f32.gmra.mrb[0].mxu0 %v1897
      %v1964 = vpop.f32.mrb[0].mxu0
      %v1965 = vadd.f32 %v348, %v1964
      %v1966 = vpop.f32.mrb[0].mxu0
      %1967 = vdwg.mxu0
      %v1968 = vxor.u32 %v1965, 2147483648
      %v1969 = vmul.f32 %v1968, 1.442695
      %v1970 = vpow.pop %v1969
      %v1971 = vadd.f32 %v1970, 1.0
      %v1972 = vrcp.pop %v1971
      %v1973 = vmul.f32 1.0, %v1972
      %v1974 = vtanh.pop %v1965
      %v1975 = vmul.f32 %v1973, %v1604
      %1977 = vrot.lane.b32.xlu0 %v1974, 64
      %v1978 = vpop.permute.xlu0 %1977
      %v1980 = vmul.f32 %v1973, %v1978
      %1982 = vrot.lane.b32.xlu0 %v1980, 32
      %v1983 = vpop.permute.xlu0 %1982
      %v1985 = vadd.f32 %v1975, %v1983
      %v1986 = vtanh.pop %v1985
      %1988 = vrot.lane.b32.xlu0 %v1986, 64
      %v1989 = vpop.permute.xlu0 %1988
      %v1991 = vmul.f32 %v1973, %v1989
      %v1992 = vsel %vm350, %v1785, 0
      %1994 = vmatprep.subr.mxu0 0.0
      %1995 = vmatpush1.msra.mxu0 %v316
      %1996 = vmatprep.subr.mxu0 0.0
      %1997 = vmatpush1.msra.mxu0 %v317
      %1998 = vmatprep.subr.mxu0 0.0
      %1999 = vmatpush1.msra.mxu0 %v318
      %2000 = vmatprep.subr.mxu0 0.0
      %2001 = vmatpush1.msra.mxu0 %v319
      %2002 = vmatprep.subr.mxu0 0.0
      %2003 = vmatpush1.msra.mxu0 0.0
      %2004 = vmatprep.subr.mxu0 0.0
      %2005 = vmatpush1.msra.mxu0 0.0
      %2006 = vmatprep.subr.mxu0 0.0
      %2007 = vmatpush1.msra.mxu0 0.0
      %2008 = vmatprep.subr.mxu0 0.0
      %2009 = vmatpush1.msra.mxu0 0.0
      %2010 = vmatprep.subr.mxu0 0.0
      %2011 = vmatpush1.msra.mxu0 0.0
      %2012 = vmatprep.subr.mxu0 0.0
      %2013 = vmatpush1.msra.mxu0 0.0
      %2014 = vmatprep.subr.mxu0 0.0
      %2015 = vmatpush1.msra.mxu0 0.0
      %2016 = vmatprep.subr.mxu0 0.0
      %2017 = vmatpush1.msra.mxu0 0.0
      %2018 = vmatprep.subr.mxu0 0.0
      %2019 = vmatpush1.msra.mxu0 0.0
      %2020 = vmatprep.subr.mxu0 0.0
      %2021 = vmatpush1.msra.mxu0 0.0
      %2022 = vmatprep.subr.mxu0 0.0
      %2023 = vmatpush1.msra.mxu0 0.0
      %2024 = vmatprep.subr.mxu0 0.0
      %2025 = vmatpush1.msra.mxu0 0.0
      %2026 = vmatprep.subr.mxu0 0.0
      %2027 = vmatpush1.msra.mxu0 0.0
      %2028 = vmatprep.subr.mxu0 0.0
      %2029 = vmatpush1.msra.mxu0 0.0
      %2030 = vmatprep.subr.mxu0 0.0
      %2031 = vmatpush1.msra.mxu0 0.0
      %2032 = vmatprep.subr.mxu0 0.0
      %2033 = vmatpush1.msra.mxu0 0.0
      %2034 = vmatprep.subr.mxu0 0.0
      %2035 = vmatpush1.msra.mxu0 0.0
      %2036 = vmatprep.subr.mxu0 0.0
      %2037 = vmatpush1.msra.mxu0 0.0
      %2038 = vmatprep.subr.mxu0 0.0
      %2039 = vmatpush1.msra.mxu0 0.0
      %2040 = vmatprep.subr.mxu0 0.0
      %2041 = vmatpush1.msra.mxu0 0.0
      %2042 = vmatprep.subr.mxu0 0.0
      %2043 = vmatpush1.msra.mxu0 0.0
      %2044 = vmatprep.subr.mxu0 0.0
      %2045 = vmatpush1.msra.mxu0 0.0
      %2046 = vmatprep.subr.mxu0 0.0
      %2047 = vmatpush1.msra.mxu0 0.0
      %2048 = vmatprep.subr.mxu0 0.0
      %2049 = vmatpush1.msra.mxu0 0.0
      %2050 = vmatprep.subr.mxu0 0.0
      %2051 = vmatpush1.msra.mxu0 0.0
      %2052 = vmatprep.subr.mxu0 0.0
      %2053 = vmatpush1.msra.mxu0 0.0
      %2054 = vmatprep.subr.mxu0 0.0
      %2055 = vmatpush1.msra.mxu0 0.0
      %2056 = vmatprep.subr.mxu0 0.0
      %2057 = vmatpush1.msra.mxu0 0.0
      %2058 = vmatprep.mubr.f32.mxu0 0.0
      %2059 = vmatmul.mubr.f32.gmra.mrb[0].mxu0 %v1992
      %v2060 = vpop.f32.mrb[0].mxu0
      %v2061 = vadd.f32 0.0, %v2060
      %v2062 = vpop.f32.mrb[0].mxu0
      %2063 = vdwg.mxu0
      %2065 = vrot.lane.b32.xlu0 %v1991, 32
      %v2066 = vpop.permute.xlu0 %2065
      %v2067 = vsel %vm350, %v2066, 0
      %2069 = vmatprep.subr.mxu0 0.0
      %2070 = vmatpush1.msra.mxu0 %v312
      %2071 = vmatprep.subr.mxu0 0.0
      %2072 = vmatpush1.msra.mxu0 %v313
      %2073 = vmatprep.subr.mxu0 0.0
      %2074 = vmatpush1.msra.mxu0 %v314
      %2075 = vmatprep.subr.mxu0 0.0
      %2076 = vmatpush1.msra.mxu0 %v315
      %2077 = vmatprep.subr.mxu0 0.0
      %2078 = vmatpush1.msra.mxu0 0.0
      %2079 = vmatprep.subr.mxu0 0.0
      %2080 = vmatpush1.msra.mxu0 0.0
      %2081 = vmatprep.subr.mxu0 0.0
      %2082 = vmatpush1.msra.mxu0 0.0
      %2083 = vmatprep.subr.mxu0 0.0
      %2084 = vmatpush1.msra.mxu0 0.0
      %2085 = vmatprep.subr.mxu0 0.0
      %2086 = vmatpush1.msra.mxu0 0.0
      %2087 = vmatprep.subr.mxu0 0.0
      %2088 = vmatpush1.msra.mxu0 0.0
      %2089 = vmatprep.subr.mxu0 0.0
      %2090 = vmatpush1.msra.mxu0 0.0
      %2091 = vmatprep.subr.mxu0 0.0
      %2092 = vmatpush1.msra.mxu0 0.0
      %2093 = vmatprep.subr.mxu0 0.0
      %2094 = vmatpush1.msra.mxu0 0.0
      %2095 = vmatprep.subr.mxu0 0.0
      %2096 = vmatpush1.msra.mxu0 0.0
      %2097 = vmatprep.subr.mxu0 0.0
      %2098 = vmatpush1.msra.mxu0 0.0
      %2099 = vmatprep.subr.mxu0 0.0
      %2100 = vmatpush1.msra.mxu0 0.0
      %2101 = vmatprep.subr.mxu0 0.0
      %2102 = vmatpush1.msra.mxu0 0.0
      %2103 = vmatprep.subr.mxu0 0.0
      %2104 = vmatpush1.msra.mxu0 0.0
      %2105 = vmatprep.subr.mxu0 0.0
      %2106 = vmatpush1.msra.mxu0 0.0
      %2107 = vmatprep.subr.mxu0 0.0
      %2108 = vmatpush1.msra.mxu0 0.0
      %2109 = vmatprep.subr.mxu0 0.0
      %2110 = vmatpush1.msra.mxu0 0.0
      %2111 = vmatprep.subr.mxu0 0.0
      %2112 = vmatpush1.msra.mxu0 0.0
      %2113 = vmatprep.subr.mxu0 0.0
      %2114 = vmatpush1.msra.mxu0 0.0
      %2115 = vmatprep.subr.mxu0 0.0
      %2116 = vmatpush1.msra.mxu0 0.0
      %2117 = vmatprep.subr.mxu0 0.0
      %2118 = vmatpush1.msra.mxu0 0.0
      %2119 = vmatprep.subr.mxu0 0.0
      %2120 = vmatpush1.msra.mxu0 0.0
      %2121 = vmatprep.subr.mxu0 0.0
      %2122 = vmatpush1.msra.mxu0 0.0
      %2123 = vmatprep.subr.mxu0 0.0
      %2124 = vmatpush1.msra.mxu0 0.0
      %2125 = vmatprep.subr.mxu0 0.0
      %2126 = vmatpush1.msra.mxu0 0.0
      %2127 = vmatprep.subr.mxu0 0.0
      %2128 = vmatpush1.msra.mxu0 0.0
      %2129 = vmatprep.subr.mxu0 0.0
      %2130 = vmatpush1.msra.mxu0 0.0
      %2131 = vmatprep.subr.mxu0 0.0
      %2132 = vmatpush1.msra.mxu0 0.0
      %2133 = vmatprep.mubr.f32.mxu0 0.0
      %2134 = vmatmul.mubr.f32.gmra.mrb[0].mxu0 %v2067
      %v2135 = vpop.f32.mrb[0].mxu0
      %v2136 = vadd.f32 %v2061, %v2135
      %v2137 = vpop.f32.mrb[0].mxu0
      %2138 = vdwg.mxu0
      %v2139 = vadd.f32 %v2136, %v604
      %v2140 = vxor.u32 %v2139, 2147483648
      %v2141 = vmul.f32 %v2140, 1.442695
      %v2142 = vpow.pop %v2141
      %v2143 = vadd.f32 %v2142, 1.0
      %v2144 = vrcp.pop %v2143
      %v2145 = vmul.f32 1.0, %v2144
      %v2146 = vtanh.pop %v2139
      %v2147 = vmul.f32 %v2145, %v1776
      %2149 = vrot.lane.b32.xlu0 %v2146, 64
      %v2150 = vpop.permute.xlu0 %2149
      %v2152 = vmul.f32 %v2145, %v2150
      %2154 = vrot.lane.b32.xlu0 %v2152, 32
      %v2155 = vpop.permute.xlu0 %2154
      %v2157 = vadd.f32 %v2147, %v2155
      %v2158 = vtanh.pop %v2157
      %2160 = vrot.lane.b32.xlu0 %v2158, 64
      %v2161 = vpop.permute.xlu0 %2160
      %v2163 = vmul.f32 %v2145, %v2161
      %2165 = vrot.lane.b32.xlu0 %v2163, 32
      %v2166 = vpop.permute.xlu0 %2165
      %v2168 = vsel %vm350, %v2166, 0.0
      %2169 = vadd.xlane.f32.xlu0 %v2168
      %v2170 = vpop.xlane.xlu0 %2169
      %v2171 = vmul.f32 %v2170, 0.03125
      %v2172 = vmul.f32 %v2163, %v2163
      %2174 = vrot.lane.b32.xlu0 %v2172, 32
      %v2175 = vpop.permute.xlu0 %2174
      %v2177 = vsel %vm350, %v2175, 0.0
      %2178 = vadd.xlane.f32.xlu0 %v2177
      %v2179 = vpop.xlane.xlu0 %2178
      %v2180 = vmul.f32 %v2179, 0.03125
      %v2181 = vmul.f32 %v2171, %v2171
      %v2182 = vsub.f32 %v2180, %v2181
      %v2183 = vsub.f32 %v2163, %v2171
      %v2184 = vadd.f32 %v2182, 0.001
      %v2185 = vrsqrt.pop %v2184
      %v2186 = vmul.f32 %v2183, %v2185
      %2188 = vrot.lane.b32.xlu0 %v2186, 32
      %v2189 = vpop.permute.xlu0 %2188
      %v2190 = vsel %vm350, %v2189, 0
      %2192 = vmatprep.subr.mxu0 0.0
      %2193 = vmatpush1.msra.mxu0 %v321
      %2194 = vmatprep.subr.mxu0 0.0
      %2195 = vmatpush1.msra.mxu0 %v322
      %2196 = vmatprep.subr.mxu0 0.0
      %2197 = vmatpush1.msra.mxu0 %v323
      %2198 = vmatprep.subr.mxu0 0.0
      %2199 = vmatpush1.msra.mxu0 %v324
      %2200 = vmatprep.subr.mxu0 0.0
      %2201 = vmatpush1.msra.mxu0 0.0
      %2202 = vmatprep.subr.mxu0 0.0
      %2203 = vmatpush1.msra.mxu0 0.0
      %2204 = vmatprep.subr.mxu0 0.0
      %2205 = vmatpush1.msra.mxu0 0.0
      %2206 = vmatprep.subr.mxu0 0.0
      %2207 = vmatpush1.msra.mxu0 0.0
      %2208 = vmatprep.subr.mxu0 0.0
      %2209 = vmatpush1.msra.mxu0 0.0
      %2210 = vmatprep.subr.mxu0 0.0
      %2211 = vmatpush1.msra.mxu0 0.0
      %2212 = vmatprep.subr.mxu0 0.0
      %2213 = vmatpush1.msra.mxu0 0.0
      %2214 = vmatprep.subr.mxu0 0.0
      %2215 = vmatpush1.msra.mxu0 0.0
      %2216 = vmatprep.subr.mxu0 0.0
      %2217 = vmatpush1.msra.mxu0 0.0
      %2218 = vmatprep.subr.mxu0 0.0
      %2219 = vmatpush1.msra.mxu0 0.0
      %2220 = vmatprep.subr.mxu0 0.0
      %2221 = vmatpush1.msra.mxu0 0.0
      %2222 = vmatprep.subr.mxu0 0.0
      %2223 = vmatpush1.msra.mxu0 0.0
      %2224 = vmatprep.subr.mxu0 0.0
      %2225 = vmatpush1.msra.mxu0 0.0
      %2226 = vmatprep.subr.mxu0 0.0
      %2227 = vmatpush1.msra.mxu0 0.0
      %2228 = vmatprep.subr.mxu0 0.0
      %2229 = vmatpush1.msra.mxu0 0.0
      %2230 = vmatprep.subr.mxu0 0.0
      %2231 = vmatpush1.msra.mxu0 0.0
      %2232 = vmatprep.subr.mxu0 0.0
      %2233 = vmatpush1.msra.mxu0 0.0
      %2234 = vmatprep.subr.mxu0 0.0
      %2235 = vmatpush1.msra.mxu0 0.0
      %2236 = vmatprep.subr.mxu0 0.0
      %2237 = vmatpush1.msra.mxu0 0.0
      %2238 = vmatprep.subr.mxu0 0.0
      %2239 = vmatpush1.msra.mxu0 0.0
      %2240 = vmatprep.subr.mxu0 0.0
      %2241 = vmatpush1.msra.mxu0 0.0
      %2242 = vmatprep.subr.mxu0 0.0
      %2243 = vmatpush1.msra.mxu0 0.0
      %2244 = vmatprep.subr.mxu0 0.0
      %2245 = vmatpush1.msra.mxu0 0.0
      %2246 = vmatprep.subr.mxu0 0.0
      %2247 = vmatpush1.msra.mxu0 0.0
      %2248 = vmatprep.subr.mxu0 0.0
      %2249 = vmatpush1.msra.mxu0 0.0
      %2250 = vmatprep.subr.mxu0 0.0
      %2251 = vmatpush1.msra.mxu0 0.0
      %2252 = vmatprep.subr.mxu0 0.0
      %2253 = vmatpush1.msra.mxu0 0.0
      %2254 = vmatprep.subr.mxu0 0.0
      %2255 = vmatpush1.msra.mxu0 0.0
      %2256 = vmatprep.mubr.f32.mxu0 0.0
      %2257 = vmatmul.mubr.f32.gmra.mrb[0].mxu0 %v2190
      %v2258 = vpop.f32.mrb[0].mxu0
      %v2259 = vadd.f32 %v662, %v2258
      %v2260 = vpop.f32.mrb[0].mxu0
      %2261 = vdwg.mxu0
      %s2262 = scalar_lea.vmem %s280, 32
      %2263 = vst [vmem:[%s2262] sm:$0xff] %v2259
      %s2264 = scalar_lea.vmem %s274, 40
      %v2265 = vld [vmem:[%s2264] sm:$0xff]
      %2266 = vadd.xlane.f32.xlu0 %v2265
      %v2267 = vpop.xlane.xlu0 %2266
      %v2268 = vmul.f32 %v2267, 0.0625
      %v2269 = vmul.f32 %v2265, %v2265
      %2270 = vadd.xlane.f32.xlu0 %v2269
      %v2271 = vpop.xlane.xlu0 %2270
      %v2272 = vmul.f32 %v2271, 0.0625
      %v2273 = vmul.f32 %v2268, %v2268
      %v2274 = vsub.f32 %v2272, %v2273
      %v2275 = vsub.f32 %v2265, %v2268
      %v2276 = vadd.f32 %v2274, 0.001
      %v2277 = vrsqrt.pop %v2276
      %v2278 = vmul.f32 %v2275, %v2277
      %2279 = vmatprep.subr.mxu0 0.0
      %2280 = vmatpush1.msra.mxu0 %v291
      %2281 = vmatprep.subr.mxu0 0.0
      %2282 = vmatpush1.msra.mxu0 %v292
      %2283 = vmatprep.subr.mxu0 0.0
      %2284 = vmatpush1.msra.mxu0 %v293
      %2285 = vmatprep.subr.mxu0 0.0
      %2286 = vmatpush1.msra.mxu0 %v294
      %2287 = vmatprep.subr.mxu0 0.0
      %2288 = vmatpush1.msra.mxu0 %v295
      %2289 = vmatprep.subr.mxu0 0.0
      %2290 = vmatpush1.msra.mxu0 %v296
      %2291 = vmatprep.subr.mxu0 0.0
      %2292 = vmatpush1.msra.mxu0 %v297
      %2293 = vmatprep.subr.mxu0 0.0
      %2294 = vmatpush1.msra.mxu0 %v298
      %2295 = vmatprep.subr.mxu0 0.0
      %2296 = vmatpush1.msra.mxu0 %v299
      %2297 = vmatprep.subr.mxu0 0.0
      %2298 = vmatpush1.msra.mxu0 %v300
      %2299 = vmatprep.subr.mxu0 0.0
      %2300 = vmatpush1.msra.mxu0 %v301
      %2301 = vmatprep.subr.mxu0 0.0
      %2302 = vmatpush1.msra.mxu0 %v302
      %2303 = vmatprep.subr.mxu0 0.0
      %2304 = vmatpush1.msra.mxu0 %v303
      %2305 = vmatprep.subr.mxu0 0.0
      %2306 = vmatpush1.msra.mxu0 %v304
      %2307 = vmatprep.subr.mxu0 0.0
      %2308 = vmatpush1.msra.mxu0 %v305
      %2309 = vmatprep.subr.mxu0 0.0
      %2310 = vmatpush1.msra.mxu0 %v306
      %2311 = vmatprep.subr.mxu0 0.0
      %2312 = vmatpush1.msra.mxu0 %v307
      %2313 = vmatprep.subr.mxu0 0.0
      %2314 = vmatpush1.msra.mxu0 %v308
      %2315 = vmatprep.subr.mxu0 0.0
      %2316 = vmatpush1.msra.mxu0 %v309
      %2317 = vmatprep.subr.mxu0 0.0
      %2318 = vmatpush1.msra.mxu0 %v310
      %2319 = vmatprep.subr.mxu0 0.0
      %2320 = vmatpush1.msra.mxu0 0.0
      %2321 = vmatprep.subr.mxu0 0.0
      %2322 = vmatpush1.msra.mxu0 0.0
      %2323 = vmatprep.subr.mxu0 0.0
      %2324 = vmatpush1.msra.mxu0 0.0
      %2325 = vmatprep.subr.mxu0 0.0
      %2326 = vmatpush1.msra.mxu0 0.0
      %2327 = vmatprep.subr.mxu0 0.0
      %2328 = vmatpush1.msra.mxu0 0.0
      %2329 = vmatprep.subr.mxu0 0.0
      %2330 = vmatpush1.msra.mxu0 0.0
      %2331 = vmatprep.subr.mxu0 0.0
      %2332 = vmatpush1.msra.mxu0 0.0
      %2333 = vmatprep.subr.mxu0 0.0
      %2334 = vmatpush1.msra.mxu0 0.0
      %2335 = vmatprep.subr.mxu0 0.0
      %2336 = vmatpush1.msra.mxu0 0.0
      %2337 = vmatprep.subr.mxu0 0.0
      %2338 = vmatpush1.msra.mxu0 0.0
      %2339 = vmatprep.subr.mxu0 0.0
      %2340 = vmatpush1.msra.mxu0 0.0
      %2341 = vmatprep.subr.mxu0 0.0
      %2342 = vmatpush1.msra.mxu0 0.0
      %2343 = vmatprep.mubr.f32.mxu0 %v2067
      %2344 = vmatmul.mubr.f32.gmra.mrb[0].mxu0 %v2278
      %v2345 = vpop.f32.mrb[0].mxu0
      %v2346 = vadd.f32 %v348, %v2345
      %v2347 = vpop.f32.mrb[0].mxu0
      %2348 = vdwg.mxu0
      %v2349 = vxor.u32 %v2346, 2147483648
      %v2350 = vmul.f32 %v2349, 1.442695
      %v2351 = vpow.pop %v2350
      %v2352 = vadd.f32 %v2351, 1.0
      %v2353 = vrcp.pop %v2352
      %v2354 = vmul.f32 1.0, %v2353
      %v2355 = vtanh.pop %v2346
      %v2356 = vmul.f32 %v2354, %v1985
      %2358 = vrot.lane.b32.xlu0 %v2355, 64
      %v2359 = vpop.permute.xlu0 %2358
      %v2361 = vmul.f32 %v2354, %v2359
      %2363 = vrot.lane.b32.xlu0 %v2361, 32
      %v2364 = vpop.permute.xlu0 %2363
      %v2366 = vadd.f32 %v2356, %v2364
      %v2367 = vtanh.pop %v2366
      %2369 = vrot.lane.b32.xlu0 %v2367, 64
      %v2370 = vpop.permute.xlu0 %2369
      %v2372 = vmul.f32 %v2354, %v2370
      %v2373 = vsel %vm350, %v2166, 0
      %2375 = vmatprep.subr.mxu0 0.0
      %2376 = vmatpush1.msra.mxu0 %v316
      %2377 = vmatprep.subr.mxu0 0.0
      %2378 = vmatpush1.msra.mxu0 %v317
      %2379 = vmatprep.subr.mxu0 0.0
      %2380 = vmatpush1.msra.mxu0 %v318
      %2381 = vmatprep.subr.mxu0 0.0
      %2382 = vmatpush1.msra.mxu0 %v319
      %2383 = vmatprep.subr.mxu0 0.0
      %2384 = vmatpush1.msra.mxu0 0.0
      %2385 = vmatprep.subr.mxu0 0.0
      %2386 = vmatpush1.msra.mxu0 0.0
      %2387 = vmatprep.subr.mxu0 0.0
      %2388 = vmatpush1.msra.mxu0 0.0
      %2389 = vmatprep.subr.mxu0 0.0
      %2390 = vmatpush1.msra.mxu0 0.0
      %2391 = vmatprep.subr.mxu0 0.0
      %2392 = vmatpush1.msra.mxu0 0.0
      %2393 = vmatprep.subr.mxu0 0.0
      %2394 = vmatpush1.msra.mxu0 0.0
      %2395 = vmatprep.subr.mxu0 0.0
      %2396 = vmatpush1.msra.mxu0 0.0
      %2397 = vmatprep.subr.mxu0 0.0
      %2398 = vmatpush1.msra.mxu0 0.0
      %2399 = vmatprep.subr.mxu0 0.0
      %2400 = vmatpush1.msra.mxu0 0.0
      %2401 = vmatprep.subr.mxu0 0.0
      %2402 = vmatpush1.msra.mxu0 0.0
      %2403 = vmatprep.subr.mxu0 0.0
      %2404 = vmatpush1.msra.mxu0 0.0
      %2405 = vmatprep.subr.mxu0 0.0
      %2406 = vmatpush1.msra.mxu0 0.0
      %2407 = vmatprep.subr.mxu0 0.0
      %2408 = vmatpush1.msra.mxu0 0.0
      %2409 = vmatprep.subr.mxu0 0.0
      %2410 = vmatpush1.msra.mxu0 0.0
      %2411 = vmatprep.subr.mxu0 0.0
      %2412 = vmatpush1.msra.mxu0 0.0
      %2413 = vmatprep.subr.mxu0 0.0
      %2414 = vmatpush1.msra.mxu0 0.0
      %2415 = vmatprep.subr.mxu0 0.0
      %2416 = vmatpush1.msra.mxu0 0.0
      %2417 = vmatprep.subr.mxu0 0.0
      %2418 = vmatpush1.msra.mxu0 0.0
      %2419 = vmatprep.subr.mxu0 0.0
      %2420 = vmatpush1.msra.mxu0 0.0
      %2421 = vmatprep.subr.mxu0 0.0
      %2422 = vmatpush1.msra.mxu0 0.0
      %2423 = vmatprep.subr.mxu0 0.0
      %2424 = vmatpush1.msra.mxu0 0.0
      %2425 = vmatprep.subr.mxu0 0.0
      %2426 = vmatpush1.msra.mxu0 0.0
      %2427 = vmatprep.subr.mxu0 0.0
      %2428 = vmatpush1.msra.mxu0 0.0
      %2429 = vmatprep.subr.mxu0 0.0
      %2430 = vmatpush1.msra.mxu0 0.0
      %2431 = vmatprep.subr.mxu0 0.0
      %2432 = vmatpush1.msra.mxu0 0.0
      %2433 = vmatprep.subr.mxu0 0.0
      %2434 = vmatpush1.msra.mxu0 0.0
      %2435 = vmatprep.subr.mxu0 0.0
      %2436 = vmatpush1.msra.mxu0 0.0
      %2437 = vmatprep.subr.mxu0 0.0
      %2438 = vmatpush1.msra.mxu0 0.0
      %2439 = vmatprep.mubr.f32.mxu0 0.0
      %2440 = vmatmul.mubr.f32.gmra.mrb[0].mxu0 %v2373
      %v2441 = vpop.f32.mrb[0].mxu0
      %v2442 = vadd.f32 0.0, %v2441
      %v2443 = vpop.f32.mrb[0].mxu0
      %2444 = vdwg.mxu0
      %2446 = vrot.lane.b32.xlu0 %v2372, 32
      %v2447 = vpop.permute.xlu0 %2446
      %v2448 = vsel %vm350, %v2447, 0
      %2450 = vmatprep.subr.mxu0 0.0
      %2451 = vmatpush1.msra.mxu0 %v312
      %2452 = vmatprep.subr.mxu0 0.0
      %2453 = vmatpush1.msra.mxu0 %v313
      %2454 = vmatprep.subr.mxu0 0.0
      %2455 = vmatpush1.msra.mxu0 %v314
      %2456 = vmatprep.subr.mxu0 0.0
      %2457 = vmatpush1.msra.mxu0 %v315
      %2458 = vmatprep.subr.mxu0 0.0
      %2459 = vmatpush1.msra.mxu0 0.0
      %2460 = vmatprep.subr.mxu0 0.0
      %2461 = vmatpush1.msra.mxu0 0.0
      %2462 = vmatprep.subr.mxu0 0.0
      %2463 = vmatpush1.msra.mxu0 0.0
      %2464 = vmatprep.subr.mxu0 0.0
      %2465 = vmatpush1.msra.mxu0 0.0
      %2466 = vmatprep.subr.mxu0 0.0
      %2467 = vmatpush1.msra.mxu0 0.0
      %2468 = vmatprep.subr.mxu0 0.0
      %2469 = vmatpush1.msra.mxu0 0.0
      %2470 = vmatprep.subr.mxu0 0.0
      %2471 = vmatpush1.msra.mxu0 0.0
      %2472 = vmatprep.subr.mxu0 0.0
      %2473 = vmatpush1.msra.mxu0 0.0
      %2474 = vmatprep.subr.mxu0 0.0
      %2475 = vmatpush1.msra.mxu0 0.0
      %2476 = vmatprep.subr.mxu0 0.0
      %2477 = vmatpush1.msra.mxu0 0.0
      %2478 = vmatprep.subr.mxu0 0.0
      %2479 = vmatpush1.msra.mxu0 0.0
      %2480 = vmatprep.subr.mxu0 0.0
      %2481 = vmatpush1.msra.mxu0 0.0
      %2482 = vmatprep.subr.mxu0 0.0
      %2483 = vmatpush1.msra.mxu0 0.0
      %2484 = vmatprep.subr.mxu0 0.0
      %2485 = vmatpush1.msra.mxu0 0.0
      %2486 = vmatprep.subr.mxu0 0.0
      %2487 = vmatpush1.msra.mxu0 0.0
      %2488 = vmatprep.subr.mxu0 0.0
      %2489 = vmatpush1.msra.mxu0 0.0
      %2490 = vmatprep.subr.mxu0 0.0
      %2491 = vmatpush1.msra.mxu0 0.0
      %2492 = vmatprep.subr.mxu0 0.0
      %2493 = vmatpush1.msra.mxu0 0.0
      %2494 = vmatprep.subr.mxu0 0.0
      %2495 = vmatpush1.msra.mxu0 0.0
      %2496 = vmatprep.subr.mxu0 0.0
      %2497 = vmatpush1.msra.mxu0 0.0
      %2498 = vmatprep.subr.mxu0 0.0
      %2499 = vmatpush1.msra.mxu0 0.0
      %2500 = vmatprep.subr.mxu0 0.0
      %2501 = vmatpush1.msra.mxu0 0.0
      %2502 = vmatprep.subr.mxu0 0.0
      %2503 = vmatpush1.msra.mxu0 0.0
      %2504 = vmatprep.subr.mxu0 0.0
      %2505 = vmatpush1.msra.mxu0 0.0
      %2506 = vmatprep.subr.mxu0 0.0
      %2507 = vmatpush1.msra.mxu0 0.0
      %2508 = vmatprep.subr.mxu0 0.0
      %2509 = vmatpush1.msra.mxu0 0.0
      %2510 = vmatprep.subr.mxu0 0.0
      %2511 = vmatpush1.msra.mxu0 0.0
      %2512 = vmatprep.subr.mxu0 0.0
      %2513 = vmatpush1.msra.mxu0 0.0
      %2514 = vmatprep.mubr.f32.mxu0 0.0
      %2515 = vmatmul.mubr.f32.gmra.mrb[0].mxu0 %v2448
      %v2516 = vpop.f32.mrb[0].mxu0
      %v2517 = vadd.f32 %v2442, %v2516
      %v2518 = vpop.f32.mrb[0].mxu0
      %2519 = vdwg.mxu0
      %v2520 = vadd.f32 %v2517, %v604
      %v2521 = vxor.u32 %v2520, 2147483648
      %v2522 = vmul.f32 %v2521, 1.442695
      %v2523 = vpow.pop %v2522
      %v2524 = vadd.f32 %v2523, 1.0
      %v2525 = vrcp.pop %v2524
      %v2526 = vmul.f32 1.0, %v2525
      %v2527 = vtanh.pop %v2520
      %v2528 = vmul.f32 %v2526, %v2157
      %2530 = vrot.lane.b32.xlu0 %v2527, 64
      %v2531 = vpop.permute.xlu0 %2530
      %v2533 = vmul.f32 %v2526, %v2531
      %2535 = vrot.lane.b32.xlu0 %v2533, 32
      %v2536 = vpop.permute.xlu0 %2535
      %v2538 = vadd.f32 %v2528, %v2536
      %v2539 = vtanh.pop %v2538
      %2541 = vrot.lane.b32.xlu0 %v2539, 64
      %v2542 = vpop.permute.xlu0 %2541
      %v2544 = vmul.f32 %v2526, %v2542
      %2546 = vrot.lane.b32.xlu0 %v2544, 32
      %v2547 = vpop.permute.xlu0 %2546
      %v2549 = vsel %vm350, %v2547, 0.0
      %2550 = vadd.xlane.f32.xlu0 %v2549
      %v2551 = vpop.xlane.xlu0 %2550
      %v2552 = vmul.f32 %v2551, 0.03125
      %v2553 = vmul.f32 %v2544, %v2544
      %2555 = vrot.lane.b32.xlu0 %v2553, 32
      %v2556 = vpop.permute.xlu0 %2555
      %v2558 = vsel %vm350, %v2556, 0.0
      %2559 = vadd.xlane.f32.xlu0 %v2558
      %v2560 = vpop.xlane.xlu0 %2559
      %v2561 = vmul.f32 %v2560, 0.03125
      %v2562 = vmul.f32 %v2552, %v2552
      %v2563 = vsub.f32 %v2561, %v2562
      %v2564 = vsub.f32 %v2544, %v2552
      %v2565 = vadd.f32 %v2563, 0.001
      %v2566 = vrsqrt.pop %v2565
      %v2567 = vmul.f32 %v2564, %v2566
      %2569 = vrot.lane.b32.xlu0 %v2567, 32
      %v2570 = vpop.permute.xlu0 %2569
      %v2571 = vsel %vm350, %v2570, 0
      %2573 = vmatprep.subr.mxu0 0.0
      %2574 = vmatpush1.msra.mxu0 %v321
      %2575 = vmatprep.subr.mxu0 0.0
      %2576 = vmatpush1.msra.mxu0 %v322
      %2577 = vmatprep.subr.mxu0 0.0
      %2578 = vmatpush1.msra.mxu0 %v323
      %2579 = vmatprep.subr.mxu0 0.0
      %2580 = vmatpush1.msra.mxu0 %v324
      %2581 = vmatprep.subr.mxu0 0.0
      %2582 = vmatpush1.msra.mxu0 0.0
      %2583 = vmatprep.subr.mxu0 0.0
      %2584 = vmatpush1.msra.mxu0 0.0
      %2585 = vmatprep.subr.mxu0 0.0
      %2586 = vmatpush1.msra.mxu0 0.0
      %2587 = vmatprep.subr.mxu0 0.0
      %2588 = vmatpush1.msra.mxu0 0.0
      %2589 = vmatprep.subr.mxu0 0.0
      %2590 = vmatpush1.msra.mxu0 0.0
      %2591 = vmatprep.subr.mxu0 0.0
      %2592 = vmatpush1.msra.mxu0 0.0
      %2593 = vmatprep.subr.mxu0 0.0
      %2594 = vmatpush1.msra.mxu0 0.0
      %2595 = vmatprep.subr.mxu0 0.0
      %2596 = vmatpush1.msra.mxu0 0.0
      %2597 = vmatprep.subr.mxu0 0.0
      %2598 = vmatpush1.msra.mxu0 0.0
      %2599 = vmatprep.subr.mxu0 0.0
      %2600 = vmatpush1.msra.mxu0 0.0
      %2601 = vmatprep.subr.mxu0 0.0
      %2602 = vmatpush1.msra.mxu0 0.0
      %2603 = vmatprep.subr.mxu0 0.0
      %2604 = vmatpush1.msra.mxu0 0.0
      %2605 = vmatprep.subr.mxu0 0.0
      %2606 = vmatpush1.msra.mxu0 0.0
      %2607 = vmatprep.subr.mxu0 0.0
      %2608 = vmatpush1.msra.mxu0 0.0
      %2609 = vmatprep.subr.mxu0 0.0
      %2610 = vmatpush1.msra.mxu0 0.0
      %2611 = vmatprep.subr.mxu0 0.0
      %2612 = vmatpush1.msra.mxu0 0.0
      %2613 = vmatprep.subr.mxu0 0.0
      %2614 = vmatpush1.msra.mxu0 0.0
      %2615 = vmatprep.subr.mxu0 0.0
      %2616 = vmatpush1.msra.mxu0 0.0
      %2617 = vmatprep.subr.mxu0 0.0
      %2618 = vmatpush1.msra.mxu0 0.0
      %2619 = vmatprep.subr.mxu0 0.0
      %2620 = vmatpush1.msra.mxu0 0.0
      %2621 = vmatprep.subr.mxu0 0.0
      %2622 = vmatpush1.msra.mxu0 0.0
      %2623 = vmatprep.subr.mxu0 0.0
      %2624 = vmatpush1.msra.mxu0 0.0
      %2625 = vmatprep.subr.mxu0 0.0
      %2626 = vmatpush1.msra.mxu0 0.0
      %2627 = vmatprep.subr.mxu0 0.0
      %2628 = vmatpush1.msra.mxu0 0.0
      %2629 = vmatprep.subr.mxu0 0.0
      %2630 = vmatpush1.msra.mxu0 0.0
      %2631 = vmatprep.subr.mxu0 0.0
      %2632 = vmatpush1.msra.mxu0 0.0
      %2633 = vmatprep.subr.mxu0 0.0
      %2634 = vmatpush1.msra.mxu0 0.0
      %2635 = vmatprep.subr.mxu0 0.0
      %2636 = vmatpush1.msra.mxu0 0.0
      %2637 = vmatprep.mubr.f32.mxu0 0.0
      %2638 = vmatmul.mubr.f32.gmra.mrb[0].mxu0 %v2571
      %v2639 = vpop.f32.mrb[0].mxu0
      %v2640 = vadd.f32 %v662, %v2639
      %v2641 = vpop.f32.mrb[0].mxu0
      %2642 = vdwg.mxu0
      %s2643 = scalar_lea.vmem %s280, 40
      %2644 = vst [vmem:[%s2643] sm:$0xff] %v2640
      %s2645 = scalar_lea.vmem %s274, 48
      %v2646 = vld [vmem:[%s2645] sm:$0xff]
      %2647 = vadd.xlane.f32.xlu0 %v2646
      %v2648 = vpop.xlane.xlu0 %2647
      %v2649 = vmul.f32 %v2648, 0.0625
      %v2650 = vmul.f32 %v2646, %v2646
      %2651 = vadd.xlane.f32.xlu0 %v2650
      %v2652 = vpop.xlane.xlu0 %2651
      %v2653 = vmul.f32 %v2652, 0.0625
      %v2654 = vmul.f32 %v2649, %v2649
      %v2655 = vsub.f32 %v2653, %v2654
      %v2656 = vsub.f32 %v2646, %v2649
      %v2657 = vadd.f32 %v2655, 0.001
      %v2658 = vrsqrt.pop %v2657
      %v2659 = vmul.f32 %v2656, %v2658
      %2660 = vmatprep.subr.mxu0 0.0
      %2661 = vmatpush1.msra.mxu0 %v291
      %2662 = vmatprep.subr.mxu0 0.0
      %2663 = vmatpush1.msra.mxu0 %v292
      %2664 = vmatprep.subr.mxu0 0.0
      %2665 = vmatpush1.msra.mxu0 %v293
      %2666 = vmatprep.subr.mxu0 0.0
      %2667 = vmatpush1.msra.mxu0 %v294
      %2668 = vmatprep.subr.mxu0 0.0
      %2669 = vmatpush1.msra.mxu0 %v295
      %2670 = vmatprep.subr.mxu0 0.0
      %2671 = vmatpush1.msra.mxu0 %v296
      %2672 = vmatprep.subr.mxu0 0.0
      %2673 = vmatpush1.msra.mxu0 %v297
      %2674 = vmatprep.subr.mxu0 0.0
      %2675 = vmatpush1.msra.mxu0 %v298
      %2676 = vmatprep.subr.mxu0 0.0
      %2677 = vmatpush1.msra.mxu0 %v299
      %2678 = vmatprep.subr.mxu0 0.0
      %2679 = vmatpush1.msra.mxu0 %v300
      %2680 = vmatprep.subr.mxu0 0.0
      %2681 = vmatpush1.msra.mxu0 %v301
      %2682 = vmatprep.subr.mxu0 0.0
      %2683 = vmatpush1.msra.mxu0 %v302
      %2684 = vmatprep.subr.mxu0 0.0
      %2685 = vmatpush1.msra.mxu0 %v303
      %2686 = vmatprep.subr.mxu0 0.0
      %2687 = vmatpush1.msra.mxu0 %v304
      %2688 = vmatprep.subr.mxu0 0.0
      %2689 = vmatpush1.msra.mxu0 %v305
      %2690 = vmatprep.subr.mxu0 0.0
      %2691 = vmatpush1.msra.mxu0 %v306
      %2692 = vmatprep.subr.mxu0 0.0
      %2693 = vmatpush1.msra.mxu0 %v307
      %2694 = vmatprep.subr.mxu0 0.0
      %2695 = vmatpush1.msra.mxu0 %v308
      %2696 = vmatprep.subr.mxu0 0.0
      %2697 = vmatpush1.msra.mxu0 %v309
      %2698 = vmatprep.subr.mxu0 0.0
      %2699 = vmatpush1.msra.mxu0 %v310
      %2700 = vmatprep.subr.mxu0 0.0
      %2701 = vmatpush1.msra.mxu0 0.0
      %2702 = vmatprep.subr.mxu0 0.0
      %2703 = vmatpush1.msra.mxu0 0.0
      %2704 = vmatprep.subr.mxu0 0.0
      %2705 = vmatpush1.msra.mxu0 0.0
      %2706 = vmatprep.subr.mxu0 0.0
      %2707 = vmatpush1.msra.mxu0 0.0
      %2708 = vmatprep.subr.mxu0 0.0
      %2709 = vmatpush1.msra.mxu0 0.0
      %2710 = vmatprep.subr.mxu0 0.0
      %2711 = vmatpush1.msra.mxu0 0.0
      %2712 = vmatprep.subr.mxu0 0.0
      %2713 = vmatpush1.msra.mxu0 0.0
      %2714 = vmatprep.subr.mxu0 0.0
      %2715 = vmatpush1.msra.mxu0 0.0
      %2716 = vmatprep.subr.mxu0 0.0
      %2717 = vmatpush1.msra.mxu0 0.0
      %2718 = vmatprep.subr.mxu0 0.0
      %2719 = vmatpush1.msra.mxu0 0.0
      %2720 = vmatprep.subr.mxu0 0.0
      %2721 = vmatpush1.msra.mxu0 0.0
      %2722 = vmatprep.subr.mxu0 0.0
      %2723 = vmatpush1.msra.mxu0 0.0
      %2724 = vmatprep.mubr.f32.mxu0 %v2448
      %2725 = vmatmul.mubr.f32.gmra.mrb[0].mxu0 %v2659
      %v2726 = vpop.f32.mrb[0].mxu0
      %v2727 = vadd.f32 %v348, %v2726
      %v2728 = vpop.f32.mrb[0].mxu0
      %2729 = vdwg.mxu0
      %v2730 = vxor.u32 %v2727, 2147483648
      %v2731 = vmul.f32 %v2730, 1.442695
      %v2732 = vpow.pop %v2731
      %v2733 = vadd.f32 %v2732, 1.0
      %v2734 = vrcp.pop %v2733
      %v2735 = vmul.f32 1.0, %v2734
      %v2736 = vtanh.pop %v2727
      %v2737 = vmul.f32 %v2735, %v2366
      %2739 = vrot.lane.b32.xlu0 %v2736, 64
      %v2740 = vpop.permute.xlu0 %2739
      %v2742 = vmul.f32 %v2735, %v2740
      %2744 = vrot.lane.b32.xlu0 %v2742, 32
      %v2745 = vpop.permute.xlu0 %2744
      %v2747 = vadd.f32 %v2737, %v2745
      %v2748 = vtanh.pop %v2747
      %2750 = vrot.lane.b32.xlu0 %v2748, 64
      %v2751 = vpop.permute.xlu0 %2750
      %v2753 = vmul.f32 %v2735, %v2751
      %v2754 = vsel %vm350, %v2547, 0
      %2756 = vmatprep.subr.mxu0 0.0
      %2757 = vmatpush1.msra.mxu0 %v316
      %2758 = vmatprep.subr.mxu0 0.0
      %2759 = vmatpush1.msra.mxu0 %v317
      %2760 = vmatprep.subr.mxu0 0.0
      %2761 = vmatpush1.msra.mxu0 %v318
      %2762 = vmatprep.subr.mxu0 0.0
      %2763 = vmatpush1.msra.mxu0 %v319
      %2764 = vmatprep.subr.mxu0 0.0
      %2765 = vmatpush1.msra.mxu0 0.0
      %2766 = vmatprep.subr.mxu0 0.0
      %2767 = vmatpush1.msra.mxu0 0.0
      %2768 = vmatprep.subr.mxu0 0.0
      %2769 = vmatpush1.msra.mxu0 0.0
      %2770 = vmatprep.subr.mxu0 0.0
      %2771 = vmatpush1.msra.mxu0 0.0
      %2772 = vmatprep.subr.mxu0 0.0
      %2773 = vmatpush1.msra.mxu0 0.0
      %2774 = vmatprep.subr.mxu0 0.0
      %2775 = vmatpush1.msra.mxu0 0.0
      %2776 = vmatprep.subr.mxu0 0.0
      %2777 = vmatpush1.msra.mxu0 0.0
      %2778 = vmatprep.subr.mxu0 0.0
      %2779 = vmatpush1.msra.mxu0 0.0
      %2780 = vmatprep.subr.mxu0 0.0
      %2781 = vmatpush1.msra.mxu0 0.0
      %2782 = vmatprep.subr.mxu0 0.0
      %2783 = vmatpush1.msra.mxu0 0.0
      %2784 = vmatprep.subr.mxu0 0.0
      %2785 = vmatpush1.msra.mxu0 0.0
      %2786 = vmatprep.subr.mxu0 0.0
      %2787 = vmatpush1.msra.mxu0 0.0
      %2788 = vmatprep.subr.mxu0 0.0
      %2789 = vmatpush1.msra.mxu0 0.0
      %2790 = vmatprep.subr.mxu0 0.0
      %2791 = vmatpush1.msra.mxu0 0.0
      %2792 = vmatprep.subr.mxu0 0.0
      %2793 = vmatpush1.msra.mxu0 0.0
      %2794 = vmatprep.subr.mxu0 0.0
      %2795 = vmatpush1.msra.mxu0 0.0
      %2796 = vmatprep.subr.mxu0 0.0
      %2797 = vmatpush1.msra.mxu0 0.0
      %2798 = vmatprep.subr.mxu0 0.0
      %2799 = vmatpush1.msra.mxu0 0.0
      %2800 = vmatprep.subr.mxu0 0.0
      %2801 = vmatpush1.msra.mxu0 0.0
      %2802 = vmatprep.subr.mxu0 0.0
      %2803 = vmatpush1.msra.mxu0 0.0
      %2804 = vmatprep.subr.mxu0 0.0
      %2805 = vmatpush1.msra.mxu0 0.0
      %2806 = vmatprep.subr.mxu0 0.0
      %2807 = vmatpush1.msra.mxu0 0.0
      %2808 = vmatprep.subr.mxu0 0.0
      %2809 = vmatpush1.msra.mxu0 0.0
      %2810 = vmatprep.subr.mxu0 0.0
      %2811 = vmatpush1.msra.mxu0 0.0
      %2812 = vmatprep.subr.mxu0 0.0
      %2813 = vmatpush1.msra.mxu0 0.0
      %2814 = vmatprep.subr.mxu0 0.0
      %2815 = vmatpush1.msra.mxu0 0.0
      %2816 = vmatprep.subr.mxu0 0.0
      %2817 = vmatpush1.msra.mxu0 0.0
      %2818 = vmatprep.subr.mxu0 0.0
      %2819 = vmatpush1.msra.mxu0 0.0
      %2820 = vmatprep.mubr.f32.mxu0 0.0
      %2821 = vmatmul.mubr.f32.gmra.mrb[0].mxu0 %v2754
      %v2822 = vpop.f32.mrb[0].mxu0
      %v2823 = vadd.f32 0.0, %v2822
      %v2824 = vpop.f32.mrb[0].mxu0
      %2825 = vdwg.mxu0
      %2827 = vrot.lane.b32.xlu0 %v2753, 32
      %v2828 = vpop.permute.xlu0 %2827
      %v2829 = vsel %vm350, %v2828, 0
      %2831 = vmatprep.subr.mxu0 0.0
      %2832 = vmatpush1.msra.mxu0 %v312
      %2833 = vmatprep.subr.mxu0 0.0
      %2834 = vmatpush1.msra.mxu0 %v313
      %2835 = vmatprep.subr.mxu0 0.0
      %2836 = vmatpush1.msra.mxu0 %v314
      %2837 = vmatprep.subr.mxu0 0.0
      %2838 = vmatpush1.msra.mxu0 %v315
      %2839 = vmatprep.subr.mxu0 0.0
      %2840 = vmatpush1.msra.mxu0 0.0
      %2841 = vmatprep.subr.mxu0 0.0
      %2842 = vmatpush1.msra.mxu0 0.0
      %2843 = vmatprep.subr.mxu0 0.0
      %2844 = vmatpush1.msra.mxu0 0.0
      %2845 = vmatprep.subr.mxu0 0.0
      %2846 = vmatpush1.msra.mxu0 0.0
      %2847 = vmatprep.subr.mxu0 0.0
      %2848 = vmatpush1.msra.mxu0 0.0
      %2849 = vmatprep.subr.mxu0 0.0
      %2850 = vmatpush1.msra.mxu0 0.0
      %2851 = vmatprep.subr.mxu0 0.0
      %2852 = vmatpush1.msra.mxu0 0.0
      %2853 = vmatprep.subr.mxu0 0.0
      %2854 = vmatpush1.msra.mxu0 0.0
      %2855 = vmatprep.subr.mxu0 0.0
      %2856 = vmatpush1.msra.mxu0 0.0
      %2857 = vmatprep.subr.mxu0 0.0
      %2858 = vmatpush1.msra.mxu0 0.0
      %2859 = vmatprep.subr.mxu0 0.0
      %2860 = vmatpush1.msra.mxu0 0.0
      %2861 = vmatprep.subr.mxu0 0.0
      %2862 = vmatpush1.msra.mxu0 0.0
      %2863 = vmatprep.subr.mxu0 0.0
      %2864 = vmatpush1.msra.mxu0 0.0
      %2865 = vmatprep.subr.mxu0 0.0
      %2866 = vmatpush1.msra.mxu0 0.0
      %2867 = vmatprep.subr.mxu0 0.0
      %2868 = vmatpush1.msra.mxu0 0.0
      %2869 = vmatprep.subr.mxu0 0.0
      %2870 = vmatpush1.msra.mxu0 0.0
      %2871 = vmatprep.subr.mxu0 0.0
      %2872 = vmatpush1.msra.mxu0 0.0
      %2873 = vmatprep.subr.mxu0 0.0
      %2874 = vmatpush1.msra.mxu0 0.0
      %2875 = vmatprep.subr.mxu0 0.0
      %2876 = vmatpush1.msra.mxu0 0.0
      %2877 = vmatprep.subr.mxu0 0.0
      %2878 = vmatpush1.msra.mxu0 0.0
      %2879 = vmatprep.subr.mxu0 0.0
      %2880 = vmatpush1.msra.mxu0 0.0
      %2881 = vmatprep.subr.mxu0 0.0
      %2882 = vmatpush1.msra.mxu0 0.0
      %2883 = vmatprep.subr.mxu0 0.0
      %2884 = vmatpush1.msra.mxu0 0.0
      %2885 = vmatprep.subr.mxu0 0.0
      %2886 = vmatpush1.msra.mxu0 0.0
      %2887 = vmatprep.subr.mxu0 0.0
      %2888 = vmatpush1.msra.mxu0 0.0
      %2889 = vmatprep.subr.mxu0 0.0
      %2890 = vmatpush1.msra.mxu0 0.0
      %2891 = vmatprep.subr.mxu0 0.0
      %2892 = vmatpush1.msra.mxu0 0.0
      %2893 = vmatprep.subr.mxu0 0.0
      %2894 = vmatpush1.msra.mxu0 0.0
      %2895 = vmatprep.mubr.f32.mxu0 0.0
      %2896 = vmatmul.mubr.f32.gmra.mrb[0].mxu0 %v2829
      %v2897 = vpop.f32.mrb[0].mxu0
      %v2898 = vadd.f32 %v2823, %v2897
      %v2899 = vpop.f32.mrb[0].mxu0
      %2900 = vdwg.mxu0
      %v2901 = vadd.f32 %v2898, %v604
      %v2902 = vxor.u32 %v2901, 2147483648
      %v2903 = vmul.f32 %v2902, 1.442695
      %v2904 = vpow.pop %v2903
      %v2905 = vadd.f32 %v2904, 1.0
      %v2906 = vrcp.pop %v2905
      %v2907 = vmul.f32 1.0, %v2906
      %v2908 = vtanh.pop %v2901
      %v2909 = vmul.f32 %v2907, %v2538
      %2911 = vrot.lane.b32.xlu0 %v2908, 64
      %v2912 = vpop.permute.xlu0 %2911
      %v2914 = vmul.f32 %v2907, %v2912
      %2916 = vrot.lane.b32.xlu0 %v2914, 32
      %v2917 = vpop.permute.xlu0 %2916
      %v2919 = vadd.f32 %v2909, %v2917
      %v2920 = vtanh.pop %v2919
      %2922 = vrot.lane.b32.xlu0 %v2920, 64
      %v2923 = vpop.permute.xlu0 %2922
      %v2925 = vmul.f32 %v2907, %v2923
      %2927 = vrot.lane.b32.xlu0 %v2925, 32
      %v2928 = vpop.permute.xlu0 %2927
      %v2930 = vsel %vm350, %v2928, 0.0
      %2931 = vadd.xlane.f32.xlu0 %v2930
      %v2932 = vpop.xlane.xlu0 %2931
      %v2933 = vmul.f32 %v2932, 0.03125
      %v2934 = vmul.f32 %v2925, %v2925
      %2936 = vrot.lane.b32.xlu0 %v2934, 32
      %v2937 = vpop.permute.xlu0 %2936
      %v2939 = vsel %vm350, %v2937, 0.0
      %2940 = vadd.xlane.f32.xlu0 %v2939
      %v2941 = vpop.xlane.xlu0 %2940
      %v2942 = vmul.f32 %v2941, 0.03125
      %v2943 = vmul.f32 %v2933, %v2933
      %v2944 = vsub.f32 %v2942, %v2943
      %v2945 = vsub.f32 %v2925, %v2933
      %v2946 = vadd.f32 %v2944, 0.001
      %v2947 = vrsqrt.pop %v2946
      %v2948 = vmul.f32 %v2945, %v2947
      %2950 = vrot.lane.b32.xlu0 %v2948, 32
      %v2951 = vpop.permute.xlu0 %2950
      %v2952 = vsel %vm350, %v2951, 0
      %2954 = vmatprep.subr.mxu0 0.0
      %2955 = vmatpush1.msra.mxu0 %v321
      %2956 = vmatprep.subr.mxu0 0.0
      %2957 = vmatpush1.msra.mxu0 %v322
      %2958 = vmatprep.subr.mxu0 0.0
      %2959 = vmatpush1.msra.mxu0 %v323
      %2960 = vmatprep.subr.mxu0 0.0
      %2961 = vmatpush1.msra.mxu0 %v324
      %2962 = vmatprep.subr.mxu0 0.0
      %2963 = vmatpush1.msra.mxu0 0.0
      %2964 = vmatprep.subr.mxu0 0.0
      %2965 = vmatpush1.msra.mxu0 0.0
      %2966 = vmatprep.subr.mxu0 0.0
      %2967 = vmatpush1.msra.mxu0 0.0
      %2968 = vmatprep.subr.mxu0 0.0
      %2969 = vmatpush1.msra.mxu0 0.0
      %2970 = vmatprep.subr.mxu0 0.0
      %2971 = vmatpush1.msra.mxu0 0.0
      %2972 = vmatprep.subr.mxu0 0.0
      %2973 = vmatpush1.msra.mxu0 0.0
      %2974 = vmatprep.subr.mxu0 0.0
      %2975 = vmatpush1.msra.mxu0 0.0
      %2976 = vmatprep.subr.mxu0 0.0
      %2977 = vmatpush1.msra.mxu0 0.0
      %2978 = vmatprep.subr.mxu0 0.0
      %2979 = vmatpush1.msra.mxu0 0.0
      %2980 = vmatprep.subr.mxu0 0.0
      %2981 = vmatpush1.msra.mxu0 0.0
      %2982 = vmatprep.subr.mxu0 0.0
      %2983 = vmatpush1.msra.mxu0 0.0
      %2984 = vmatprep.subr.mxu0 0.0
      %2985 = vmatpush1.msra.mxu0 0.0
      %2986 = vmatprep.subr.mxu0 0.0
      %2987 = vmatpush1.msra.mxu0 0.0
      %2988 = vmatprep.subr.mxu0 0.0
      %2989 = vmatpush1.msra.mxu0 0.0
      %2990 = vmatprep.subr.mxu0 0.0
      %2991 = vmatpush1.msra.mxu0 0.0
      %2992 = vmatprep.subr.mxu0 0.0
      %2993 = vmatpush1.msra.mxu0 0.0
      %2994 = vmatprep.subr.mxu0 0.0
      %2995 = vmatpush1.msra.mxu0 0.0
      %2996 = vmatprep.subr.mxu0 0.0
      %2997 = vmatpush1.msra.mxu0 0.0
      %2998 = vmatprep.subr.mxu0 0.0
      %2999 = vmatpush1.msra.mxu0 0.0
      %3000 = vmatprep.subr.mxu0 0.0
      %3001 = vmatpush1.msra.mxu0 0.0
      %3002 = vmatprep.subr.mxu0 0.0
      %3003 = vmatpush1.msra.mxu0 0.0
      %3004 = vmatprep.subr.mxu0 0.0
      %3005 = vmatpush1.msra.mxu0 0.0
      %3006 = vmatprep.subr.mxu0 0.0
      %3007 = vmatpush1.msra.mxu0 0.0
      %3008 = vmatprep.subr.mxu0 0.0
      %3009 = vmatpush1.msra.mxu0 0.0
      %3010 = vmatprep.subr.mxu0 0.0
      %3011 = vmatpush1.msra.mxu0 0.0
      %3012 = vmatprep.subr.mxu0 0.0
      %3013 = vmatpush1.msra.mxu0 0.0
      %3014 = vmatprep.subr.mxu0 0.0
      %3015 = vmatpush1.msra.mxu0 0.0
      %3016 = vmatprep.subr.mxu0 0.0
      %3017 = vmatpush1.msra.mxu0 0.0
      %3018 = vmatprep.mubr.f32.mxu0 0.0
      %3019 = vmatmul.mubr.f32.gmra.mrb[0].mxu0 %v2952
      %v3020 = vpop.f32.mrb[0].mxu0
      %v3021 = vadd.f32 %v662, %v3020
      %v3022 = vpop.f32.mrb[0].mxu0
      %3023 = vdwg.mxu0
      %s3024 = scalar_lea.vmem %s280, 48
      %3025 = vst [vmem:[%s3024] sm:$0xff] %v3021
      %s3026 = scalar_lea.vmem %s274, 56
      %v3027 = vld [vmem:[%s3026] sm:$0xff]
      %3028 = vadd.xlane.f32.xlu0 %v3027
      %v3029 = vpop.xlane.xlu0 %3028
      %v3030 = vmul.f32 %v3029, 0.0625
      %v3031 = vmul.f32 %v3027, %v3027
      %3032 = vadd.xlane.f32.xlu0 %v3031
      %v3033 = vpop.xlane.xlu0 %3032
      %v3034 = vmul.f32 %v3033, 0.0625
      %v3035 = vmul.f32 %v3030, %v3030
      %v3036 = vsub.f32 %v3034, %v3035
      %v3037 = vsub.f32 %v3027, %v3030
      %v3038 = vadd.f32 %v3036, 0.001
      %v3039 = vrsqrt.pop %v3038
      %v3040 = vmul.f32 %v3037, %v3039
      %3041 = vmatprep.subr.mxu0 0.0
      %3042 = vmatpush1.msra.mxu0 %v291
      %3043 = vmatprep.subr.mxu0 0.0
      %3044 = vmatpush1.msra.mxu0 %v292
      %3045 = vmatprep.subr.mxu0 0.0
      %3046 = vmatpush1.msra.mxu0 %v293
      %3047 = vmatprep.subr.mxu0 0.0
      %3048 = vmatpush1.msra.mxu0 %v294
      %3049 = vmatprep.subr.mxu0 0.0
      %3050 = vmatpush1.msra.mxu0 %v295
      %3051 = vmatprep.subr.mxu0 0.0
      %3052 = vmatpush1.msra.mxu0 %v296
      %3053 = vmatprep.subr.mxu0 0.0
      %3054 = vmatpush1.msra.mxu0 %v297
      %3055 = vmatprep.subr.mxu0 0.0
      %3056 = vmatpush1.msra.mxu0 %v298
      %3057 = vmatprep.subr.mxu0 0.0
      %3058 = vmatpush1.msra.mxu0 %v299
      %3059 = vmatprep.subr.mxu0 0.0
      %3060 = vmatpush1.msra.mxu0 %v300
      %3061 = vmatprep.subr.mxu0 0.0
      %3062 = vmatpush1.msra.mxu0 %v301
      %3063 = vmatprep.subr.mxu0 0.0
      %3064 = vmatpush1.msra.mxu0 %v302
      %3065 = vmatprep.subr.mxu0 0.0
      %3066 = vmatpush1.msra.mxu0 %v303
      %3067 = vmatprep.subr.mxu0 0.0
      %3068 = vmatpush1.msra.mxu0 %v304
      %3069 = vmatprep.subr.mxu0 0.0
      %3070 = vmatpush1.msra.mxu0 %v305
      %3071 = vmatprep.subr.mxu0 0.0
      %3072 = vmatpush1.msra.mxu0 %v306
      %3073 = vmatprep.subr.mxu0 0.0
      %3074 = vmatpush1.msra.mxu0 %v307
      %3075 = vmatprep.subr.mxu0 0.0
      %3076 = vmatpush1.msra.mxu0 %v308
      %3077 = vmatprep.subr.mxu0 0.0
      %3078 = vmatpush1.msra.mxu0 %v309
      %3079 = vmatprep.subr.mxu0 0.0
      %3080 = vmatpush1.msra.mxu0 %v310
      %3081 = vmatprep.subr.mxu0 0.0
      %3082 = vmatpush1.msra.mxu0 0.0
      %3083 = vmatprep.subr.mxu0 0.0
      %3084 = vmatpush1.msra.mxu0 0.0
      %3085 = vmatprep.subr.mxu0 0.0
      %3086 = vmatpush1.msra.mxu0 0.0
      %3087 = vmatprep.subr.mxu0 0.0
      %3088 = vmatpush1.msra.mxu0 0.0
      %3089 = vmatprep.subr.mxu0 0.0
      %3090 = vmatpush1.msra.mxu0 0.0
      %3091 = vmatprep.subr.mxu0 0.0
      %3092 = vmatpush1.msra.mxu0 0.0
      %3093 = vmatprep.subr.mxu0 0.0
      %3094 = vmatpush1.msra.mxu0 0.0
      %3095 = vmatprep.subr.mxu0 0.0
      %3096 = vmatpush1.msra.mxu0 0.0
      %3097 = vmatprep.subr.mxu0 0.0
      %3098 = vmatpush1.msra.mxu0 0.0
      %3099 = vmatprep.subr.mxu0 0.0
      %3100 = vmatpush1.msra.mxu0 0.0
      %3101 = vmatprep.subr.mxu0 0.0
      %3102 = vmatpush1.msra.mxu0 0.0
      %3103 = vmatprep.subr.mxu0 0.0
      %3104 = vmatpush1.msra.mxu0 0.0
      %3105 = vmatprep.mubr.f32.mxu0 %v2829
      %3106 = vmatmul.mubr.f32.gmra.mrb[0].mxu0 %v3040
      %v3107 = vpop.f32.mrb[0].mxu0
      %v3108 = vadd.f32 %v348, %v3107
      %v3109 = vpop.f32.mrb[0].mxu0
      %3110 = vdwg.mxu0
      %v3111 = vxor.u32 %v3108, 2147483648
      %v3112 = vmul.f32 %v3111, 1.442695
      %v3113 = vpow.pop %v3112
      %v3114 = vadd.f32 %v3113, 1.0
      %v3115 = vrcp.pop %v3114
      %v3116 = vmul.f32 1.0, %v3115
      %v3117 = vtanh.pop %v3108
      %v3118 = vmul.f32 %v3116, %v2747
      %3120 = vrot.lane.b32.xlu0 %v3117, 64
      %v3121 = vpop.permute.xlu0 %3120
      %v3123 = vmul.f32 %v3116, %v3121
      %3125 = vrot.lane.b32.xlu0 %v3123, 32
      %v3126 = vpop.permute.xlu0 %3125
      %v3128 = vadd.f32 %v3118, %v3126
      %v3129 = vtanh.pop %v3128
      %3131 = vrot.lane.b32.xlu0 %v3129, 64
      %v3132 = vpop.permute.xlu0 %3131
      %v3134 = vmul.f32 %v3116, %v3132
      %v3135 = vsel %vm350, %v2928, 0
      %3137 = vmatprep.subr.mxu0 0.0
      %3138 = vmatpush1.msra.mxu0 %v316
      %3139 = vmatprep.subr.mxu0 0.0
      %3140 = vmatpush1.msra.mxu0 %v317
      %3141 = vmatprep.subr.mxu0 0.0
      %3142 = vmatpush1.msra.mxu0 %v318
      %3143 = vmatprep.subr.mxu0 0.0
      %3144 = vmatpush1.msra.mxu0 %v319
      %3145 = vmatprep.subr.mxu0 0.0
      %3146 = vmatpush1.msra.mxu0 0.0
      %3147 = vmatprep.subr.mxu0 0.0
      %3148 = vmatpush1.msra.mxu0 0.0
      %3149 = vmatprep.subr.mxu0 0.0
      %3150 = vmatpush1.msra.mxu0 0.0
      %3151 = vmatprep.subr.mxu0 0.0
      %3152 = vmatpush1.msra.mxu0 0.0
      %3153 = vmatprep.subr.mxu0 0.0
      %3154 = vmatpush1.msra.mxu0 0.0
      %3155 = vmatprep.subr.mxu0 0.0
      %3156 = vmatpush1.msra.mxu0 0.0
      %3157 = vmatprep.subr.mxu0 0.0
      %3158 = vmatpush1.msra.mxu0 0.0
      %3159 = vmatprep.subr.mxu0 0.0
      %3160 = vmatpush1.msra.mxu0 0.0
      %3161 = vmatprep.subr.mxu0 0.0
      %3162 = vmatpush1.msra.mxu0 0.0
      %3163 = vmatprep.subr.mxu0 0.0
      %3164 = vmatpush1.msra.mxu0 0.0
      %3165 = vmatprep.subr.mxu0 0.0
      %3166 = vmatpush1.msra.mxu0 0.0
      %3167 = vmatprep.subr.mxu0 0.0
      %3168 = vmatpush1.msra.mxu0 0.0
      %3169 = vmatprep.subr.mxu0 0.0
      %3170 = vmatpush1.msra.mxu0 0.0
      %3171 = vmatprep.subr.mxu0 0.0
      %3172 = vmatpush1.msra.mxu0 0.0
      %3173 = vmatprep.subr.mxu0 0.0
      %3174 = vmatpush1.msra.mxu0 0.0
      %3175 = vmatprep.subr.mxu0 0.0
      %3176 = vmatpush1.msra.mxu0 0.0
      %3177 = vmatprep.subr.mxu0 0.0
      %3178 = vmatpush1.msra.mxu0 0.0
      %3179 = vmatprep.subr.mxu0 0.0
      %3180 = vmatpush1.msra.mxu0 0.0
      %3181 = vmatprep.subr.mxu0 0.0
      %3182 = vmatpush1.msra.mxu0 0.0
      %3183 = vmatprep.subr.mxu0 0.0
      %3184 = vmatpush1.msra.mxu0 0.0
      %3185 = vmatprep.subr.mxu0 0.0
      %3186 = vmatpush1.msra.mxu0 0.0
      %3187 = vmatprep.subr.mxu0 0.0
      %3188 = vmatpush1.msra.mxu0 0.0
      %3189 = vmatprep.subr.mxu0 0.0
      %3190 = vmatpush1.msra.mxu0 0.0
      %3191 = vmatprep.subr.mxu0 0.0
      %3192 = vmatpush1.msra.mxu0 0.0
      %3193 = vmatprep.subr.mxu0 0.0
      %3194 = vmatpush1.msra.mxu0 0.0
      %3195 = vmatprep.subr.mxu0 0.0
      %3196 = vmatpush1.msra.mxu0 0.0
      %3197 = vmatprep.subr.mxu0 0.0
      %3198 = vmatpush1.msra.mxu0 0.0
      %3199 = vmatprep.subr.mxu0 0.0
      %3200 = vmatpush1.msra.mxu0 0.0
      %3201 = vmatprep.mubr.f32.mxu0 0.0
      %3202 = vmatmul.mubr.f32.gmra.mrb[0].mxu0 %v3135
      %v3203 = vpop.f32.mrb[0].mxu0
      %v3204 = vadd.f32 0.0, %v3203
      %v3205 = vpop.f32.mrb[0].mxu0
      %3206 = vdwg.mxu0
      %3208 = vrot.lane.b32.xlu0 %v3134, 32
      %v3209 = vpop.permute.xlu0 %3208
      %v3210 = vsel %vm350, %v3209, 0
      %3212 = vmatprep.subr.mxu0 0.0
      %3213 = vmatpush1.msra.mxu0 %v312
      %3214 = vmatprep.subr.mxu0 0.0
      %3215 = vmatpush1.msra.mxu0 %v313
      %3216 = vmatprep.subr.mxu0 0.0
      %3217 = vmatpush1.msra.mxu0 %v314
      %3218 = vmatprep.subr.mxu0 0.0
      %3219 = vmatpush1.msra.mxu0 %v315
      %3220 = vmatprep.subr.mxu0 0.0
      %3221 = vmatpush1.msra.mxu0 0.0
      %3222 = vmatprep.subr.mxu0 0.0
      %3223 = vmatpush1.msra.mxu0 0.0
      %3224 = vmatprep.subr.mxu0 0.0
      %3225 = vmatpush1.msra.mxu0 0.0
      %3226 = vmatprep.subr.mxu0 0.0
      %3227 = vmatpush1.msra.mxu0 0.0
      %3228 = vmatprep.subr.mxu0 0.0
      %3229 = vmatpush1.msra.mxu0 0.0
      %3230 = vmatprep.subr.mxu0 0.0
      %3231 = vmatpush1.msra.mxu0 0.0
      %3232 = vmatprep.subr.mxu0 0.0
      %3233 = vmatpush1.msra.mxu0 0.0
      %3234 = vmatprep.subr.mxu0 0.0
      %3235 = vmatpush1.msra.mxu0 0.0
      %3236 = vmatprep.subr.mxu0 0.0
      %3237 = vmatpush1.msra.mxu0 0.0
      %3238 = vmatprep.subr.mxu0 0.0
      %3239 = vmatpush1.msra.mxu0 0.0
      %3240 = vmatprep.subr.mxu0 0.0
      %3241 = vmatpush1.msra.mxu0 0.0
      %3242 = vmatprep.subr.mxu0 0.0
      %3243 = vmatpush1.msra.mxu0 0.0
      %3244 = vmatprep.subr.mxu0 0.0
      %3245 = vmatpush1.msra.mxu0 0.0
      %3246 = vmatprep.subr.mxu0 0.0
      %3247 = vmatpush1.msra.mxu0 0.0
      %3248 = vmatprep.subr.mxu0 0.0
      %3249 = vmatpush1.msra.mxu0 0.0
      %3250 = vmatprep.subr.mxu0 0.0
      %3251 = vmatpush1.msra.mxu0 0.0
      %3252 = vmatprep.subr.mxu0 0.0
      %3253 = vmatpush1.msra.mxu0 0.0
      %3254 = vmatprep.subr.mxu0 0.0
      %3255 = vmatpush1.msra.mxu0 0.0
      %3256 = vmatprep.subr.mxu0 0.0
      %3257 = vmatpush1.msra.mxu0 0.0
      %3258 = vmatprep.subr.mxu0 0.0
      %3259 = vmatpush1.msra.mxu0 0.0
      %3260 = vmatprep.subr.mxu0 0.0
      %3261 = vmatpush1.msra.mxu0 0.0
      %3262 = vmatprep.subr.mxu0 0.0
      %3263 = vmatpush1.msra.mxu0 0.0
      %3264 = vmatprep.subr.mxu0 0.0
      %3265 = vmatpush1.msra.mxu0 0.0
      %3266 = vmatprep.subr.mxu0 0.0
      %3267 = vmatpush1.msra.mxu0 0.0
      %3268 = vmatprep.subr.mxu0 0.0
      %3269 = vmatpush1.msra.mxu0 0.0
      %3270 = vmatprep.subr.mxu0 0.0
      %3271 = vmatpush1.msra.mxu0 0.0
      %3272 = vmatprep.subr.mxu0 0.0
      %3273 = vmatpush1.msra.mxu0 0.0
      %3274 = vmatprep.subr.mxu0 0.0
      %3275 = vmatpush1.msra.mxu0 0.0
      %3276 = vmatprep.mubr.f32.mxu0 0.0
      %3277 = vmatmul.mubr.f32.gmra.mrb[0].mxu0 %v3210
      %v3278 = vpop.f32.mrb[0].mxu0
      %v3279 = vadd.f32 %v3204, %v3278
      %v3280 = vpop.f32.mrb[0].mxu0
      %3281 = vdwg.mxu0
      %v3282 = vadd.f32 %v3279, %v604
      %v3283 = vxor.u32 %v3282, 2147483648
      %v3284 = vmul.f32 %v3283, 1.442695
      %v3285 = vpow.pop %v3284
      %v3286 = vadd.f32 %v3285, 1.0
      %v3287 = vrcp.pop %v3286
      %v3288 = vmul.f32 1.0, %v3287
      %v3289 = vtanh.pop %v3282
      %v3290 = vmul.f32 %v3288, %v2919
      %3292 = vrot.lane.b32.xlu0 %v3289, 64
      %v3293 = vpop.permute.xlu0 %3292
      %v3295 = vmul.f32 %v3288, %v3293
      %3297 = vrot.lane.b32.xlu0 %v3295, 32
      %v3298 = vpop.permute.xlu0 %3297
      %v3300 = vadd.f32 %v3290, %v3298
      %v3301 = vtanh.pop %v3300
      %3303 = vrot.lane.b32.xlu0 %v3301, 64
      %v3304 = vpop.permute.xlu0 %3303
      %v3306 = vmul.f32 %v3288, %v3304
      %3308 = vrot.lane.b32.xlu0 %v3306, 32
      %v3309 = vpop.permute.xlu0 %3308
      %v3311 = vsel %vm350, %v3309, 0.0
      %3312 = vadd.xlane.f32.xlu0 %v3311
      %v3313 = vpop.xlane.xlu0 %3312
      %v3314 = vmul.f32 %v3313, 0.03125
      %v3315 = vmul.f32 %v3306, %v3306
      %3317 = vrot.lane.b32.xlu0 %v3315, 32
      %v3318 = vpop.permute.xlu0 %3317
      %v3320 = vsel %vm350, %v3318, 0.0
      %3321 = vadd.xlane.f32.xlu0 %v3320
      %v3322 = vpop.xlane.xlu0 %3321
      %v3323 = vmul.f32 %v3322, 0.03125
      %v3324 = vmul.f32 %v3314, %v3314
      %v3325 = vsub.f32 %v3323, %v3324
      %v3326 = vsub.f32 %v3306, %v3314
      %v3327 = vadd.f32 %v3325, 0.001
      %v3328 = vrsqrt.pop %v3327
      %v3329 = vmul.f32 %v3326, %v3328
      %3331 = vrot.lane.b32.xlu0 %v3329, 32
      %v3332 = vpop.permute.xlu0 %3331
      %v3333 = vsel %vm350, %v3332, 0
      %3335 = vmatprep.subr.mxu0 0.0
      %3336 = vmatpush1.msra.mxu0 %v321
      %3337 = vmatprep.subr.mxu0 0.0
      %3338 = vmatpush1.msra.mxu0 %v322
      %3339 = vmatprep.subr.mxu0 0.0
      %3340 = vmatpush1.msra.mxu0 %v323
      %3341 = vmatprep.subr.mxu0 0.0
      %3342 = vmatpush1.msra.mxu0 %v324
      %3343 = vmatprep.subr.mxu0 0.0
      %3344 = vmatpush1.msra.mxu0 0.0
      %3345 = vmatprep.subr.mxu0 0.0
      %3346 = vmatpush1.msra.mxu0 0.0
      %3347 = vmatprep.subr.mxu0 0.0
      %3348 = vmatpush1.msra.mxu0 0.0
      %3349 = vmatprep.subr.mxu0 0.0
      %3350 = vmatpush1.msra.mxu0 0.0
      %3351 = vmatprep.subr.mxu0 0.0
      %3352 = vmatpush1.msra.mxu0 0.0
      %3353 = vmatprep.subr.mxu0 0.0
      %3354 = vmatpush1.msra.mxu0 0.0
      %3355 = vmatprep.subr.mxu0 0.0
      %3356 = vmatpush1.msra.mxu0 0.0
      %3357 = vmatprep.subr.mxu0 0.0
      %3358 = vmatpush1.msra.mxu0 0.0
      %3359 = vmatprep.subr.mxu0 0.0
      %3360 = vmatpush1.msra.mxu0 0.0
      %3361 = vmatprep.subr.mxu0 0.0
      %3362 = vmatpush1.msra.mxu0 0.0
      %3363 = vmatprep.subr.mxu0 0.0
      %3364 = vmatpush1.msra.mxu0 0.0
      %3365 = vmatprep.subr.mxu0 0.0
      %3366 = vmatpush1.msra.mxu0 0.0
      %3367 = vmatprep.subr.mxu0 0.0
      %3368 = vmatpush1.msra.mxu0 0.0
      %3369 = vmatprep.subr.mxu0 0.0
      %3370 = vmatpush1.msra.mxu0 0.0
      %3371 = vmatprep.subr.mxu0 0.0
      %3372 = vmatpush1.msra.mxu0 0.0
      %3373 = vmatprep.subr.mxu0 0.0
      %3374 = vmatpush1.msra.mxu0 0.0
      %3375 = vmatprep.subr.mxu0 0.0
      %3376 = vmatpush1.msra.mxu0 0.0
      %3377 = vmatprep.subr.mxu0 0.0
      %3378 = vmatpush1.msra.mxu0 0.0
      %3379 = vmatprep.subr.mxu0 0.0
      %3380 = vmatpush1.msra.mxu0 0.0
      %3381 = vmatprep.subr.mxu0 0.0
      %3382 = vmatpush1.msra.mxu0 0.0
      %3383 = vmatprep.subr.mxu0 0.0
      %3384 = vmatpush1.msra.mxu0 0.0
      %3385 = vmatprep.subr.mxu0 0.0
      %3386 = vmatpush1.msra.mxu0 0.0
      %3387 = vmatprep.subr.mxu0 0.0
      %3388 = vmatpush1.msra.mxu0 0.0
      %3389 = vmatprep.subr.mxu0 0.0
      %3390 = vmatpush1.msra.mxu0 0.0
      %3391 = vmatprep.subr.mxu0 0.0
      %3392 = vmatpush1.msra.mxu0 0.0
      %3393 = vmatprep.subr.mxu0 0.0
      %3394 = vmatpush1.msra.mxu0 0.0
      %3395 = vmatprep.subr.mxu0 0.0
      %3396 = vmatpush1.msra.mxu0 0.0
      %3397 = vmatprep.subr.mxu0 0.0
      %3398 = vmatpush1.msra.mxu0 0.0
      %3399 = vmatprep.mubr.f32.mxu0 0.0
      %3400 = vmatmul.mubr.f32.gmra.mrb[0].mxu0 %v3333
      %v3401 = vpop.f32.mrb[0].mxu0
      %v3402 = vadd.f32 %v662, %v3401
      %v3403 = vpop.f32.mrb[0].mxu0
      %3404 = vdwg.mxu0
      %s3405 = scalar_lea.vmem %s280, 56
      %3406 = vst [vmem:[%s3405] sm:$0xff] %v3402
      %3408 = vst.msk [vmem:[#allocation2] sm:$0xff] %vm350, %v3209
      %3410 = vrot.lane.b32.xlu0 %v3128, 96
      %v3411 = vpop.permute.xlu0 %3410
      %3413 = vst.msk [vmem:[#allocation3] sm:$0xff] %vm350, %v3411
      %3414 = vst.msk [vmem:[#allocation4] sm:$0xff] %vm350, %v3309
      %3416 = vrot.lane.b32.xlu0 %v3300, 96
      %v3417 = vpop.permute.xlu0 %3416
      %3419 = vst.msk [vmem:[#allocation5] sm:$0xff] %vm350, %v3417
      %s3420 = smul.u32 8, %s18
      %p3421 = scmp.lt.s32.totalorder %s3420, 15
      %s3422 = scalar_select %p3421, %s3420, 15
      %s3423 = smul.addr %s3422, 8
      %s3424 = scalar_lea.vmem %s7, %s3423
      // Predicated region
      $region53: #{one_out_lstm_forward.1} parent=47 // pred_check
        %p3425 = pneg %p188
      $region54: #{one_out_lstm_forward.1} parent=47 // pred_check_branch
        %3427 = sbr.rel (%p3425) target = $region56
      $region55: #{one_out_lstm_forward.1} parent=47 // pred_region
        %s3428 = smul.u32 8, %s18
      $region56: #{one_out_lstm_forward.1} parent=47 // pred_fallthru
        _
    $region48: #{one_out_lstm_forward.1} parent=5 // pred_fallthru
      _
    %p3429 = scmp.le.s32.totalorder 2, %s13
    // Predicated region
    $region57: #{one_out_lstm_forward.1} parent=5 // pred_check
      %p3430 = pneg %p3429
    $region58: #{one_out_lstm_forward.1} parent=5 // pred_check_branch
      %3432 = sbr.rel (%p3430) target = $region60
    $region59: #{one_out_lstm_forward.1} parent=5 // pred_region
      %s3433 = ssub.s32 %s13, 2
      // Predicated region
      $region61: #{one_out_lstm_forward.1} parent=59 // pred_check
        %p3434 = pneg %p194
      $region62: #{one_out_lstm_forward.1} parent=59 // pred_check_branch
        %3436 = sbr.rel (%p3434) target = $region64
      $region63: #{one_out_lstm_forward.1} parent=59 // pred_region
        %s3437 = smul.u32 8, %s19
        %p3438 = scmp.lt.s32.totalorder %s3437, 15
        %s3439 = scalar_select %p3438, %s3437, 15
        %s3440 = smul.addr %s3439, 8
        %s3441 = scalar_lea.vmem %s7, %s3440
      $region64: #{one_out_lstm_forward.1} parent=59 // pred_fallthru
        _
    $region60: #{one_out_lstm_forward.1} parent=5 // pred_fallthru
      _
  $region6: #{one_out_lstm_forward.1} parent=0 // loop_footer
    %s17 = sadd.s32 1, %s13
  $region7: #{one_out_lstm_forward.1} parent=0 // loop_footer_branch
    %12 = sbr.rel target = $region3
  $region8: #{one_out_lstm_forward.1} parent=0 // loop_exit
    _

</llo_original>
